<compile_context>
chip_gen: v6e
topology: v6e:2x2x1
jax: 0.10.0
libtpu: 0.0.40
codegen_flags: <defaults>
</compile_context>

<pallas_src>
import functools
import math

import jax
import jax.numpy as jnp
from jax.experimental import pallas as pl
from jax.experimental.pallas import tpu as pltpu


_LAYER_KEYS = ("ln1_g", "ln1_b", "w_qkv", "b_qkv", "w_o", "b_o",
               "ln2_g", "ln2_b", "w_fc", "b_fc", "w_proj", "b_proj")


# -----------------------------------------------------------------------------
# BlockSpec helpers
# -----------------------------------------------------------------------------
def _const_spec(shape):
    """Full-array block; same block at every grid step (loaded once, VMEM-resident)."""
    nd = len(shape)
    return pl.BlockSpec(tuple(shape), lambda l, _nd=nd: (0,) * _nd)


def _layer_spec(shape):
    """Stacked per-layer array (L, ...): select layer `l`, squeeze the layer axis."""
    tail = tuple(shape[1:])
    nt = len(tail)
    return pl.BlockSpec((None,) + tail, lambda l, _nt=nt: (l,) + (0,) * _nt)


# -----------------------------------------------------------------------------
# In-kernel building blocks (traced inline inside the two fused kernels)
# -----------------------------------------------------------------------------
def _ln(x, g, b, eps):
    mu = jnp.mean(x, axis=-1, keepdims=True)
    var = jnp.mean(jnp.square(x - mu), axis=-1, keepdims=True)
    return (x - mu) * jax.lax.rsqrt(var + eps) * g + b


def _gelu(x):
    # tanh-approx GELU ("gelu_new": exact for GPT-2; approximation for the synthetic ViT)
    return 0.5 * x * (1.0 + jnp.tanh(0.7978845608028654 * (x + 0.044715 * x * x * x)))


def _bf16(x):
    return x.astype(jnp.bfloat16)


def _fused_block(x, layer_refs, bias_fn, *, B, T, n_head, ln_eps):
    """Pre-LN transformer block over batch-folded rows.

    x:        (B*T, D) f32
    bias_fn:  b -> (T, T) additive attention bias (or None)
    Returns the new (B*T, D) f32 activation (caller stores it once).
    """
    (ln1g, ln1b, wqkv, bqkv, wo, bo, ln2g, ln2b, wfc, bfc, wpj, bpj) = layer_refs
    d = x.shape[-1]
    dh = d // n_head
    scale = 1.0 / math.sqrt(dh)

    wo_v = wo[...]                                             # (d, d) bf16, loaded once

    # --- attention ------------------------------------------------------------
    h = _ln(x, ln1g[...], ln1b[...], ln_eps)
    qkv = jnp.dot(_bf16(h), wqkv[...],
                  preferred_element_type=jnp.float32) + bqkv[...]      # (B*T, 3d) f32

    ctx_rows = []
    for b in range(B):
        qkv_b = qkv[b * T:(b + 1) * T, :]                      # (T, 3d)
        bias_b = bias_fn(b)
        acc = None
        for hh in range(n_head):
            q = qkv_b[:, hh * dh:(hh + 1) * dh]
            k = qkv_b[:, d + hh * dh:d + (hh + 1) * dh]
            v = qkv_b[:, 2 * d + hh * dh:2 * d + (hh + 1) * dh]
            s = jax.lax.dot_general(_bf16(q), _bf16(k), (((1,), (1,)), ((), ())),
                                    preferred_element_type=jnp.float32) * scale
            if bias_b is not None:
                s = s + bias_b
            m = jnp.max(s, axis=-1, keepdims=True)
            p = jnp.exp(s - m)
            p = p * pl.reciprocal(jnp.sum(p, axis=-1, keepdims=True), approx=True)
            ctx = jnp.dot(_bf16(p), _bf16(v),
                          preferred_element_type=jnp.float32)          # (T, dh)
            # Accumulate directly into the output projection (no lane-axis head concat).
            contrib = jnp.dot(_bf16(ctx), wo_v[hh * dh:(hh + 1) * dh, :],
                              preferred_element_type=jnp.float32)      # (T, d)
            acc = contrib if acc is None else acc + contrib
        ctx_rows.append(acc)

    attn = jnp.concatenate(ctx_rows, axis=0) + bo[...]          # sublane concat, (B*T, d)
    x = x + attn

    # --- MLP (one matmul over all B*T rows) ------------------------------------
    h = _ln(x, ln2g[...], ln2b[...], ln_eps)
    h = _gelu(jnp.dot(_bf16(h), wfc[...],
                      preferred_element_type=jnp.float32) + bfc[...])
    h = jnp.dot(_bf16(h), wpj[...],
                preferred_element_type=jnp.float32) + bpj[...]
    return x + h


# -----------------------------------------------------------------------------
# Fused ViT encoder + image projector kernel (grid over layers, activation in VMEM)
# -----------------------------------------------------------------------------
def _vit_kernel(patches_ref, pw_ref, pb_ref, cls_ref, pos_ref,
                ln1g, ln1b, wqkv, bqkv, wo, bo, ln2g, ln2b, wfc, bfc, wpj, bpj,
                lng_ref, lnb_ref, projw_ref, projb_ref,
                out_ref, x_scr, bias_scr,
                *, B, T, n_real, n_patches, n_head, n_layers):
    l = pl.program_id(0)
    layer_refs = (ln1g, ln1b, wqkv, bqkv, wo, bo, ln2g, ln2b, wfc, bfc, wpj, bpj)

    @pl.when(l == 0)
    def _init():
        # Patch embedding for all batches at once: (B*n_patches, C*p*p) @ (C*p*p, hv)
        emb = jnp.dot(patches_ref[...], pw_ref[...],
                      preferred_element_type=jnp.float32) + pb_ref[...]
        cls = cls_ref[...]                               # (1, hv)
        pos = pos_ref[...]                               # (T, hv), zero rows for pads
        pad = T - 1 - n_patches
        hv = pos.shape[-1]
        for b in range(B):
            pieces = [cls, emb[b * n_patches:(b + 1) * n_patches, :]]
            if pad > 0:
                pieces.append(jnp.zeros((pad, hv), jnp.float32))
            x_scr[b * T:(b + 1) * T, :] = jnp.concatenate(pieces, axis=0) + pos
        # Key-padding bias (pad columns masked), built once and reused every layer.
        ki = jax.lax.broadcasted_iota(jnp.int32, (T, T), 1)
        bias_scr[...] = jnp.where(ki < n_real, 0.0, -1e9)

    bias = bias_scr[...]                                 # (T, T), same for every sequence
    x = _fused_block(x_scr[...], layer_refs, lambda b: bias,
                     B=B, T=T, n_head=n_head, ln_eps=1e-12)
    x_scr[...] = x                                       # one store per layer

    @pl.when(l == n_layers - 1)
    def _finalize():
        cls_rows = jnp.concatenate([x_scr[b * T:b * T + 1, :] for b in range(B)],
                                   axis=0)               # (B, hv)
        cls_h = _ln(cls_rows, lng_ref[...], lnb_ref[...], 1e-12)
        out_ref[...] = (jnp.dot(_bf16(cls_h), projw_ref[...],
                                preferred_element_type=jnp.float32) + projb_ref[...])


def vit_encode_project(vit, proj_w, proj_b, pixel_values, *, n_head, patch):
    b, c, hh, ww = pixel_values.shape
    hp, wp = hh // patch, ww // patch
    n_patches = hp * wp
    n_real = n_patches + 1
    t = ((n_real + 7) // 8) * 8                          # pad sequence to sublane tile
    hv = vit["patch_w"].shape[1]
    ed = proj_w.shape[1]
    lay = vit["layers"]
    n_layers = lay["w_qkv"].shape[0]

    # Unfold NCHW image into (B*n_patches, C*ph*pw) so the patch-embed conv is a matmul.
    patches = pixel_values.reshape(b, c, hp, patch, wp, patch)
    patches = patches.transpose(0, 2, 4, 1, 3, 5).reshape(b * n_patches,
                                                          c * patch * patch)
    patches = patches.astype(jnp.bfloat16)
    pos_pad = jnp.pad(vit["pos"], ((0, t - n_real), (0, 0)))        # (t, hv) f32

    fixed_pre = (patches, vit["patch_w"], vit["patch_b"], vit["cls"], pos_pad)
    layer_in = tuple(lay[k] for k in _LAYER_KEYS)
    fixed_post = (vit["ln_g"], vit["ln_b"], proj_w, proj_b)
    inputs = (*fixed_pre, *layer_in, *fixed_post)
    in_specs = ([_const_spec(a.shape) for a in fixed_pre]
                + [_layer_spec(a.shape) for a in layer_in]
                + [_const_spec(a.shape) for a in fixed_post])

    return pl.pallas_call(
        functools.partial(_vit_kernel, B=b, T=t, n_real=n_real, n_patches=n_patches,
                          n_head=n_head, n_layers=n_layers),
        grid=(n_layers,),
        out_shape=jax.ShapeDtypeStruct((b, ed), jnp.float32),
        in_specs=in_specs,
        out_specs=_const_spec((b, ed)),
        scratch_shapes=[pltpu.VMEM((b * t, hv), jnp.float32),
                        pltpu.VMEM((t, t), jnp.float32)],
        compiler_params=pltpu.CompilerParams(dimension_semantics=("arbitrary",)),
    )(*inputs)


# -----------------------------------------------------------------------------
# Fused GPT-2 decoder kernel: wpe + blocks + final LN + tied lm_head + shifted CE
# -----------------------------------------------------------------------------
def _gpt2_kernel(x_in_ref, wpe_ref, mask_ref, tgt_ref,
                 ln1g, ln1b, wqkv, bqkv, wo, bo, ln2g, ln2b, wfc, bfc, wpj, bpj,
                 lnfg_ref, lnfb_ref, wte_ref,
                 logits_ref, loss_ref, x_scr, bias_scr,
                 *, B, T, n_head, n_layers):
    l = pl.program_id(0)
    layer_refs = (ln1g, ln1b, wqkv, bqkv, wo, bo, ln2g, ln2b, wfc, bfc, wpj, bpj)

    @pl.when(l == 0)
    def _init():
        wpe = wpe_ref[...]                               # (T, D)
        for b in range(B):
            x_scr[b * T:(b + 1) * T, :] = x_in_ref[b * T:(b + 1) * T, :] + wpe
        # Causal + key-padding mask -> per-sequence additive bias, built once.
        qi = jax.lax.broadcasted_iota(jnp.int32, (T, T), 0)
        ki = jax.lax.broadcasted_iota(jnp.int32, (T, T), 1)
        causal = ki <= qi
        for b in range(B):
            keep = jnp.logical_and(causal, mask_ref[b] > 0.5)        # (1,T) bcast
            bias_scr[b] = jnp.where(keep, 0.0, -1e9)

    x = _fused_block(x_scr[...], layer_refs, lambda b: bias_scr[b],
                     B=B, T=T, n_head=n_head, ln_eps=1e-5)
    x_scr[...] = x                                       # one store per layer

    @pl.when(l == n_layers - 1)
    def _finalize():
        xf = _ln(x_scr[...], lnfg_ref[...], lnfb_ref[...], 1e-5)     # (B*T, D)
        # Tied lm_head: contract against wte's embedding axis (no transpose needed).
        logits = jax.lax.dot_general(_bf16(xf), wte_ref[...], (((1,), (1,)), ((), ())),
                                     preferred_element_type=jnp.float32)   # (B*T, V)
        logits_ref[...] = logits

        tgt = tgt_ref[...]                               # (B*T, 1) int32, pre-shifted
        valid = (tgt != -100).astype(jnp.float32)
        vocab_iota = jax.lax.broadcasted_iota(jnp.int32, logits.shape, 1)
        tgt_logit = jnp.sum(jnp.where(vocab_iota == tgt, logits, 0.0),
                            axis=-1, keepdims=True)
        m = jnp.max(logits, axis=-1, keepdims=True)
        lse = m + jnp.log(jnp.sum(jnp.exp(logits - m), axis=-1, keepdims=True))
        loss_ref[...] = jnp.sum((lse - tgt_logit) * valid, axis=0, keepdims=True)


def gpt2_decode(gpt2, x_flat, mask, targets, *, n_head, B, T):
    bt, d = x_flat.shape
    vocab = gpt2["wte"].shape[0]
    lay = gpt2["layers"]
    n_layers = lay["w_qkv"].shape[0]
    wpe = gpt2["wpe"][:T]

    fixed_pre = (x_flat, wpe, mask, targets)
    layer_in = tuple(lay[k] for k in _LAYER_KEYS)
    fixed_post = (gpt2["lnf_g"], gpt2["lnf_b"], gpt2["wte"])
    inputs = (*fixed_pre, *layer_in, *fixed_post)
    in_specs = ([_const_spec(a.shape) for a in fixed_pre]
                + [_layer_spec(a.shape) for a in layer_in]
                + [_const_spec(a.shape) for a in fixed_post])

    return pl.pallas_call(
        functools.partial(_gpt2_kernel, B=B, T=T, n_head=n_head, n_layers=n_layers),
        grid=(n_layers,),
        out_shape=(jax.ShapeDtypeStruct((bt, vocab), jnp.float32),
                   jax.ShapeDtypeStruct((1, 1), jnp.float32)),
        in_specs=in_specs,
        out_specs=(_const_spec((bt, vocab)), _const_spec((1, 1))),
        scratch_shapes=[pltpu.VMEM((bt, d), jnp.float32),
                        pltpu.VMEM((B, T, T), jnp.float32)],
        compiler_params=pltpu.CompilerParams(dimension_semantics=("arbitrary",)),
    )(*inputs)


# -----------------------------------------------------------------------------
# EncoderDecoderWrapper.forward
# -----------------------------------------------------------------------------
def encoder_decoder_forward(params, image_inputs, input_ids, attention_mask):
    # ViT encoder + CLS + image projector: one fused Pallas call -> (B, D)
    projected = vit_encode_project(params["vit"], params["proj_w"], params["proj_b"],
                                   image_inputs, n_head=2, patch=8)

    # TODO(synk): token-embedding gather (wte lookup) stays in JAX glue (XLA gather).
    cap_emb = jnp.take(params["gpt2"]["wte"], input_ids, axis=0).astype(jnp.float32)
    combined = jnp.concatenate([projected[:, None, :], cap_emb], axis=1)   # (B,1+Tc,D)
    b, t0, d = combined.shape
    ext_mask = jnp.concatenate(
        [jnp.ones((b, 1), attention_mask.dtype), attention_mask], axis=1)
    ext_labels = jnp.concatenate(
        [jnp.full((b, 1), -100, input_ids.dtype), input_ids], axis=1)

    # Pad the sequence to a multiple of 8 (sublane tile). Padded keys are masked and
    # padded labels are -100, so loss/logits match the unpadded computation exactly.
    t_pad = ((t0 + 7) // 8) * 8
    pad = t_pad - t0
    x_pad = jnp.pad(combined, ((0, 0), (0, pad), (0, 0)))
    mask_pad = jnp.pad(ext_mask, ((0, 0), (0, pad))).astype(jnp.float32)
    labels_pad = jnp.pad(ext_labels, ((0, 0), (0, pad)), constant_values=-100)
    # Row-aligned shifted targets: targets[b, t] = labels[b, t + 1]; last row ignored.
    # (As in the HF reference, labels at attention-masked caption positions are kept.)
    targets = jnp.concatenate(
        [labels_pad[:, 1:], jnp.full((b, 1), -100, labels_pad.dtype)], axis=1)

    logits_flat, loss_sum = gpt2_decode(
        params["gpt2"],
        x_pad.reshape(b * t_pad, d),
        mask_pad.reshape(b, 1, t_pad),
        targets.reshape(b * t_pad, 1).astype(jnp.int32),
        n_head=2, B=b, T=t_pad)

    logits = logits_flat.reshape(b, t_pad, -1)[:, :t0, :]
    n_valid = jnp.sum((targets != -100).astype(jnp.float32))
    loss = loss_sum[0, 0] / jnp.maximum(n_valid, 1.0)
    return loss, logits


# -----------------------------------------------------------------------------
# Deterministic synthetic parameters (per-layer weights stacked on a leading axis).
# Matmul weights are stored in bf16 (MXU-native, halves the streamed DMA bytes);
# biases / LayerNorm params / positional tables stay f32.
# -----------------------------------------------------------------------------
def init_params(key, *, vit_hidden=32, embed_dim=32, vocab=128, patch=8, channels=3,
                num_patches=4, vit_layers=2, gpt_layers=2, vit_mlp=64, gpt_mlp=128,
                max_pos=16):
    keys = iter(jax.random.split(key, 64))

    def w(shape, dtype=jnp.bfloat16, scale=0.02):
        return (scale * jax.random.normal(next(keys), shape)).astype(dtype)

    def stacked_layers(n, d, mlp):
        return {
            "ln1_g": jnp.ones((n, 1, d), jnp.float32),
            "ln1_b": jnp.zeros((n, 1, d), jnp.float32),
            "w_qkv": w((n, d, 3 * d)),
            "b_qkv": jnp.zeros((n, 1, 3 * d), jnp.float32),
            "w_o": w((n, d, d)),
            "b_o": jnp.zeros((n, 1, d), jnp.float32),
            "ln2_g": jnp.ones((n, 1, d), jnp.float32),
            "ln2_b": jnp.zeros((n, 1, d), jnp.float32),
            "w_fc": w((n, d, mlp)),
            "b_fc": jnp.zeros((n, 1, mlp), jnp.float32),
            "w_proj": w((n, mlp, d)),
            "b_proj": jnp.zeros((n, 1, d), jnp.float32),
        }

    vit = {
        "patch_w": w((channels * patch * patch, vit_hidden)),
        "patch_b": jnp.zeros((1, vit_hidden), jnp.float32),
        "cls": w((1, vit_hidden), jnp.float32),
        "pos": w((1 + num_patches, vit_hidden), jnp.float32),
        "layers": stacked_layers(vit_layers, vit_hidden, vit_mlp),
        "ln_g": jnp.ones((1, vit_hidden), jnp.float32),
        "ln_b": jnp.zeros((1, vit_hidden), jnp.float32),
    }
    gpt2 = {
        "wte": w((vocab, embed_dim)),
        "wpe": w((max_pos, embed_dim), jnp.float32),
        "layers": stacked_layers(gpt_layers, embed_dim, gpt_mlp),
        "lnf_g": jnp.ones((1, embed_dim), jnp.float32),
        "lnf_b": jnp.zeros((1, embed_dim), jnp.float32),
    }
    return {
        "vit": vit,
        "gpt2": gpt2,
        "proj_w": w((vit_hidden, embed_dim)),
        "proj_b": jnp.zeros((1, embed_dim), jnp.float32),
    }


if __name__ == "__main__":
    root = jax.random.PRNGKey(0)
    k_params, k_img, k_ids = jax.random.split(root, 3)

    params = init_params(k_params)

    B, C, H, W = 2, 3, 16, 16
    T_cap, VOCAB = 8, 128
    image_inputs = jax.random.normal(k_img, (B, C, H, W), jnp.float32)      # NCHW
    input_ids = jax.random.randint(k_ids, (B, T_cap), 0, VOCAB, jnp.int32)
    attention_mask = jnp.ones((B, T_cap), jnp.int32).at[1, -1].set(0)       # one padded pos

    fwd = jax.jit(encoder_decoder_forward)
    loss, logits = fwd(params, image_inputs, input_ids, attention_mask)
    jax.block_until_ready((loss, logits))

    assert logits.shape == (B, T_cap + 1, VOCAB)
    assert jnp.isfinite(loss)
    print("KERNEL_OK")
</pallas_src>

<mosaic_0001>
module attributes {stable_mosaic.version = 11 : i64} {
  func.func @_vit_kernel(%arg0: i32, %arg1: memref<8x192xbf16, #tpu.memory_space<vmem>>, %arg2: memref<192x32xbf16, #tpu.memory_space<vmem>>, %arg3: memref<1x32xf32, #tpu.memory_space<vmem>>, %arg4: memref<1x32xf32, #tpu.memory_space<vmem>>, %arg5: memref<8x32xf32, #tpu.memory_space<vmem>>, %arg6: memref<1x1x32xf32, #tpu.memory_space<vmem>>, %arg7: memref<1x1x32xf32, #tpu.memory_space<vmem>>, %arg8: memref<1x32x96xbf16, #tpu.memory_space<vmem>>, %arg9: memref<1x1x96xf32, #tpu.memory_space<vmem>>, %arg10: memref<1x32x32xbf16, #tpu.memory_space<vmem>>, %arg11: memref<1x1x32xf32, #tpu.memory_space<vmem>>, %arg12: memref<1x1x32xf32, #tpu.memory_space<vmem>>, %arg13: memref<1x1x32xf32, #tpu.memory_space<vmem>>, %arg14: memref<1x32x64xbf16, #tpu.memory_space<vmem>>, %arg15: memref<1x1x64xf32, #tpu.memory_space<vmem>>, %arg16: memref<1x64x32xbf16, #tpu.memory_space<vmem>>, %arg17: memref<1x1x32xf32, #tpu.memory_space<vmem>>, %arg18: memref<1x32xf32, #tpu.memory_space<vmem>>, %arg19: memref<1x32xf32, #tpu.memory_space<vmem>>, %arg20: memref<32x32xbf16, #tpu.memory_space<vmem>>, %arg21: memref<1x32xf32, #tpu.memory_space<vmem>>, %arg22: memref<2x32xf32, #tpu.memory_space<vmem>>, %arg23: memref<16x32xf32, #tpu.memory_space<vmem>>, %arg24: memref<8x8xf32, #tpu.memory_space<vmem>>) attributes {dimension_semantics = [#tpu.dimension_semantics<arbitrary>], iteration_bounds = array<i64: 2>, scalar_prefetch = 0 : i64, scratch_operands = 2 : i64, tpu.core_type = #tpu.core_type<tc>, window_params = [{pipeline_mode = #tpu.pipeline_mode<synchronous>, transform_indices = @transform_0, window_bounds = array<i64: 8, 192>}, {pipeline_mode = #tpu.pipeline_mode<synchronous>, transform_indices = @transform_1, window_bounds = array<i64: 192, 32>}, {pipeline_mode = #tpu.pipeline_mode<synchronous>, transform_indices = @transform_2, window_bounds = array<i64: 1, 32>}, {pipeline_mode = #tpu.pipeline_mode<synchronous>, transform_indices = @transform_3, window_bounds = array<i64: 1, 32>}, {pipeline_mode = #tpu.pipeline_mode<synchronous>, transform_indices = @transform_4, window_bounds = array<i64: 8, 32>}, {transform_indices = @transform_5, window_bounds = array<i64: 1, 1, 32>}, {transform_indices = @transform_6, window_bounds = array<i64: 1, 1, 32>}, {transform_indices = @transform_7, window_bounds = array<i64: 1, 32, 96>}, {transform_indices = @transform_8, window_bounds = array<i64: 1, 1, 96>}, {transform_indices = @transform_9, window_bounds = array<i64: 1, 32, 32>}, {transform_indices = @transform_10, window_bounds = array<i64: 1, 1, 32>}, {transform_indices = @transform_11, window_bounds = array<i64: 1, 1, 32>}, {transform_indices = @transform_12, window_bounds = array<i64: 1, 1, 32>}, {transform_indices = @transform_13, window_bounds = array<i64: 1, 32, 64>}, {transform_indices = @transform_14, window_bounds = array<i64: 1, 1, 64>}, {transform_indices = @transform_15, window_bounds = array<i64: 1, 64, 32>}, {transform_indices = @transform_16, window_bounds = array<i64: 1, 1, 32>}, {pipeline_mode = #tpu.pipeline_mode<synchronous>, transform_indices = @transform_17, window_bounds = array<i64: 1, 32>}, {pipeline_mode = #tpu.pipeline_mode<synchronous>, transform_indices = @transform_18, window_bounds = array<i64: 1, 32>}, {pipeline_mode = #tpu.pipeline_mode<synchronous>, transform_indices = @transform_19, window_bounds = array<i64: 32, 32>}, {pipeline_mode = #tpu.pipeline_mode<synchronous>, transform_indices = @transform_20, window_bounds = array<i64: 1, 32>}, {pipeline_mode = #tpu.pipeline_mode<synchronous>, transform_indices = @transform_21, window_bounds = array<i64: 2, 32>}]} {
    %c0_i32 = arith.constant 0 : i32
    %0 = arith.cmpi eq, %arg0, %c0_i32 : i32
    %1 = arith.extui %0 : i1 to i32
    %c0_i32_0 = arith.constant 0 : i32
    %2 = arith.cmpi ne, %1, %c0_i32_0 : i32
    scf.if %2 {
      %c0_83 = arith.constant 0 : index
      %c0_84 = arith.constant 0 : index
      %211 = vector.load %arg1[%c0_83, %c0_84] : memref<8x192xbf16, #tpu.memory_space<vmem>>, vector<8x192xbf16>
      %c0_85 = arith.constant 0 : index
      %c0_86 = arith.constant 0 : index
      %212 = vector.load %arg2[%c0_85, %c0_86] : memref<192x32xbf16, #tpu.memory_space<vmem>>, vector<192x32xbf16>
      %cst_87 = arith.constant dense<0.000000e+00> : vector<8x32xf32>
      %213 = tpu.matmul %211, %212, %cst_87 {dimension_numbers = #tpu.dot_dimension_numbers<[1], [0], [0], [1], [0, 0, 1, 1], [], []>} : vector<8x192xbf16>, vector<192x32xbf16>, vector<8x32xf32> -> vector<8x32xf32>
      %c0_88 = arith.constant 0 : index
      %c0_89 = arith.constant 0 : index
      %214 = vector.load %arg3[%c0_88, %c0_89] : memref<1x32xf32, #tpu.memory_space<vmem>>, vector<1x32xf32>
      %215 = vector.broadcast %214 : vector<1x32xf32> to vector<8x32xf32>
      %216 = arith.addf %213, %215 : vector<8x32xf32>
      %c0_90 = arith.constant 0 : index
      %c0_91 = arith.constant 0 : index
      %217 = vector.load %arg4[%c0_90, %c0_91] : memref<1x32xf32, #tpu.memory_space<vmem>>, vector<1x32xf32>
      %c0_92 = arith.constant 0 : index
      %c0_93 = arith.constant 0 : index
      %218 = vector.load %arg5[%c0_92, %c0_93] : memref<8x32xf32, #tpu.memory_space<vmem>>, vector<8x32xf32>
      %219 = vector.extract_strided_slice %216 {offsets = [0, 0], sizes = [4, 32], strides = [1, 1]} : vector<8x32xf32> to vector<4x32xf32>
      %cst_94 = arith.constant 0.000000e+00 : f32
      %220 = vector.broadcast %cst_94 : f32 to vector<3x32xf32>
      %221 = tpu.concatenate %217, %219, %220 in 0 : vector<1x32xf32>, vector<4x32xf32>, vector<3x32xf32> -> vector<8x32xf32>
      %222 = arith.addf %221, %218 : vector<8x32xf32>
      %c0_95 = arith.constant 0 : index
      %c0_96 = arith.constant 0 : index
      %223 = vector.load %arg23[%c0_95, %c0_96] : memref<16x32xf32, #tpu.memory_space<vmem>>, vector<8x32xf32>
      tpu.vector_store %arg23[%c0_95, %c0_96], %222 {strides = array<i32>} : memref<16x32xf32, #tpu.memory_space<vmem>>, vector<8x32xf32>,
      %224 = vector.extract_strided_slice %216 {offsets = [4, 0], sizes = [4, 32], strides = [1, 1]} : vector<8x32xf32> to vector<4x32xf32>
      %cst_97 = arith.constant 0.000000e+00 : f32
      %225 = vector.broadcast %cst_97 : f32 to vector<3x32xf32>
      %226 = tpu.concatenate %217, %224, %225 in 0 : vector<1x32xf32>, vector<4x32xf32>, vector<3x32xf32> -> vector<8x32xf32>
      %227 = arith.addf %226, %218 : vector<8x32xf32>
      %c8 = arith.constant 8 : index
      %c0_98 = arith.constant 0 : index
      %228 = vector.load %arg23[%c8, %c0_98] : memref<16x32xf32, #tpu.memory_space<vmem>>, vector<8x32xf32>
      tpu.vector_store %arg23[%c8, %c0_98], %227 {strides = array<i32>} : memref<16x32xf32, #tpu.memory_space<vmem>>, vector<8x32xf32>,
      %229 = tpu.iota {dimensions = array<i32: 1>} : vector<8x8xi32>
      %c5_i32 = arith.constant 5 : i32
      %230 = vector.broadcast %c5_i32 : i32 to vector<8x8xi32>
      %231 = arith.cmpi slt, %229, %230 : vector<8x8xi32>
      %cst_99 = arith.constant 0.000000e+00 : f32
      %cst_100 = arith.constant -1.000000e+09 : f32
      %232 = vector.broadcast %cst_99 : f32 to vector<8x8xf32>
      %233 = vector.broadcast %cst_100 : f32 to vector<8x8xf32>
      %234 = arith.select %231, %232, %233 : vector<8x8xi1>, vector<8x8xf32>
      %c0_101 = arith.constant 0 : index
      %c0_102 = arith.constant 0 : index
      %235 = vector.load %arg24[%c0_101, %c0_102] : memref<8x8xf32, #tpu.memory_space<vmem>>, vector<8x8xf32>
      tpu.vector_store %arg24[%c0_101, %c0_102], %234 {strides = array<i32>} : memref<8x8xf32, #tpu.memory_space<vmem>>, vector<8x8xf32>,
    } else {
    }
    %c0 = arith.constant 0 : index
    %c0_1 = arith.constant 0 : index
    %3 = vector.load %arg24[%c0, %c0_1] : memref<8x8xf32, #tpu.memory_space<vmem>>, vector<8x8xf32>
    %c0_2 = arith.constant 0 : index
    %c0_3 = arith.constant 0 : index
    %4 = vector.load %arg23[%c0_2, %c0_3] : memref<16x32xf32, #tpu.memory_space<vmem>>, vector<16x32xf32>
    %c0_4 = arith.constant 0 : index
    %c0_5 = arith.constant 0 : index
    %c0_6 = arith.constant 0 : index
    %5 = vector.load %arg10[%c0_4, %c0_5, %c0_6] : memref<1x32x32xbf16, #tpu.memory_space<vmem>>, vector<1x32x32xbf16>
    %6 = vector.shape_cast %5 : vector<1x32x32xbf16> to vector<32x32xbf16>
    %c0_7 = arith.constant 0 : index
    %c0_8 = arith.constant 0 : index
    %c0_9 = arith.constant 0 : index
    %7 = vector.load %arg6[%c0_7, %c0_8, %c0_9] : memref<1x1x32xf32, #tpu.memory_space<vmem>>, vector<1x1x32xf32>
    %8 = vector.shape_cast %7 : vector<1x1x32xf32> to vector<1x32xf32>
    %c0_10 = arith.constant 0 : index
    %c0_11 = arith.constant 0 : index
    %c0_12 = arith.constant 0 : index
    %9 = vector.load %arg7[%c0_10, %c0_11, %c0_12] : memref<1x1x32xf32, #tpu.memory_space<vmem>>, vector<1x1x32xf32>
    %10 = vector.shape_cast %9 : vector<1x1x32xf32> to vector<1x32xf32>
    %cst = arith.constant dense<0.000000e+00> : vector<16xf32>
    %11 = vector.multi_reduction <add>, %4, %cst [1] : vector<16x32xf32> to vector<16xf32>
    %12 = vector.shape_cast %11 : vector<16xf32> to vector<16x1xf32>
    %cst_13 = arith.constant 3.200000e+01 : f32
    %13 = vector.broadcast %cst_13 : f32 to vector<16x1xf32>
    %14 = arith.divf %12, %13 : vector<16x1xf32>
    %15 = vector.broadcast %14 : vector<16x1xf32> to vector<16x32xf32>
    %16 = arith.subf %4, %15 : vector<16x32xf32>
    %17 = arith.mulf %16, %16 : vector<16x32xf32>
    %cst_14 = arith.constant dense<0.000000e+00> : vector<16xf32>
    %18 = vector.multi_reduction <add>, %17, %cst_14 [1] : vector<16x32xf32> to vector<16xf32>
    %19 = vector.shape_cast %18 : vector<16xf32> to vector<16x1xf32>
    %cst_15 = arith.constant 3.200000e+01 : f32
    %20 = vector.broadcast %cst_15 : f32 to vector<16x1xf32>
    %21 = arith.divf %19, %20 : vector<16x1xf32>
    %22 = vector.broadcast %14 : vector<16x1xf32> to vector<16x32xf32>
    %23 = arith.subf %4, %22 : vector<16x32xf32>
    %cst_16 = arith.constant 9.99999996E-13 : f32
    %24 = vector.broadcast %cst_16 : f32 to vector<16x1xf32>
    %25 = arith.addf %21, %24 : vector<16x1xf32>
    %26 = math.rsqrt %25 : vector<16x1xf32>
    %27 = vector.broadcast %26 : vector<16x1xf32> to vector<16x32xf32>
    %28 = arith.mulf %23, %27 : vector<16x32xf32>
    %29 = vector.broadcast %8 : vector<1x32xf32> to vector<16x32xf32>
    %30 = arith.mulf %28, %29 : vector<16x32xf32>
    %31 = vector.broadcast %10 : vector<1x32xf32> to vector<16x32xf32>
    %32 = arith.addf %30, %31 : vector<16x32xf32>
    %33 = arith.truncf %32 : vector<16x32xf32> to vector<16x32xbf16>
    %c0_17 = arith.constant 0 : index
    %c0_18 = arith.constant 0 : index
    %c0_19 = arith.constant 0 : index
    %34 = vector.load %arg8[%c0_17, %c0_18, %c0_19] : memref<1x32x96xbf16, #tpu.memory_space<vmem>>, vector<1x32x96xbf16>
    %35 = vector.shape_cast %34 : vector<1x32x96xbf16> to vector<32x96xbf16>
    %cst_20 = arith.constant dense<0.000000e+00> : vector<16x96xf32>
    %36 = tpu.matmul %33, %35, %cst_20 {dimension_numbers = #tpu.dot_dimension_numbers<[1], [0], [0], [1], [0, 0, 1, 1], [], []>} : vector<16x32xbf16>, vector<32x96xbf16>, vector<16x96xf32> -> vector<16x96xf32>
    %c0_21 = arith.constant 0 : index
    %c0_22 = arith.constant 0 : index
    %c0_23 = arith.constant 0 : index
    %37 = vector.load %arg9[%c0_21, %c0_22, %c0_23] : memref<1x1x96xf32, #tpu.memory_space<vmem>>, vector<1x1x96xf32>
    %38 = vector.shape_cast %37 : vector<1x1x96xf32> to vector<1x96xf32>
    %39 = vector.broadcast %38 : vector<1x96xf32> to vector<16x96xf32>
    %40 = arith.addf %36, %39 : vector<16x96xf32>
    %41 = vector.extract_strided_slice %40 {offsets = [0, 0], sizes = [8, 96], strides = [1, 1]} : vector<16x96xf32> to vector<8x96xf32>
    %42 = vector.extract_strided_slice %41 {offsets = [0, 0], sizes = [8, 16], strides = [1, 1]} : vector<8x96xf32> to vector<8x16xf32>
    %43 = vector.extract_strided_slice %41 {offsets = [0, 32], sizes = [8, 16], strides = [1, 1]} : vector<8x96xf32> to vector<8x16xf32>
    %44 = vector.extract_strided_slice %41 {offsets = [0, 64], sizes = [8, 16], strides = [1, 1]} : vector<8x96xf32> to vector<8x16xf32>
    %45 = arith.truncf %42 : vector<8x16xf32> to vector<8x16xbf16>
    %46 = arith.truncf %43 : vector<8x16xf32> to vector<8x16xbf16>
    %cst_24 = arith.constant dense<0.000000e+00> : vector<8x8xf32>
    %47 = tpu.matmul %45, %46, %cst_24 {dimension_numbers = #tpu.dot_dimension_numbers<[1], [1], [0], [0], [0, 0, 1, 0], [], []>} : vector<8x16xbf16>, vector<8x16xbf16>, vector<8x8xf32> -> vector<8x8xf32>
    %cst_25 = arith.constant 2.500000e-01 : f32
    %48 = vector.broadcast %cst_25 : f32 to vector<8x8xf32>
    %49 = arith.mulf %47, %48 : vector<8x8xf32>
    %50 = arith.addf %49, %3 : vector<8x8xf32>
    %cst_26 = arith.constant dense<0xFF800000> : vector<8xf32>
    %51 = vector.multi_reduction <maximumf>, %50, %cst_26 [1] : vector<8x8xf32> to vector<8xf32>
    %52 = vector.shape_cast %51 : vector<8xf32> to vector<8x1xf32>
    %53 = vector.broadcast %52 : vector<8x1xf32> to vector<8x8xf32>
    %54 = arith.subf %50, %53 : vector<8x8xf32>
    %55 = math.exp %54 : vector<8x8xf32>
    %cst_27 = arith.constant dense<0.000000e+00> : vector<8xf32>
    %56 = vector.multi_reduction <add>, %55, %cst_27 [1] : vector<8x8xf32> to vector<8xf32>
    %57 = vector.shape_cast %56 : vector<8xf32> to vector<8x1xf32>
    %58 = tpu.reciprocal %57 {approx = true} : vector<8x1xf32> -> vector<8x1xf32>
    %59 = vector.broadcast %58 : vector<8x1xf32> to vector<8x8xf32>
    %60 = arith.mulf %55, %59 : vector<8x8xf32>
    %61 = arith.truncf %60 : vector<8x8xf32> to vector<8x8xbf16>
    %62 = arith.truncf %44 : vector<8x16xf32> to vector<8x16xbf16>
    %cst_28 = arith.constant dense<0.000000e+00> : vector<8x16xf32>
    %63 = tpu.matmul %61, %62, %cst_28 {dimension_numbers = #tpu.dot_dimension_numbers<[1], [0], [0], [1], [0, 0, 1, 1], [], []>} : vector<8x8xbf16>, vector<8x16xbf16>, vector<8x16xf32> -> vector<8x16xf32>
    %64 = arith.truncf %63 : vector<8x16xf32> to vector<8x16xbf16>
    %65 = vector.extract_strided_slice %6 {offsets = [0, 0], sizes = [16, 32], strides = [1, 1]} : vector<32x32xbf16> to vector<16x32xbf16>
    %cst_29 = arith.constant dense<0.000000e+00> : vector<8x32xf32>
    %66 = tpu.matmul %64, %65, %cst_29 {dimension_numbers = #tpu.dot_dimension_numbers<[1], [0], [0], [1], [0, 0, 1, 1], [], []>} : vector<8x16xbf16>, vector<16x32xbf16>, vector<8x32xf32> -> vector<8x32xf32>
    %67 = vector.extract_strided_slice %41 {offsets = [0, 16], sizes = [8, 16], strides = [1, 1]} : vector<8x96xf32> to vector<8x16xf32>
    %68 = vector.extract_strided_slice %41 {offsets = [0, 48], sizes = [8, 16], strides = [1, 1]} : vector<8x96xf32> to vector<8x16xf32>
    %69 = vector.extract_strided_slice %41 {offsets = [0, 80], sizes = [8, 16], strides = [1, 1]} : vector<8x96xf32> to vector<8x16xf32>
    %70 = arith.truncf %67 : vector<8x16xf32> to vector<8x16xbf16>
    %71 = arith.truncf %68 : vector<8x16xf32> to vector<8x16xbf16>
    %cst_30 = arith.constant dense<0.000000e+00> : vector<8x8xf32>
    %72 = tpu.matmul %70, %71, %cst_30 {dimension_numbers = #tpu.dot_dimension_numbers<[1], [1], [0], [0], [0, 0, 1, 0], [], []>} : vector<8x16xbf16>, vector<8x16xbf16>, vector<8x8xf32> -> vector<8x8xf32>
    %cst_31 = arith.constant 2.500000e-01 : f32
    %73 = vector.broadcast %cst_31 : f32 to vector<8x8xf32>
    %74 = arith.mulf %72, %73 : vector<8x8xf32>
    %75 = arith.addf %74, %3 : vector<8x8xf32>
    %cst_32 = arith.constant dense<0xFF800000> : vector<8xf32>
    %76 = vector.multi_reduction <maximumf>, %75, %cst_32 [1] : vector<8x8xf32> to vector<8xf32>
    %77 = vector.shape_cast %76 : vector<8xf32> to vector<8x1xf32>
    %78 = vector.broadcast %77 : vector<8x1xf32> to vector<8x8xf32>
    %79 = arith.subf %75, %78 : vector<8x8xf32>
    %80 = math.exp %79 : vector<8x8xf32>
    %cst_33 = arith.constant dense<0.000000e+00> : vector<8xf32>
    %81 = vector.multi_reduction <add>, %80, %cst_33 [1] : vector<8x8xf32> to vector<8xf32>
    %82 = vector.shape_cast %81 : vector<8xf32> to vector<8x1xf32>
    %83 = tpu.reciprocal %82 {approx = true} : vector<8x1xf32> -> vector<8x1xf32>
    %84 = vector.broadcast %83 : vector<8x1xf32> to vector<8x8xf32>
    %85 = arith.mulf %80, %84 : vector<8x8xf32>
    %86 = arith.truncf %85 : vector<8x8xf32> to vector<8x8xbf16>
    %87 = arith.truncf %69 : vector<8x16xf32> to vector<8x16xbf16>
    %cst_34 = arith.constant dense<0.000000e+00> : vector<8x16xf32>
    %88 = tpu.matmul %86, %87, %cst_34 {dimension_numbers = #tpu.dot_dimension_numbers<[1], [0], [0], [1], [0, 0, 1, 1], [], []>} : vector<8x8xbf16>, vector<8x16xbf16>, vector<8x16xf32> -> vector<8x16xf32>
    %89 = arith.truncf %88 : vector<8x16xf32> to vector<8x16xbf16>
    %90 = vector.extract_strided_slice %6 {offsets = [16, 0], sizes = [16, 32], strides = [1, 1]} : vector<32x32xbf16> to vector<16x32xbf16>
    %cst_35 = arith.constant dense<0.000000e+00> : vector<8x32xf32>
    %91 = tpu.matmul %89, %90, %cst_35 {dimension_numbers = #tpu.dot_dimension_numbers<[1], [0], [0], [1], [0, 0, 1, 1], [], []>} : vector<8x16xbf16>, vector<16x32xbf16>, vector<8x32xf32> -> vector<8x32xf32>
    %92 = arith.addf %66, %91 : vector<8x32xf32>
    %93 = vector.extract_strided_slice %40 {offsets = [8, 0], sizes = [8, 96], strides = [1, 1]} : vector<16x96xf32> to vector<8x96xf32>
    %94 = vector.extract_strided_slice %93 {offsets = [0, 0], sizes = [8, 16], strides = [1, 1]} : vector<8x96xf32> to vector<8x16xf32>
    %95 = vector.extract_strided_slice %93 {offsets = [0, 32], sizes = [8, 16], strides = [1, 1]} : vector<8x96xf32> to vector<8x16xf32>
    %96 = vector.extract_strided_slice %93 {offsets = [0, 64], sizes = [8, 16], strides = [1, 1]} : vector<8x96xf32> to vector<8x16xf32>
    %97 = arith.truncf %94 : vector<8x16xf32> to vector<8x16xbf16>
    %98 = arith.truncf %95 : vector<8x16xf32> to vector<8x16xbf16>
    %cst_36 = arith.constant dense<0.000000e+00> : vector<8x8xf32>
    %99 = tpu.matmul %97, %98, %cst_36 {dimension_numbers = #tpu.dot_dimension_numbers<[1], [1], [0], [0], [0, 0, 1, 0], [], []>} : vector<8x16xbf16>, vector<8x16xbf16>, vector<8x8xf32> -> vector<8x8xf32>
    %cst_37 = arith.constant 2.500000e-01 : f32
    %100 = vector.broadcast %cst_37 : f32 to vector<8x8xf32>
    %101 = arith.mulf %99, %100 : vector<8x8xf32>
    %102 = arith.addf %101, %3 : vector<8x8xf32>
    %cst_38 = arith.constant dense<0xFF800000> : vector<8xf32>
    %103 = vector.multi_reduction <maximumf>, %102, %cst_38 [1] : vector<8x8xf32> to vector<8xf32>
    %104 = vector.shape_cast %103 : vector<8xf32> to vector<8x1xf32>
    %105 = vector.broadcast %104 : vector<8x1xf32> to vector<8x8xf32>
    %106 = arith.subf %102, %105 : vector<8x8xf32>
    %107 = math.exp %106 : vector<8x8xf32>
    %cst_39 = arith.constant dense<0.000000e+00> : vector<8xf32>
    %108 = vector.multi_reduction <add>, %107, %cst_39 [1] : vector<8x8xf32> to vector<8xf32>
    %109 = vector.shape_cast %108 : vector<8xf32> to vector<8x1xf32>
    %110 = tpu.reciprocal %109 {approx = true} : vector<8x1xf32> -> vector<8x1xf32>
    %111 = vector.broadcast %110 : vector<8x1xf32> to vector<8x8xf32>
    %112 = arith.mulf %107, %111 : vector<8x8xf32>
    %113 = arith.truncf %112 : vector<8x8xf32> to vector<8x8xbf16>
    %114 = arith.truncf %96 : vector<8x16xf32> to vector<8x16xbf16>
    %cst_40 = arith.constant dense<0.000000e+00> : vector<8x16xf32>
    %115 = tpu.matmul %113, %114, %cst_40 {dimension_numbers = #tpu.dot_dimension_numbers<[1], [0], [0], [1], [0, 0, 1, 1], [], []>} : vector<8x8xbf16>, vector<8x16xbf16>, vector<8x16xf32> -> vector<8x16xf32>
    %116 = arith.truncf %115 : vector<8x16xf32> to vector<8x16xbf16>
    %117 = vector.extract_strided_slice %6 {offsets = [0, 0], sizes = [16, 32], strides = [1, 1]} : vector<32x32xbf16> to vector<16x32xbf16>
    %cst_41 = arith.constant dense<0.000000e+00> : vector<8x32xf32>
    %118 = tpu.matmul %116, %117, %cst_41 {dimension_numbers = #tpu.dot_dimension_numbers<[1], [0], [0], [1], [0, 0, 1, 1], [], []>} : vector<8x16xbf16>, vector<16x32xbf16>, vector<8x32xf32> -> vector<8x32xf32>
    %119 = vector.extract_strided_slice %93 {offsets = [0, 16], sizes = [8, 16], strides = [1, 1]} : vector<8x96xf32> to vector<8x16xf32>
    %120 = vector.extract_strided_slice %93 {offsets = [0, 48], sizes = [8, 16], strides = [1, 1]} : vector<8x96xf32> to vector<8x16xf32>
    %121 = vector.extract_strided_slice %93 {offsets = [0, 80], sizes = [8, 16], strides = [1, 1]} : vector<8x96xf32> to vector<8x16xf32>
    %122 = arith.truncf %119 : vector<8x16xf32> to vector<8x16xbf16>
    %123 = arith.truncf %120 : vector<8x16xf32> to vector<8x16xbf16>
    %cst_42 = arith.constant dense<0.000000e+00> : vector<8x8xf32>
    %124 = tpu.matmul %122, %123, %cst_42 {dimension_numbers = #tpu.dot_dimension_numbers<[1], [1], [0], [0], [0, 0, 1, 0], [], []>} : vector<8x16xbf16>, vector<8x16xbf16>, vector<8x8xf32> -> vector<8x8xf32>
    %cst_43 = arith.constant 2.500000e-01 : f32
    %125 = vector.broadcast %cst_43 : f32 to vector<8x8xf32>
    %126 = arith.mulf %124, %125 : vector<8x8xf32>
    %127 = arith.addf %126, %3 : vector<8x8xf32>
    %cst_44 = arith.constant dense<0xFF800000> : vector<8xf32>
    %128 = vector.multi_reduction <maximumf>, %127, %cst_44 [1] : vector<8x8xf32> to vector<8xf32>
    %129 = vector.shape_cast %128 : vector<8xf32> to vector<8x1xf32>
    %130 = vector.broadcast %129 : vector<8x1xf32> to vector<8x8xf32>
    %131 = arith.subf %127, %130 : vector<8x8xf32>
    %132 = math.exp %131 : vector<8x8xf32>
    %cst_45 = arith.constant dense<0.000000e+00> : vector<8xf32>
    %133 = vector.multi_reduction <add>, %132, %cst_45 [1] : vector<8x8xf32> to vector<8xf32>
    %134 = vector.shape_cast %133 : vector<8xf32> to vector<8x1xf32>
    %135 = tpu.reciprocal %134 {approx = true} : vector<8x1xf32> -> vector<8x1xf32>
    %136 = vector.broadcast %135 : vector<8x1xf32> to vector<8x8xf32>
    %137 = arith.mulf %132, %136 : vector<8x8xf32>
    %138 = arith.truncf %137 : vector<8x8xf32> to vector<8x8xbf16>
    %139 = arith.truncf %121 : vector<8x16xf32> to vector<8x16xbf16>
    %cst_46 = arith.constant dense<0.000000e+00> : vector<8x16xf32>
    %140 = tpu.matmul %138, %139, %cst_46 {dimension_numbers = #tpu.dot_dimension_numbers<[1], [0], [0], [1], [0, 0, 1, 1], [], []>} : vector<8x8xbf16>, vector<8x16xbf16>, vector<8x16xf32> -> vector<8x16xf32>
    %141 = arith.truncf %140 : vector<8x16xf32> to vector<8x16xbf16>
    %142 = vector.extract_strided_slice %6 {offsets = [16, 0], sizes = [16, 32], strides = [1, 1]} : vector<32x32xbf16> to vector<16x32xbf16>
    %cst_47 = arith.constant dense<0.000000e+00> : vector<8x32xf32>
    %143 = tpu.matmul %141, %142, %cst_47 {dimension_numbers = #tpu.dot_dimension_numbers<[1], [0], [0], [1], [0, 0, 1, 1], [], []>} : vector<8x16xbf16>, vector<16x32xbf16>, vector<8x32xf32> -> vector<8x32xf32>
    %144 = arith.addf %118, %143 : vector<8x32xf32>
    %145 = tpu.concatenate %92, %144 in 0 : vector<8x32xf32>, vector<8x32xf32> -> vector<16x32xf32>
    %c0_48 = arith.constant 0 : index
    %c0_49 = arith.constant 0 : index
    %c0_50 = arith.constant 0 : index
    %146 = vector.load %arg11[%c0_48, %c0_49, %c0_50] : memref<1x1x32xf32, #tpu.memory_space<vmem>>, vector<1x1x32xf32>
    %147 = vector.shape_cast %146 : vector<1x1x32xf32> to vector<1x32xf32>
    %148 = vector.broadcast %147 : vector<1x32xf32> to vector<16x32xf32>
    %149 = arith.addf %145, %148 : vector<16x32xf32>
    %150 = arith.addf %4, %149 : vector<16x32xf32>
    %c0_51 = arith.constant 0 : index
    %c0_52 = arith.constant 0 : index
    %c0_53 = arith.constant 0 : index
    %151 = vector.load %arg12[%c0_51, %c0_52, %c0_53] : memref<1x1x32xf32, #tpu.memory_space<vmem>>, vector<1x1x32xf32>
    %152 = vector.shape_cast %151 : vector<1x1x32xf32> to vector<1x32xf32>
    %c0_54 = arith.constant 0 : index
    %c0_55 = arith.constant 0 : index
    %c0_56 = arith.constant 0 : index
    %153 = vector.load %arg13[%c0_54, %c0_55, %c0_56] : memref<1x1x32xf32, #tpu.memory_space<vmem>>, vector<1x1x32xf32>
    %154 = vector.shape_cast %153 : vector<1x1x32xf32> to vector<1x32xf32>
    %cst_57 = arith.constant dense<0.000000e+00> : vector<16xf32>
    %155 = vector.multi_reduction <add>, %150, %cst_57 [1] : vector<16x32xf32> to vector<16xf32>
    %156 = vector.shape_cast %155 : vector<16xf32> to vector<16x1xf32>
    %cst_58 = arith.constant 3.200000e+01 : f32
    %157 = vector.broadcast %cst_58 : f32 to vector<16x1xf32>
    %158 = arith.divf %156, %157 : vector<16x1xf32>
    %159 = vector.broadcast %158 : vector<16x1xf32> to vector<16x32xf32>
    %160 = arith.subf %150, %159 : vector<16x32xf32>
    %161 = arith.mulf %160, %160 : vector<16x32xf32>
    %cst_59 = arith.constant dense<0.000000e+00> : vector<16xf32>
    %162 = vector.multi_reduction <add>, %161, %cst_59 [1] : vector<16x32xf32> to vector<16xf32>
    %163 = vector.shape_cast %162 : vector<16xf32> to vector<16x1xf32>
    %cst_60 = arith.constant 3.200000e+01 : f32
    %164 = vector.broadcast %cst_60 : f32 to vector<16x1xf32>
    %165 = arith.divf %163, %164 : vector<16x1xf32>
    %166 = vector.broadcast %158 : vector<16x1xf32> to vector<16x32xf32>
    %167 = arith.subf %150, %166 : vector<16x32xf32>
    %cst_61 = arith.constant 9.99999996E-13 : f32
    %168 = vector.broadcast %cst_61 : f32 to vector<16x1xf32>
    %169 = arith.addf %165, %168 : vector<16x1xf32>
    %170 = math.rsqrt %169 : vector<16x1xf32>
    %171 = vector.broadcast %170 : vector<16x1xf32> to vector<16x32xf32>
    %172 = arith.mulf %167, %171 : vector<16x32xf32>
    %173 = vector.broadcast %152 : vector<1x32xf32> to vector<16x32xf32>
    %174 = arith.mulf %172, %173 : vector<16x32xf32>
    %175 = vector.broadcast %154 : vector<1x32xf32> to vector<16x32xf32>
    %176 = arith.addf %174, %175 : vector<16x32xf32>
    %177 = arith.truncf %176 : vector<16x32xf32> to vector<16x32xbf16>
    %c0_62 = arith.constant 0 : index
    %c0_63 = arith.constant 0 : index
    %c0_64 = arith.constant 0 : index
    %178 = vector.load %arg14[%c0_62, %c0_63, %c0_64] : memref<1x32x64xbf16, #tpu.memory_space<vmem>>, vector<1x32x64xbf16>
    %179 = vector.shape_cast %178 : vector<1x32x64xbf16> to vector<32x64xbf16>
    %cst_65 = arith.constant dense<0.000000e+00> : vector<16x64xf32>
    %180 = tpu.matmul %177, %179, %cst_65 {dimension_numbers = #tpu.dot_dimension_numbers<[1], [0], [0], [1], [0, 0, 1, 1], [], []>} : vector<16x32xbf16>, vector<32x64xbf16>, vector<16x64xf32> -> vector<16x64xf32>
    %c0_66 = arith.constant 0 : index
    %c0_67 = arith.constant 0 : index
    %c0_68 = arith.constant 0 : index
    %181 = vector.load %arg15[%c0_66, %c0_67, %c0_68] : memref<1x1x64xf32, #tpu.memory_space<vmem>>, vector<1x1x64xf32>
    %182 = vector.shape_cast %181 : vector<1x1x64xf32> to vector<1x64xf32>
    %183 = vector.broadcast %182 : vector<1x64xf32> to vector<16x64xf32>
    %184 = arith.addf %180, %183 : vector<16x64xf32>
    %cst_69 = arith.constant 5.000000e-01 : f32
    %185 = vector.broadcast %cst_69 : f32 to vector<16x64xf32>
    %186 = arith.mulf %185, %184 : vector<16x64xf32>
    %cst_70 = arith.constant 4.471500e-02 : f32
    %187 = vector.broadcast %cst_70 : f32 to vector<16x64xf32>
    %188 = arith.mulf %187, %184 : vector<16x64xf32>
    %189 = arith.mulf %188, %184 : vector<16x64xf32>
    %190 = arith.mulf %189, %184 : vector<16x64xf32>
    %191 = arith.addf %184, %190 : vector<16x64xf32>
    %cst_71 = arith.constant 0.797884583 : f32
    %192 = vector.broadcast %cst_71 : f32 to vector<16x64xf32>
    %193 = arith.mulf %192, %191 : vector<16x64xf32>
    %194 = math.tanh %193 : vector<16x64xf32>
    %cst_72 = arith.constant 1.000000e+00 : f32
    %195 = vector.broadcast %cst_72 : f32 to vector<16x64xf32>
    %196 = arith.addf %195, %194 : vector<16x64xf32>
    %197 = arith.mulf %186, %196 : vector<16x64xf32>
    %198 = arith.truncf %197 : vector<16x64xf32> to vector<16x64xbf16>
    %c0_73 = arith.constant 0 : index
    %c0_74 = arith.constant 0 : index
    %c0_75 = arith.constant 0 : index
    %199 = vector.load %arg16[%c0_73, %c0_74, %c0_75] : memref<1x64x32xbf16, #tpu.memory_space<vmem>>, vector<1x64x32xbf16>
    %200 = vector.shape_cast %199 : vector<1x64x32xbf16> to vector<64x32xbf16>
    %cst_76 = arith.constant dense<0.000000e+00> : vector<16x32xf32>
    %201 = tpu.matmul %198, %200, %cst_76 {dimension_numbers = #tpu.dot_dimension_numbers<[1], [0], [0], [1], [0, 0, 1, 1], [], []>} : vector<16x64xbf16>, vector<64x32xbf16>, vector<16x32xf32> -> vector<16x32xf32>
    %c0_77 = arith.constant 0 : index
    %c0_78 = arith.constant 0 : index
    %c0_79 = arith.constant 0 : index
    %202 = vector.load %arg17[%c0_77, %c0_78, %c0_79] : memref<1x1x32xf32, #tpu.memory_space<vmem>>, vector<1x1x32xf32>
    %203 = vector.shape_cast %202 : vector<1x1x32xf32> to vector<1x32xf32>
    %204 = vector.broadcast %203 : vector<1x32xf32> to vector<16x32xf32>
    %205 = arith.addf %201, %204 : vector<16x32xf32>
    %206 = arith.addf %150, %205 : vector<16x32xf32>
    %c0_80 = arith.constant 0 : index
    %c0_81 = arith.constant 0 : index
    %207 = vector.load %arg23[%c0_80, %c0_81] : memref<16x32xf32, #tpu.memory_space<vmem>>, vector<16x32xf32>
    tpu.vector_store %arg23[%c0_80, %c0_81], %206 {strides = array<i32>} : memref<16x32xf32, #tpu.memory_space<vmem>>, vector<16x32xf32>,
    %c1_i32 = arith.constant 1 : i32
    %208 = arith.cmpi eq, %arg0, %c1_i32 : i32
    %209 = arith.extui %208 : i1 to i32
    %c0_i32_82 = arith.constant 0 : i32
    %210 = arith.cmpi ne, %209, %c0_i32_82 : i32
    scf.if %210 {
      %c0_83 = arith.constant 0 : index
      %c0_84 = arith.constant 0 : index
      %211 = vector.load %arg23[%c0_83, %c0_84] : memref<16x32xf32, #tpu.memory_space<vmem>>, vector<1x32xf32>
      %c8 = arith.constant 8 : index
      %c0_85 = arith.constant 0 : index
      %212 = vector.load %arg23[%c8, %c0_85] : memref<16x32xf32, #tpu.memory_space<vmem>>, vector<1x32xf32>
      %213 = tpu.concatenate %211, %212 in 0 : vector<1x32xf32>, vector<1x32xf32> -> vector<2x32xf32>
      %c0_86 = arith.constant 0 : index
      %c0_87 = arith.constant 0 : index
      %214 = vector.load %arg18[%c0_86, %c0_87] : memref<1x32xf32, #tpu.memory_space<vmem>>, vector<1x32xf32>
      %c0_88 = arith.constant 0 : index
      %c0_89 = arith.constant 0 : index
      %215 = vector.load %arg19[%c0_88, %c0_89] : memref<1x32xf32, #tpu.memory_space<vmem>>, vector<1x32xf32>
      %cst_90 = arith.constant dense<0.000000e+00> : vector<2xf32>
      %216 = vector.multi_reduction <add>, %213, %cst_90 [1] : vector<2x32xf32> to vector<2xf32>
      %217 = vector.shape_cast %216 : vector<2xf32> to vector<2x1xf32>
      %cst_91 = arith.constant 3.200000e+01 : f32
      %218 = vector.broadcast %cst_91 : f32 to vector<2x1xf32>
      %219 = arith.divf %217, %218 : vector<2x1xf32>
      %220 = vector.broadcast %219 : vector<2x1xf32> to vector<2x32xf32>
      %221 = arith.subf %213, %220 : vector<2x32xf32>
      %222 = arith.mulf %221, %221 : vector<2x32xf32>
      %cst_92 = arith.constant dense<0.000000e+00> : vector<2xf32>
      %223 = vector.multi_reduction <add>, %222, %cst_92 [1] : vector<2x32xf32> to vector<2xf32>
      %224 = vector.shape_cast %223 : vector<2xf32> to vector<2x1xf32>
      %cst_93 = arith.constant 3.200000e+01 : f32
      %225 = vector.broadcast %cst_93 : f32 to vector<2x1xf32>
      %226 = arith.divf %224, %225 : vector<2x1xf32>
      %227 = vector.broadcast %219 : vector<2x1xf32> to vector<2x32xf32>
      %228 = arith.subf %213, %227 : vector<2x32xf32>
      %cst_94 = arith.constant 9.99999996E-13 : f32
      %229 = vector.broadcast %cst_94 : f32 to vector<2x1xf32>
      %230 = arith.addf %226, %229 : vector<2x1xf32>
      %231 = math.rsqrt %230 : vector<2x1xf32>
      %232 = vector.broadcast %231 : vector<2x1xf32> to vector<2x32xf32>
      %233 = arith.mulf %228, %232 : vector<2x32xf32>
      %234 = vector.broadcast %214 : vector<1x32xf32> to vector<2x32xf32>
      %235 = arith.mulf %233, %234 : vector<2x32xf32>
      %236 = vector.broadcast %215 : vector<1x32xf32> to vector<2x32xf32>
      %237 = arith.addf %235, %236 : vector<2x32xf32>
      %238 = arith.truncf %237 : vector<2x32xf32> to vector<2x32xbf16>
      %c0_95 = arith.constant 0 : index
      %c0_96 = arith.constant 0 : index
      %239 = vector.load %arg20[%c0_95, %c0_96] : memref<32x32xbf16, #tpu.memory_space<vmem>>, vector<32x32xbf16>
      %cst_97 = arith.constant dense<0.000000e+00> : vector<2x32xf32>
      %240 = tpu.matmul %238, %239, %cst_97 {dimension_numbers = #tpu.dot_dimension_numbers<[1], [0], [0], [1], [0, 0, 1, 1], [], []>} : vector<2x32xbf16>, vector<32x32xbf16>, vector<2x32xf32> -> vector<2x32xf32>
      %c0_98 = arith.constant 0 : index
      %c0_99 = arith.constant 0 : index
      %241 = vector.load %arg21[%c0_98, %c0_99] : memref<1x32xf32, #tpu.memory_space<vmem>>, vector<1x32xf32>
      %242 = vector.broadcast %241 : vector<1x32xf32> to vector<2x32xf32>
      %243 = arith.addf %240, %242 : vector<2x32xf32>
      %c0_100 = arith.constant 0 : index
      %c0_101 = arith.constant 0 : index
      %244 = vector.load %arg22[%c0_100, %c0_101] : memref<2x32xf32, #tpu.memory_space<vmem>>, vector<2x32xf32>
      tpu.vector_store %arg22[%c0_100, %c0_101], %243 {strides = array<i32>} : memref<2x32xf32, #tpu.memory_space<vmem>>, vector<2x32xf32>,
    } else {
    }
    return
  }
  func.func @transform_0(%arg0: i32) -> (i32, i32) {
    %c0_i32 = arith.constant 0 : i32
    %c0_i32_0 = arith.constant 0 : i32
    %c0_i32_1 = arith.constant 0 : i32
    return %c0_i32, %c0_i32_0 : i32, i32
  }
  func.func @transform_1(%arg0: i32) -> (i32, i32) {
    %c0_i32 = arith.constant 0 : i32
    %c0_i32_0 = arith.constant 0 : i32
    %c0_i32_1 = arith.constant 0 : i32
    return %c0_i32, %c0_i32_0 : i32, i32
  }
  func.func @transform_2(%arg0: i32) -> (i32, i32) {
    %c0_i32 = arith.constant 0 : i32
    %c0_i32_0 = arith.constant 0 : i32
    %c0_i32_1 = arith.constant 0 : i32
    return %c0_i32, %c0_i32_0 : i32, i32
  }
  func.func @transform_3(%arg0: i32) -> (i32, i32) {
    %c0_i32 = arith.constant 0 : i32
    %c0_i32_0 = arith.constant 0 : i32
    %c0_i32_1 = arith.constant 0 : i32
    return %c0_i32, %c0_i32_0 : i32, i32
  }
  func.func @transform_4(%arg0: i32) -> (i32, i32) {
    %c0_i32 = arith.constant 0 : i32
    %c0_i32_0 = arith.constant 0 : i32
    %c0_i32_1 = arith.constant 0 : i32
    return %c0_i32, %c0_i32_0 : i32, i32
  }
  func.func @transform_5(%arg0: i32) -> (i32, i32, i32) {
    %c0_i32 = arith.constant 0 : i32
    %c0_i32_0 = arith.constant 0 : i32
    %c0_i32_1 = arith.constant 0 : i32
    return %arg0, %c0_i32, %c0_i32_0 : i32, i32, i32
  }
  func.func @transform_6(%arg0: i32) -> (i32, i32, i32) {
    %c0_i32 = arith.constant 0 : i32
    %c0_i32_0 = arith.constant 0 : i32
    %c0_i32_1 = arith.constant 0 : i32
    return %arg0, %c0_i32, %c0_i32_0 : i32, i32, i32
  }
  func.func @transform_7(%arg0: i32) -> (i32, i32, i32) {
    %c0_i32 = arith.constant 0 : i32
    %c0_i32_0 = arith.constant 0 : i32
    %c0_i32_1 = arith.constant 0 : i32
    return %arg0, %c0_i32, %c0_i32_0 : i32, i32, i32
  }
  func.func @transform_8(%arg0: i32) -> (i32, i32, i32) {
    %c0_i32 = arith.constant 0 : i32
    %c0_i32_0 = arith.constant 0 : i32
    %c0_i32_1 = arith.constant 0 : i32
    return %arg0, %c0_i32, %c0_i32_0 : i32, i32, i32
  }
  func.func @transform_9(%arg0: i32) -> (i32, i32, i32) {
    %c0_i32 = arith.constant 0 : i32
    %c0_i32_0 = arith.constant 0 : i32
    %c0_i32_1 = arith.constant 0 : i32
    return %arg0, %c0_i32, %c0_i32_0 : i32, i32, i32
  }
  func.func @transform_10(%arg0: i32) -> (i32, i32, i32) {
    %c0_i32 = arith.constant 0 : i32
    %c0_i32_0 = arith.constant 0 : i32
    %c0_i32_1 = arith.constant 0 : i32
    return %arg0, %c0_i32, %c0_i32_0 : i32, i32, i32
  }
  func.func @transform_11(%arg0: i32) -> (i32, i32, i32) {
    %c0_i32 = arith.constant 0 : i32
    %c0_i32_0 = arith.constant 0 : i32
    %c0_i32_1 = arith.constant 0 : i32
    return %arg0, %c0_i32, %c0_i32_0 : i32, i32, i32
  }
  func.func @transform_12(%arg0: i32) -> (i32, i32, i32) {
    %c0_i32 = arith.constant 0 : i32
    %c0_i32_0 = arith.constant 0 : i32
    %c0_i32_1 = arith.constant 0 : i32
    return %arg0, %c0_i32, %c0_i32_0 : i32, i32, i32
  }
  func.func @transform_13(%arg0: i32) -> (i32, i32, i32) {
    %c0_i32 = arith.constant 0 : i32
    %c0_i32_0 = arith.constant 0 : i32
    %c0_i32_1 = arith.constant 0 : i32
    return %arg0, %c0_i32, %c0_i32_0 : i32, i32, i32
  }
  func.func @transform_14(%arg0: i32) -> (i32, i32, i32) {
    %c0_i32 = arith.constant 0 : i32
    %c0_i32_0 = arith.constant 0 : i32
    %c0_i32_1 = arith.constant 0 : i32
    return %arg0, %c0_i32, %c0_i32_0 : i32, i32, i32
  }
  func.func @transform_15(%arg0: i32) -> (i32, i32, i32) {
    %c0_i32 = arith.constant 0 : i32
    %c0_i32_0 = arith.constant 0 : i32
    %c0_i32_1 = arith.constant 0 : i32
    return %arg0, %c0_i32, %c0_i32_0 : i32, i32, i32
  }
  func.func @transform_16(%arg0: i32) -> (i32, i32, i32) {
    %c0_i32 = arith.constant 0 : i32
    %c0_i32_0 = arith.constant 0 : i32
    %c0_i32_1 = arith.constant 0 : i32
    return %arg0, %c0_i32, %c0_i32_0 : i32, i32, i32
  }
  func.func @transform_17(%arg0: i32) -> (i32, i32) {
    %c0_i32 = arith.constant 0 : i32
    %c0_i32_0 = arith.constant 0 : i32
    %c0_i32_1 = arith.constant 0 : i32
    return %c0_i32, %c0_i32_0 : i32, i32
  }
  func.func @transform_18(%arg0: i32) -> (i32, i32) {
    %c0_i32 = arith.constant 0 : i32
    %c0_i32_0 = arith.constant 0 : i32
    %c0_i32_1 = arith.constant 0 : i32
    return %c0_i32, %c0_i32_0 : i32, i32
  }
  func.func @transform_19(%arg0: i32) -> (i32, i32) {
    %c0_i32 = arith.constant 0 : i32
    %c0_i32_0 = arith.constant 0 : i32
    %c0_i32_1 = arith.constant 0 : i32
    return %c0_i32, %c0_i32_0 : i32, i32
  }
  func.func @transform_20(%arg0: i32) -> (i32, i32) {
    %c0_i32 = arith.constant 0 : i32
    %c0_i32_0 = arith.constant 0 : i32
    %c0_i32_1 = arith.constant 0 : i32
    return %c0_i32, %c0_i32_0 : i32, i32
  }
  func.func @transform_21(%arg0: i32) -> (i32, i32) {
    %c0_i32 = arith.constant 0 : i32
    %c0_i32_0 = arith.constant 0 : i32
    %c0_i32_1 = arith.constant 0 : i32
    return %c0_i32, %c0_i32_0 : i32, i32
  }
}

module attributes {stable_mosaic.version = 11 : i64} {
  func.func @_gpt2_kernel(%arg0: i32, %arg1: memref<32x32xf32, #tpu.memory_space<vmem>>, %arg2: memref<16x32xf32, #tpu.memory_space<vmem>>, %arg3: memref<2x1x16xf32, #tpu.memory_space<vmem>>, %arg4: memref<32x1xi32, #tpu.memory_space<vmem>>, %arg5: memref<1x1x32xf32, #tpu.memory_space<vmem>>, %arg6: memref<1x1x32xf32, #tpu.memory_space<vmem>>, %arg7: memref<1x32x96xbf16, #tpu.memory_space<vmem>>, %arg8: memref<1x1x96xf32, #tpu.memory_space<vmem>>, %arg9: memref<1x32x32xbf16, #tpu.memory_space<vmem>>, %arg10: memref<1x1x32xf32, #tpu.memory_space<vmem>>, %arg11: memref<1x1x32xf32, #tpu.memory_space<vmem>>, %arg12: memref<1x1x32xf32, #tpu.memory_space<vmem>>, %arg13: memref<1x32x128xbf16, #tpu.memory_space<vmem>>, %arg14: memref<1x1x128xf32, #tpu.memory_space<vmem>>, %arg15: memref<1x128x32xbf16, #tpu.memory_space<vmem>>, %arg16: memref<1x1x32xf32, #tpu.memory_space<vmem>>, %arg17: memref<1x32xf32, #tpu.memory_space<vmem>>, %arg18: memref<1x32xf32, #tpu.memory_space<vmem>>, %arg19: memref<128x32xbf16, #tpu.memory_space<vmem>>, %arg20: memref<32x128xf32, #tpu.memory_space<vmem>>, %arg21: memref<1x1xf32, #tpu.memory_space<vmem>>, %arg22: memref<32x32xf32, #tpu.memory_space<vmem>>, %arg23: memref<2x16x16xf32, #tpu.memory_space<vmem>>) attributes {dimension_semantics = [#tpu.dimension_semantics<arbitrary>], iteration_bounds = array<i64: 2>, scalar_prefetch = 0 : i64, scratch_operands = 2 : i64, tpu.core_type = #tpu.core_type<tc>, window_params = [{pipeline_mode = #tpu.pipeline_mode<synchronous>, transform_indices = @transform_0, window_bounds = array<i64: 32, 32>}, {pipeline_mode = #tpu.pipeline_mode<synchronous>, transform_indices = @transform_1, window_bounds = array<i64: 16, 32>}, {pipeline_mode = #tpu.pipeline_mode<synchronous>, transform_indices = @transform_2, window_bounds = array<i64: 2, 1, 16>}, {pipeline_mode = #tpu.pipeline_mode<synchronous>, transform_indices = @transform_3, window_bounds = array<i64: 32, 1>}, {transform_indices = @transform_4, window_bounds = array<i64: 1, 1, 32>}, {transform_indices = @transform_5, window_bounds = array<i64: 1, 1, 32>}, {transform_indices = @transform_6, window_bounds = array<i64: 1, 32, 96>}, {transform_indices = @transform_7, window_bounds = array<i64: 1, 1, 96>}, {transform_indices = @transform_8, window_bounds = array<i64: 1, 32, 32>}, {transform_indices = @transform_9, window_bounds = array<i64: 1, 1, 32>}, {transform_indices = @transform_10, window_bounds = array<i64: 1, 1, 32>}, {transform_indices = @transform_11, window_bounds = array<i64: 1, 1, 32>}, {transform_indices = @transform_12, window_bounds = array<i64: 1, 32, 128>}, {transform_indices = @transform_13, window_bounds = array<i64: 1, 1, 128>}, {transform_indices = @transform_14, window_bounds = array<i64: 1, 128, 32>}, {transform_indices = @transform_15, window_bounds = array<i64: 1, 1, 32>}, {pipeline_mode = #tpu.pipeline_mode<synchronous>, transform_indices = @transform_16, window_bounds = array<i64: 1, 32>}, {pipeline_mode = #tpu.pipeline_mode<synchronous>, transform_indices = @transform_17, window_bounds = array<i64: 1, 32>}, {pipeline_mode = #tpu.pipeline_mode<synchronous>, transform_indices = @transform_18, window_bounds = array<i64: 128, 32>}, {pipeline_mode = #tpu.pipeline_mode<synchronous>, transform_indices = @transform_19, window_bounds = array<i64: 32, 128>}, {pipeline_mode = #tpu.pipeline_mode<synchronous>, transform_indices = @transform_20, window_bounds = array<i64: 1, 1>}]} {
    %c0_i32 = arith.constant 0 : i32
    %0 = arith.cmpi eq, %arg0, %c0_i32 : i32
    %1 = arith.extui %0 : i1 to i32
    %c0_i32_0 = arith.constant 0 : i32
    %2 = arith.cmpi ne, %1, %c0_i32_0 : i32
    scf.if %2 {
      %c0_86 = arith.constant 0 : index
      %c0_87 = arith.constant 0 : index
      %214 = vector.load %arg2[%c0_86, %c0_87] : memref<16x32xf32, #tpu.memory_space<vmem>>, vector<16x32xf32>
      %c0_88 = arith.constant 0 : index
      %c0_89 = arith.constant 0 : index
      %215 = vector.load %arg1[%c0_88, %c0_89] : memref<32x32xf32, #tpu.memory_space<vmem>>, vector<16x32xf32>
      %216 = arith.addf %215, %214 : vector<16x32xf32>
      %c0_90 = arith.constant 0 : index
      %c0_91 = arith.constant 0 : index
      %217 = vector.load %arg22[%c0_90, %c0_91] : memref<32x32xf32, #tpu.memory_space<vmem>>, vector<16x32xf32>
      tpu.vector_store %arg22[%c0_90, %c0_91], %216 {strides = array<i32>} : memref<32x32xf32, #tpu.memory_space<vmem>>, vector<16x32xf32>,
      %c16 = arith.constant 16 : index
      %c0_92 = arith.constant 0 : index
      %218 = vector.load %arg1[%c16, %c0_92] : memref<32x32xf32, #tpu.memory_space<vmem>>, vector<16x32xf32>
      %219 = arith.addf %218, %214 : vector<16x32xf32>
      %c16_93 = arith.constant 16 : index
      %c0_94 = arith.constant 0 : index
      %220 = vector.load %arg22[%c16_93, %c0_94] : memref<32x32xf32, #tpu.memory_space<vmem>>, vector<16x32xf32>
      tpu.vector_store %arg22[%c16_93, %c0_94], %219 {strides = array<i32>} : memref<32x32xf32, #tpu.memory_space<vmem>>, vector<16x32xf32>,
      %221 = tpu.iota {dimensions = array<i32: 0>} : vector<16x16xi32>
      %222 = tpu.iota {dimensions = array<i32: 1>} : vector<16x16xi32>
      %223 = arith.cmpi sle, %222, %221 : vector<16x16xi32>
      %c0_95 = arith.constant 0 : index
      %c0_96 = arith.constant 0 : index
      %c0_97 = arith.constant 0 : index
      %224 = vector.load %arg3[%c0_95, %c0_96, %c0_97] : memref<2x1x16xf32, #tpu.memory_space<vmem>>, vector<1x1x16xf32>
      %225 = vector.shape_cast %224 : vector<1x1x16xf32> to vector<1x16xf32>
      %cst_98 = arith.constant 5.000000e-01 : f32
      %226 = vector.broadcast %cst_98 : f32 to vector<1x16xf32>
      %227 = arith.cmpf ogt, %225, %226 : vector<1x16xf32>
      %228 = vector.broadcast %227 : vector<1x16xi1> to vector<16x16xi1>
      %229 = arith.andi %223, %228 : vector<16x16xi1>
      %cst_99 = arith.constant 0.000000e+00 : f32
      %cst_100 = arith.constant -1.000000e+09 : f32
      %230 = vector.broadcast %cst_99 : f32 to vector<16x16xf32>
      %231 = vector.broadcast %cst_100 : f32 to vector<16x16xf32>
      %232 = arith.select %229, %230, %231 : vector<16x16xi1>, vector<16x16xf32>
      %c0_101 = arith.constant 0 : index
      %c0_102 = arith.constant 0 : index
      %c0_103 = arith.constant 0 : index
      %233 = vector.load %arg23[%c0_101, %c0_102, %c0_103] : memref<2x16x16xf32, #tpu.memory_space<vmem>>, vector<1x16x16xf32>
      %234 = vector.shape_cast %233 : vector<1x16x16xf32> to vector<16x16xf32>
      %235 = vector.shape_cast %232 : vector<16x16xf32> to vector<1x16x16xf32>
      tpu.vector_store %arg23[%c0_101, %c0_102, %c0_103], %235 {strides = array<i32>} : memref<2x16x16xf32, #tpu.memory_space<vmem>>, vector<1x16x16xf32>,
      %c1_104 = arith.constant 1 : index
      %c0_105 = arith.constant 0 : index
      %c0_106 = arith.constant 0 : index
      %236 = vector.load %arg3[%c1_104, %c0_105, %c0_106] : memref<2x1x16xf32, #tpu.memory_space<vmem>>, vector<1x1x16xf32>
      %237 = vector.shape_cast %236 : vector<1x1x16xf32> to vector<1x16xf32>
      %cst_107 = arith.constant 5.000000e-01 : f32
      %238 = vector.broadcast %cst_107 : f32 to vector<1x16xf32>
      %239 = arith.cmpf ogt, %237, %238 : vector<1x16xf32>
      %240 = vector.broadcast %239 : vector<1x16xi1> to vector<16x16xi1>
      %241 = arith.andi %223, %240 : vector<16x16xi1>
      %cst_108 = arith.constant 0.000000e+00 : f32
      %cst_109 = arith.constant -1.000000e+09 : f32
      %242 = vector.broadcast %cst_108 : f32 to vector<16x16xf32>
      %243 = vector.broadcast %cst_109 : f32 to vector<16x16xf32>
      %244 = arith.select %241, %242, %243 : vector<16x16xi1>, vector<16x16xf32>
      %c1_110 = arith.constant 1 : index
      %c0_111 = arith.constant 0 : index
      %c0_112 = arith.constant 0 : index
      %245 = vector.load %arg23[%c1_110, %c0_111, %c0_112] : memref<2x16x16xf32, #tpu.memory_space<vmem>>, vector<1x16x16xf32>
      %246 = vector.shape_cast %245 : vector<1x16x16xf32> to vector<16x16xf32>
      %247 = vector.shape_cast %244 : vector<16x16xf32> to vector<1x16x16xf32>
      tpu.vector_store %arg23[%c1_110, %c0_111, %c0_112], %247 {strides = array<i32>} : memref<2x16x16xf32, #tpu.memory_space<vmem>>, vector<1x16x16xf32>,
    } else {
    }
    %c0 = arith.constant 0 : index
    %c0_1 = arith.constant 0 : index
    %3 = vector.load %arg22[%c0, %c0_1] : memref<32x32xf32, #tpu.memory_space<vmem>>, vector<32x32xf32>
    %c0_2 = arith.constant 0 : index
    %c0_3 = arith.constant 0 : index
    %c0_4 = arith.constant 0 : index
    %4 = vector.load %arg9[%c0_2, %c0_3, %c0_4] : memref<1x32x32xbf16, #tpu.memory_space<vmem>>, vector<1x32x32xbf16>
    %5 = vector.shape_cast %4 : vector<1x32x32xbf16> to vector<32x32xbf16>
    %c0_5 = arith.constant 0 : index
    %c0_6 = arith.constant 0 : index
    %c0_7 = arith.constant 0 : index
    %6 = vector.load %arg5[%c0_5, %c0_6, %c0_7] : memref<1x1x32xf32, #tpu.memory_space<vmem>>, vector<1x1x32xf32>
    %7 = vector.shape_cast %6 : vector<1x1x32xf32> to vector<1x32xf32>
    %c0_8 = arith.constant 0 : index
    %c0_9 = arith.constant 0 : index
    %c0_10 = arith.constant 0 : index
    %8 = vector.load %arg6[%c0_8, %c0_9, %c0_10] : memref<1x1x32xf32, #tpu.memory_space<vmem>>, vector<1x1x32xf32>
    %9 = vector.shape_cast %8 : vector<1x1x32xf32> to vector<1x32xf32>
    %cst = arith.constant dense<0.000000e+00> : vector<32xf32>
    %10 = vector.multi_reduction <add>, %3, %cst [1] : vector<32x32xf32> to vector<32xf32>
    %11 = vector.shape_cast %10 : vector<32xf32> to vector<32x1xf32>
    %cst_11 = arith.constant 3.200000e+01 : f32
    %12 = vector.broadcast %cst_11 : f32 to vector<32x1xf32>
    %13 = arith.divf %11, %12 : vector<32x1xf32>
    %14 = vector.broadcast %13 : vector<32x1xf32> to vector<32x32xf32>
    %15 = arith.subf %3, %14 : vector<32x32xf32>
    %16 = arith.mulf %15, %15 : vector<32x32xf32>
    %cst_12 = arith.constant dense<0.000000e+00> : vector<32xf32>
    %17 = vector.multi_reduction <add>, %16, %cst_12 [1] : vector<32x32xf32> to vector<32xf32>
    %18 = vector.shape_cast %17 : vector<32xf32> to vector<32x1xf32>
    %cst_13 = arith.constant 3.200000e+01 : f32
    %19 = vector.broadcast %cst_13 : f32 to vector<32x1xf32>
    %20 = arith.divf %18, %19 : vector<32x1xf32>
    %21 = vector.broadcast %13 : vector<32x1xf32> to vector<32x32xf32>
    %22 = arith.subf %3, %21 : vector<32x32xf32>
    %cst_14 = arith.constant 9.99999974E-6 : f32
    %23 = vector.broadcast %cst_14 : f32 to vector<32x1xf32>
    %24 = arith.addf %20, %23 : vector<32x1xf32>
    %25 = math.rsqrt %24 : vector<32x1xf32>
    %26 = vector.broadcast %25 : vector<32x1xf32> to vector<32x32xf32>
    %27 = arith.mulf %22, %26 : vector<32x32xf32>
    %28 = vector.broadcast %7 : vector<1x32xf32> to vector<32x32xf32>
    %29 = arith.mulf %27, %28 : vector<32x32xf32>
    %30 = vector.broadcast %9 : vector<1x32xf32> to vector<32x32xf32>
    %31 = arith.addf %29, %30 : vector<32x32xf32>
    %32 = arith.truncf %31 : vector<32x32xf32> to vector<32x32xbf16>
    %c0_15 = arith.constant 0 : index
    %c0_16 = arith.constant 0 : index
    %c0_17 = arith.constant 0 : index
    %33 = vector.load %arg7[%c0_15, %c0_16, %c0_17] : memref<1x32x96xbf16, #tpu.memory_space<vmem>>, vector<1x32x96xbf16>
    %34 = vector.shape_cast %33 : vector<1x32x96xbf16> to vector<32x96xbf16>
    %cst_18 = arith.constant dense<0.000000e+00> : vector<32x96xf32>
    %35 = tpu.matmul %32, %34, %cst_18 {dimension_numbers = #tpu.dot_dimension_numbers<[1], [0], [0], [1], [0, 0, 1, 1], [], []>} : vector<32x32xbf16>, vector<32x96xbf16>, vector<32x96xf32> -> vector<32x96xf32>
    %c0_19 = arith.constant 0 : index
    %c0_20 = arith.constant 0 : index
    %c0_21 = arith.constant 0 : index
    %36 = vector.load %arg8[%c0_19, %c0_20, %c0_21] : memref<1x1x96xf32, #tpu.memory_space<vmem>>, vector<1x1x96xf32>
    %37 = vector.shape_cast %36 : vector<1x1x96xf32> to vector<1x96xf32>
    %38 = vector.broadcast %37 : vector<1x96xf32> to vector<32x96xf32>
    %39 = arith.addf %35, %38 : vector<32x96xf32>
    %40 = vector.extract_strided_slice %39 {offsets = [0, 0], sizes = [16, 96], strides = [1, 1]} : vector<32x96xf32> to vector<16x96xf32>
    %c0_22 = arith.constant 0 : index
    %c0_23 = arith.constant 0 : index
    %c0_24 = arith.constant 0 : index
    %41 = vector.load %arg23[%c0_22, %c0_23, %c0_24] : memref<2x16x16xf32, #tpu.memory_space<vmem>>, vector<1x16x16xf32>
    %42 = vector.shape_cast %41 : vector<1x16x16xf32> to vector<16x16xf32>
    %43 = vector.extract_strided_slice %40 {offsets = [0, 0], sizes = [16, 16], strides = [1, 1]} : vector<16x96xf32> to vector<16x16xf32>
    %44 = vector.extract_strided_slice %40 {offsets = [0, 32], sizes = [16, 16], strides = [1, 1]} : vector<16x96xf32> to vector<16x16xf32>
    %45 = vector.extract_strided_slice %40 {offsets = [0, 64], sizes = [16, 16], strides = [1, 1]} : vector<16x96xf32> to vector<16x16xf32>
    %46 = arith.truncf %43 : vector<16x16xf32> to vector<16x16xbf16>
    %47 = arith.truncf %44 : vector<16x16xf32> to vector<16x16xbf16>
    %cst_25 = arith.constant dense<0.000000e+00> : vector<16x16xf32>
    %48 = tpu.matmul %46, %47, %cst_25 {dimension_numbers = #tpu.dot_dimension_numbers<[1], [1], [0], [0], [0, 0, 1, 0], [], []>} : vector<16x16xbf16>, vector<16x16xbf16>, vector<16x16xf32> -> vector<16x16xf32>
    %cst_26 = arith.constant 2.500000e-01 : f32
    %49 = vector.broadcast %cst_26 : f32 to vector<16x16xf32>
    %50 = arith.mulf %48, %49 : vector<16x16xf32>
    %51 = arith.addf %50, %42 : vector<16x16xf32>
    %cst_27 = arith.constant dense<0xFF800000> : vector<16xf32>
    %52 = vector.multi_reduction <maximumf>, %51, %cst_27 [1] : vector<16x16xf32> to vector<16xf32>
    %53 = vector.shape_cast %52 : vector<16xf32> to vector<16x1xf32>
    %54 = vector.broadcast %53 : vector<16x1xf32> to vector<16x16xf32>
    %55 = arith.subf %51, %54 : vector<16x16xf32>
    %56 = math.exp %55 : vector<16x16xf32>
    %cst_28 = arith.constant dense<0.000000e+00> : vector<16xf32>
    %57 = vector.multi_reduction <add>, %56, %cst_28 [1] : vector<16x16xf32> to vector<16xf32>
    %58 = vector.shape_cast %57 : vector<16xf32> to vector<16x1xf32>
    %59 = tpu.reciprocal %58 {approx = true} : vector<16x1xf32> -> vector<16x1xf32>
    %60 = vector.broadcast %59 : vector<16x1xf32> to vector<16x16xf32>
    %61 = arith.mulf %56, %60 : vector<16x16xf32>
    %62 = arith.truncf %61 : vector<16x16xf32> to vector<16x16xbf16>
    %63 = arith.truncf %45 : vector<16x16xf32> to vector<16x16xbf16>
    %cst_29 = arith.constant dense<0.000000e+00> : vector<16x16xf32>
    %64 = tpu.matmul %62, %63, %cst_29 {dimension_numbers = #tpu.dot_dimension_numbers<[1], [0], [0], [1], [0, 0, 1, 1], [], []>} : vector<16x16xbf16>, vector<16x16xbf16>, vector<16x16xf32> -> vector<16x16xf32>
    %65 = arith.truncf %64 : vector<16x16xf32> to vector<16x16xbf16>
    %66 = vector.extract_strided_slice %5 {offsets = [0, 0], sizes = [16, 32], strides = [1, 1]} : vector<32x32xbf16> to vector<16x32xbf16>
    %cst_30 = arith.constant dense<0.000000e+00> : vector<16x32xf32>
    %67 = tpu.matmul %65, %66, %cst_30 {dimension_numbers = #tpu.dot_dimension_numbers<[1], [0], [0], [1], [0, 0, 1, 1], [], []>} : vector<16x16xbf16>, vector<16x32xbf16>, vector<16x32xf32> -> vector<16x32xf32>
    %68 = vector.extract_strided_slice %40 {offsets = [0, 16], sizes = [16, 16], strides = [1, 1]} : vector<16x96xf32> to vector<16x16xf32>
    %69 = vector.extract_strided_slice %40 {offsets = [0, 48], sizes = [16, 16], strides = [1, 1]} : vector<16x96xf32> to vector<16x16xf32>
    %70 = vector.extract_strided_slice %40 {offsets = [0, 80], sizes = [16, 16], strides = [1, 1]} : vector<16x96xf32> to vector<16x16xf32>
    %71 = arith.truncf %68 : vector<16x16xf32> to vector<16x16xbf16>
    %72 = arith.truncf %69 : vector<16x16xf32> to vector<16x16xbf16>
    %cst_31 = arith.constant dense<0.000000e+00> : vector<16x16xf32>
    %73 = tpu.matmul %71, %72, %cst_31 {dimension_numbers = #tpu.dot_dimension_numbers<[1], [1], [0], [0], [0, 0, 1, 0], [], []>} : vector<16x16xbf16>, vector<16x16xbf16>, vector<16x16xf32> -> vector<16x16xf32>
    %cst_32 = arith.constant 2.500000e-01 : f32
    %74 = vector.broadcast %cst_32 : f32 to vector<16x16xf32>
    %75 = arith.mulf %73, %74 : vector<16x16xf32>
    %76 = arith.addf %75, %42 : vector<16x16xf32>
    %cst_33 = arith.constant dense<0xFF800000> : vector<16xf32>
    %77 = vector.multi_reduction <maximumf>, %76, %cst_33 [1] : vector<16x16xf32> to vector<16xf32>
    %78 = vector.shape_cast %77 : vector<16xf32> to vector<16x1xf32>
    %79 = vector.broadcast %78 : vector<16x1xf32> to vector<16x16xf32>
    %80 = arith.subf %76, %79 : vector<16x16xf32>
    %81 = math.exp %80 : vector<16x16xf32>
    %cst_34 = arith.constant dense<0.000000e+00> : vector<16xf32>
    %82 = vector.multi_reduction <add>, %81, %cst_34 [1] : vector<16x16xf32> to vector<16xf32>
    %83 = vector.shape_cast %82 : vector<16xf32> to vector<16x1xf32>
    %84 = tpu.reciprocal %83 {approx = true} : vector<16x1xf32> -> vector<16x1xf32>
    %85 = vector.broadcast %84 : vector<16x1xf32> to vector<16x16xf32>
    %86 = arith.mulf %81, %85 : vector<16x16xf32>
    %87 = arith.truncf %86 : vector<16x16xf32> to vector<16x16xbf16>
    %88 = arith.truncf %70 : vector<16x16xf32> to vector<16x16xbf16>
    %cst_35 = arith.constant dense<0.000000e+00> : vector<16x16xf32>
    %89 = tpu.matmul %87, %88, %cst_35 {dimension_numbers = #tpu.dot_dimension_numbers<[1], [0], [0], [1], [0, 0, 1, 1], [], []>} : vector<16x16xbf16>, vector<16x16xbf16>, vector<16x16xf32> -> vector<16x16xf32>
    %90 = arith.truncf %89 : vector<16x16xf32> to vector<16x16xbf16>
    %91 = vector.extract_strided_slice %5 {offsets = [16, 0], sizes = [16, 32], strides = [1, 1]} : vector<32x32xbf16> to vector<16x32xbf16>
    %cst_36 = arith.constant dense<0.000000e+00> : vector<16x32xf32>
    %92 = tpu.matmul %90, %91, %cst_36 {dimension_numbers = #tpu.dot_dimension_numbers<[1], [0], [0], [1], [0, 0, 1, 1], [], []>} : vector<16x16xbf16>, vector<16x32xbf16>, vector<16x32xf32> -> vector<16x32xf32>
    %93 = arith.addf %67, %92 : vector<16x32xf32>
    %94 = vector.extract_strided_slice %39 {offsets = [16, 0], sizes = [16, 96], strides = [1, 1]} : vector<32x96xf32> to vector<16x96xf32>
    %c1 = arith.constant 1 : index
    %c0_37 = arith.constant 0 : index
    %c0_38 = arith.constant 0 : index
    %95 = vector.load %arg23[%c1, %c0_37, %c0_38] : memref<2x16x16xf32, #tpu.memory_space<vmem>>, vector<1x16x16xf32>
    %96 = vector.shape_cast %95 : vector<1x16x16xf32> to vector<16x16xf32>
    %97 = vector.extract_strided_slice %94 {offsets = [0, 0], sizes = [16, 16], strides = [1, 1]} : vector<16x96xf32> to vector<16x16xf32>
    %98 = vector.extract_strided_slice %94 {offsets = [0, 32], sizes = [16, 16], strides = [1, 1]} : vector<16x96xf32> to vector<16x16xf32>
    %99 = vector.extract_strided_slice %94 {offsets = [0, 64], sizes = [16, 16], strides = [1, 1]} : vector<16x96xf32> to vector<16x16xf32>
    %100 = arith.truncf %97 : vector<16x16xf32> to vector<16x16xbf16>
    %101 = arith.truncf %98 : vector<16x16xf32> to vector<16x16xbf16>
    %cst_39 = arith.constant dense<0.000000e+00> : vector<16x16xf32>
    %102 = tpu.matmul %100, %101, %cst_39 {dimension_numbers = #tpu.dot_dimension_numbers<[1], [1], [0], [0], [0, 0, 1, 0], [], []>} : vector<16x16xbf16>, vector<16x16xbf16>, vector<16x16xf32> -> vector<16x16xf32>
    %cst_40 = arith.constant 2.500000e-01 : f32
    %103 = vector.broadcast %cst_40 : f32 to vector<16x16xf32>
    %104 = arith.mulf %102, %103 : vector<16x16xf32>
    %105 = arith.addf %104, %96 : vector<16x16xf32>
    %cst_41 = arith.constant dense<0xFF800000> : vector<16xf32>
    %106 = vector.multi_reduction <maximumf>, %105, %cst_41 [1] : vector<16x16xf32> to vector<16xf32>
    %107 = vector.shape_cast %106 : vector<16xf32> to vector<16x1xf32>
    %108 = vector.broadcast %107 : vector<16x1xf32> to vector<16x16xf32>
    %109 = arith.subf %105, %108 : vector<16x16xf32>
    %110 = math.exp %109 : vector<16x16xf32>
    %cst_42 = arith.constant dense<0.000000e+00> : vector<16xf32>
    %111 = vector.multi_reduction <add>, %110, %cst_42 [1] : vector<16x16xf32> to vector<16xf32>
    %112 = vector.shape_cast %111 : vector<16xf32> to vector<16x1xf32>
    %113 = tpu.reciprocal %112 {approx = true} : vector<16x1xf32> -> vector<16x1xf32>
    %114 = vector.broadcast %113 : vector<16x1xf32> to vector<16x16xf32>
    %115 = arith.mulf %110, %114 : vector<16x16xf32>
    %116 = arith.truncf %115 : vector<16x16xf32> to vector<16x16xbf16>
    %117 = arith.truncf %99 : vector<16x16xf32> to vector<16x16xbf16>
    %cst_43 = arith.constant dense<0.000000e+00> : vector<16x16xf32>
    %118 = tpu.matmul %116, %117, %cst_43 {dimension_numbers = #tpu.dot_dimension_numbers<[1], [0], [0], [1], [0, 0, 1, 1], [], []>} : vector<16x16xbf16>, vector<16x16xbf16>, vector<16x16xf32> -> vector<16x16xf32>
    %119 = arith.truncf %118 : vector<16x16xf32> to vector<16x16xbf16>
    %120 = vector.extract_strided_slice %5 {offsets = [0, 0], sizes = [16, 32], strides = [1, 1]} : vector<32x32xbf16> to vector<16x32xbf16>
    %cst_44 = arith.constant dense<0.000000e+00> : vector<16x32xf32>
    %121 = tpu.matmul %119, %120, %cst_44 {dimension_numbers = #tpu.dot_dimension_numbers<[1], [0], [0], [1], [0, 0, 1, 1], [], []>} : vector<16x16xbf16>, vector<16x32xbf16>, vector<16x32xf32> -> vector<16x32xf32>
    %122 = vector.extract_strided_slice %94 {offsets = [0, 16], sizes = [16, 16], strides = [1, 1]} : vector<16x96xf32> to vector<16x16xf32>
    %123 = vector.extract_strided_slice %94 {offsets = [0, 48], sizes = [16, 16], strides = [1, 1]} : vector<16x96xf32> to vector<16x16xf32>
    %124 = vector.extract_strided_slice %94 {offsets = [0, 80], sizes = [16, 16], strides = [1, 1]} : vector<16x96xf32> to vector<16x16xf32>
    %125 = arith.truncf %122 : vector<16x16xf32> to vector<16x16xbf16>
    %126 = arith.truncf %123 : vector<16x16xf32> to vector<16x16xbf16>
    %cst_45 = arith.constant dense<0.000000e+00> : vector<16x16xf32>
    %127 = tpu.matmul %125, %126, %cst_45 {dimension_numbers = #tpu.dot_dimension_numbers<[1], [1], [0], [0], [0, 0, 1, 0], [], []>} : vector<16x16xbf16>, vector<16x16xbf16>, vector<16x16xf32> -> vector<16x16xf32>
    %cst_46 = arith.constant 2.500000e-01 : f32
    %128 = vector.broadcast %cst_46 : f32 to vector<16x16xf32>
    %129 = arith.mulf %127, %128 : vector<16x16xf32>
    %130 = arith.addf %129, %96 : vector<16x16xf32>
    %cst_47 = arith.constant dense<0xFF800000> : vector<16xf32>
    %131 = vector.multi_reduction <maximumf>, %130, %cst_47 [1] : vector<16x16xf32> to vector<16xf32>
    %132 = vector.shape_cast %131 : vector<16xf32> to vector<16x1xf32>
    %133 = vector.broadcast %132 : vector<16x1xf32> to vector<16x16xf32>
    %134 = arith.subf %130, %133 : vector<16x16xf32>
    %135 = math.exp %134 : vector<16x16xf32>
    %cst_48 = arith.constant dense<0.000000e+00> : vector<16xf32>
    %136 = vector.multi_reduction <add>, %135, %cst_48 [1] : vector<16x16xf32> to vector<16xf32>
    %137 = vector.shape_cast %136 : vector<16xf32> to vector<16x1xf32>
    %138 = tpu.reciprocal %137 {approx = true} : vector<16x1xf32> -> vector<16x1xf32>
    %139 = vector.broadcast %138 : vector<16x1xf32> to vector<16x16xf32>
    %140 = arith.mulf %135, %139 : vector<16x16xf32>
    %141 = arith.truncf %140 : vector<16x16xf32> to vector<16x16xbf16>
    %142 = arith.truncf %124 : vector<16x16xf32> to vector<16x16xbf16>
    %cst_49 = arith.constant dense<0.000000e+00> : vector<16x16xf32>
    %143 = tpu.matmul %141, %142, %cst_49 {dimension_numbers = #tpu.dot_dimension_numbers<[1], [0], [0], [1], [0, 0, 1, 1], [], []>} : vector<16x16xbf16>, vector<16x16xbf16>, vector<16x16xf32> -> vector<16x16xf32>
    %144 = arith.truncf %143 : vector<16x16xf32> to vector<16x16xbf16>
    %145 = vector.extract_strided_slice %5 {offsets = [16, 0], sizes = [16, 32], strides = [1, 1]} : vector<32x32xbf16> to vector<16x32xbf16>
    %cst_50 = arith.constant dense<0.000000e+00> : vector<16x32xf32>
    %146 = tpu.matmul %144, %145, %cst_50 {dimension_numbers = #tpu.dot_dimension_numbers<[1], [0], [0], [1], [0, 0, 1, 1], [], []>} : vector<16x16xbf16>, vector<16x32xbf16>, vector<16x32xf32> -> vector<16x32xf32>
    %147 = arith.addf %121, %146 : vector<16x32xf32>
    %148 = tpu.concatenate %93, %147 in 0 : vector<16x32xf32>, vector<16x32xf32> -> vector<32x32xf32>
    %c0_51 = arith.constant 0 : index
    %c0_52 = arith.constant 0 : index
    %c0_53 = arith.constant 0 : index
    %149 = vector.load %arg10[%c0_51, %c0_52, %c0_53] : memref<1x1x32xf32, #tpu.memory_space<vmem>>, vector<1x1x32xf32>
    %150 = vector.shape_cast %149 : vector<1x1x32xf32> to vector<1x32xf32>
    %151 = vector.broadcast %150 : vector<1x32xf32> to vector<32x32xf32>
    %152 = arith.addf %148, %151 : vector<32x32xf32>
    %153 = arith.addf %3, %152 : vector<32x32xf32>
    %c0_54 = arith.constant 0 : index
    %c0_55 = arith.constant 0 : index
    %c0_56 = arith.constant 0 : index
    %154 = vector.load %arg11[%c0_54, %c0_55, %c0_56] : memref<1x1x32xf32, #tpu.memory_space<vmem>>, vector<1x1x32xf32>
    %155 = vector.shape_cast %154 : vector<1x1x32xf32> to vector<1x32xf32>
    %c0_57 = arith.constant 0 : index
    %c0_58 = arith.constant 0 : index
    %c0_59 = arith.constant 0 : index
    %156 = vector.load %arg12[%c0_57, %c0_58, %c0_59] : memref<1x1x32xf32, #tpu.memory_space<vmem>>, vector<1x1x32xf32>
    %157 = vector.shape_cast %156 : vector<1x1x32xf32> to vector<1x32xf32>
    %cst_60 = arith.constant dense<0.000000e+00> : vector<32xf32>
    %158 = vector.multi_reduction <add>, %153, %cst_60 [1] : vector<32x32xf32> to vector<32xf32>
    %159 = vector.shape_cast %158 : vector<32xf32> to vector<32x1xf32>
    %cst_61 = arith.constant 3.200000e+01 : f32
    %160 = vector.broadcast %cst_61 : f32 to vector<32x1xf32>
    %161 = arith.divf %159, %160 : vector<32x1xf32>
    %162 = vector.broadcast %161 : vector<32x1xf32> to vector<32x32xf32>
    %163 = arith.subf %153, %162 : vector<32x32xf32>
    %164 = arith.mulf %163, %163 : vector<32x32xf32>
    %cst_62 = arith.constant dense<0.000000e+00> : vector<32xf32>
    %165 = vector.multi_reduction <add>, %164, %cst_62 [1] : vector<32x32xf32> to vector<32xf32>
    %166 = vector.shape_cast %165 : vector<32xf32> to vector<32x1xf32>
    %cst_63 = arith.constant 3.200000e+01 : f32
    %167 = vector.broadcast %cst_63 : f32 to vector<32x1xf32>
    %168 = arith.divf %166, %167 : vector<32x1xf32>
    %169 = vector.broadcast %161 : vector<32x1xf32> to vector<32x32xf32>
    %170 = arith.subf %153, %169 : vector<32x32xf32>
    %cst_64 = arith.constant 9.99999974E-6 : f32
    %171 = vector.broadcast %cst_64 : f32 to vector<32x1xf32>
    %172 = arith.addf %168, %171 : vector<32x1xf32>
    %173 = math.rsqrt %172 : vector<32x1xf32>
    %174 = vector.broadcast %173 : vector<32x1xf32> to vector<32x32xf32>
    %175 = arith.mulf %170, %174 : vector<32x32xf32>
    %176 = vector.broadcast %155 : vector<1x32xf32> to vector<32x32xf32>
    %177 = arith.mulf %175, %176 : vector<32x32xf32>
    %178 = vector.broadcast %157 : vector<1x32xf32> to vector<32x32xf32>
    %179 = arith.addf %177, %178 : vector<32x32xf32>
    %180 = arith.truncf %179 : vector<32x32xf32> to vector<32x32xbf16>
    %c0_65 = arith.constant 0 : index
    %c0_66 = arith.constant 0 : index
    %c0_67 = arith.constant 0 : index
    %181 = vector.load %arg13[%c0_65, %c0_66, %c0_67] : memref<1x32x128xbf16, #tpu.memory_space<vmem>>, vector<1x32x128xbf16>
    %182 = vector.shape_cast %181 : vector<1x32x128xbf16> to vector<32x128xbf16>
    %cst_68 = arith.constant dense<0.000000e+00> : vector<32x128xf32>
    %183 = tpu.matmul %180, %182, %cst_68 {dimension_numbers = #tpu.dot_dimension_numbers<[1], [0], [0], [1], [0, 0, 1, 1], [], []>} : vector<32x32xbf16>, vector<32x128xbf16>, vector<32x128xf32> -> vector<32x128xf32>
    %c0_69 = arith.constant 0 : index
    %c0_70 = arith.constant 0 : index
    %c0_71 = arith.constant 0 : index
    %184 = vector.load %arg14[%c0_69, %c0_70, %c0_71] : memref<1x1x128xf32, #tpu.memory_space<vmem>>, vector<1x1x128xf32>
    %185 = vector.shape_cast %184 : vector<1x1x128xf32> to vector<1x128xf32>
    %186 = vector.broadcast %185 : vector<1x128xf32> to vector<32x128xf32>
    %187 = arith.addf %183, %186 : vector<32x128xf32>
    %cst_72 = arith.constant 5.000000e-01 : f32
    %188 = vector.broadcast %cst_72 : f32 to vector<32x128xf32>
    %189 = arith.mulf %188, %187 : vector<32x128xf32>
    %cst_73 = arith.constant 4.471500e-02 : f32
    %190 = vector.broadcast %cst_73 : f32 to vector<32x128xf32>
    %191 = arith.mulf %190, %187 : vector<32x128xf32>
    %192 = arith.mulf %191, %187 : vector<32x128xf32>
    %193 = arith.mulf %192, %187 : vector<32x128xf32>
    %194 = arith.addf %187, %193 : vector<32x128xf32>
    %cst_74 = arith.constant 0.797884583 : f32
    %195 = vector.broadcast %cst_74 : f32 to vector<32x128xf32>
    %196 = arith.mulf %195, %194 : vector<32x128xf32>
    %197 = math.tanh %196 : vector<32x128xf32>
    %cst_75 = arith.constant 1.000000e+00 : f32
    %198 = vector.broadcast %cst_75 : f32 to vector<32x128xf32>
    %199 = arith.addf %198, %197 : vector<32x128xf32>
    %200 = arith.mulf %189, %199 : vector<32x128xf32>
    %201 = arith.truncf %200 : vector<32x128xf32> to vector<32x128xbf16>
    %c0_76 = arith.constant 0 : index
    %c0_77 = arith.constant 0 : index
    %c0_78 = arith.constant 0 : index
    %202 = vector.load %arg15[%c0_76, %c0_77, %c0_78] : memref<1x128x32xbf16, #tpu.memory_space<vmem>>, vector<1x128x32xbf16>
    %203 = vector.shape_cast %202 : vector<1x128x32xbf16> to vector<128x32xbf16>
    %cst_79 = arith.constant dense<0.000000e+00> : vector<32x32xf32>
    %204 = tpu.matmul %201, %203, %cst_79 {dimension_numbers = #tpu.dot_dimension_numbers<[1], [0], [0], [1], [0, 0, 1, 1], [], []>} : vector<32x128xbf16>, vector<128x32xbf16>, vector<32x32xf32> -> vector<32x32xf32>
    %c0_80 = arith.constant 0 : index
    %c0_81 = arith.constant 0 : index
    %c0_82 = arith.constant 0 : index
    %205 = vector.load %arg16[%c0_80, %c0_81, %c0_82] : memref<1x1x32xf32, #tpu.memory_space<vmem>>, vector<1x1x32xf32>
    %206 = vector.shape_cast %205 : vector<1x1x32xf32> to vector<1x32xf32>
    %207 = vector.broadcast %206 : vector<1x32xf32> to vector<32x32xf32>
    %208 = arith.addf %204, %207 : vector<32x32xf32>
    %209 = arith.addf %153, %208 : vector<32x32xf32>
    %c0_83 = arith.constant 0 : index
    %c0_84 = arith.constant 0 : index
    %210 = vector.load %arg22[%c0_83, %c0_84] : memref<32x32xf32, #tpu.memory_space<vmem>>, vector<32x32xf32>
    tpu.vector_store %arg22[%c0_83, %c0_84], %209 {strides = array<i32>} : memref<32x32xf32, #tpu.memory_space<vmem>>, vector<32x32xf32>,
    %c1_i32 = arith.constant 1 : i32
    %211 = arith.cmpi eq, %arg0, %c1_i32 : i32
    %212 = arith.extui %211 : i1 to i32
    %c0_i32_85 = arith.constant 0 : i32
    %213 = arith.cmpi ne, %212, %c0_i32_85 : i32
    scf.if %213 {
      %c0_86 = arith.constant 0 : index
      %c0_87 = arith.constant 0 : index
      %214 = vector.load %arg22[%c0_86, %c0_87] : memref<32x32xf32, #tpu.memory_space<vmem>>, vector<32x32xf32>
      %c0_88 = arith.constant 0 : index
      %c0_89 = arith.constant 0 : index
      %215 = vector.load %arg17[%c0_88, %c0_89] : memref<1x32xf32, #tpu.memory_space<vmem>>, vector<1x32xf32>
      %c0_90 = arith.constant 0 : index
      %c0_91 = arith.constant 0 : index
      %216 = vector.load %arg18[%c0_90, %c0_91] : memref<1x32xf32, #tpu.memory_space<vmem>>, vector<1x32xf32>
      %cst_92 = arith.constant dense<0.000000e+00> : vector<32xf32>
      %217 = vector.multi_reduction <add>, %214, %cst_92 [1] : vector<32x32xf32> to vector<32xf32>
      %218 = vector.shape_cast %217 : vector<32xf32> to vector<32x1xf32>
      %cst_93 = arith.constant 3.200000e+01 : f32
      %219 = vector.broadcast %cst_93 : f32 to vector<32x1xf32>
      %220 = arith.divf %218, %219 : vector<32x1xf32>
      %221 = vector.broadcast %220 : vector<32x1xf32> to vector<32x32xf32>
      %222 = arith.subf %214, %221 : vector<32x32xf32>
      %223 = arith.mulf %222, %222 : vector<32x32xf32>
      %cst_94 = arith.constant dense<0.000000e+00> : vector<32xf32>
      %224 = vector.multi_reduction <add>, %223, %cst_94 [1] : vector<32x32xf32> to vector<32xf32>
      %225 = vector.shape_cast %224 : vector<32xf32> to vector<32x1xf32>
      %cst_95 = arith.constant 3.200000e+01 : f32
      %226 = vector.broadcast %cst_95 : f32 to vector<32x1xf32>
      %227 = arith.divf %225, %226 : vector<32x1xf32>
      %228 = vector.broadcast %220 : vector<32x1xf32> to vector<32x32xf32>
      %229 = arith.subf %214, %228 : vector<32x32xf32>
      %cst_96 = arith.constant 9.99999974E-6 : f32
      %230 = vector.broadcast %cst_96 : f32 to vector<32x1xf32>
      %231 = arith.addf %227, %230 : vector<32x1xf32>
      %232 = math.rsqrt %231 : vector<32x1xf32>
      %233 = vector.broadcast %232 : vector<32x1xf32> to vector<32x32xf32>
      %234 = arith.mulf %229, %233 : vector<32x32xf32>
      %235 = vector.broadcast %215 : vector<1x32xf32> to vector<32x32xf32>
      %236 = arith.mulf %234, %235 : vector<32x32xf32>
      %237 = vector.broadcast %216 : vector<1x32xf32> to vector<32x32xf32>
      %238 = arith.addf %236, %237 : vector<32x32xf32>
      %239 = arith.truncf %238 : vector<32x32xf32> to vector<32x32xbf16>
      %c0_97 = arith.constant 0 : index
      %c0_98 = arith.constant 0 : index
      %240 = vector.load %arg19[%c0_97, %c0_98] : memref<128x32xbf16, #tpu.memory_space<vmem>>, vector<128x32xbf16>
      %cst_99 = arith.constant dense<0.000000e+00> : vector<32x128xf32>
      %241 = tpu.matmul %239, %240, %cst_99 {dimension_numbers = #tpu.dot_dimension_numbers<[1], [1], [0], [0], [0, 0, 1, 0], [], []>} : vector<32x32xbf16>, vector<128x32xbf16>, vector<32x128xf32> -> vector<32x128xf32>
      %c0_100 = arith.constant 0 : index
      %c0_101 = arith.constant 0 : index
      %242 = vector.load %arg20[%c0_100, %c0_101] : memref<32x128xf32, #tpu.memory_space<vmem>>, vector<32x128xf32>
      tpu.vector_store %arg20[%c0_100, %c0_101], %241 {strides = array<i32>} : memref<32x128xf32, #tpu.memory_space<vmem>>, vector<32x128xf32>,
      %c0_102 = arith.constant 0 : index
      %c0_103 = arith.constant 0 : index
      %243 = vector.load %arg4[%c0_102, %c0_103] : memref<32x1xi32, #tpu.memory_space<vmem>>, vector<32x1xi32>
      %c-100_i32 = arith.constant -100 : i32
      %244 = vector.broadcast %c-100_i32 : i32 to vector<32x1xi32>
      %245 = arith.cmpi ne, %243, %244 : vector<32x1xi32>
      %246 = arith.extui %245 : vector<32x1xi1> to vector<32x1xi32>
      %247 = arith.sitofp %246 : vector<32x1xi32> to vector<32x1xf32>
      %248 = tpu.iota {dimensions = array<i32: 1>} : vector<32x128xi32>
      %249 = vector.broadcast %243 : vector<32x1xi32> to vector<32x128xi32>
      %250 = arith.cmpi eq, %248, %249 : vector<32x128xi32>
      %cst_104 = arith.constant 0.000000e+00 : f32
      %251 = vector.broadcast %cst_104 : f32 to vector<32x128xf32>
      %252 = arith.select %250, %241, %251 : vector<32x128xi1>, vector<32x128xf32>
      %cst_105 = arith.constant dense<0.000000e+00> : vector<32xf32>
      %253 = vector.multi_reduction <add>, %252, %cst_105 [1] : vector<32x128xf32> to vector<32xf32>
      %254 = vector.shape_cast %253 : vector<32xf32> to vector<32x1xf32>
      %cst_106 = arith.constant dense<0xFF800000> : vector<32xf32>
      %255 = vector.multi_reduction <maximumf>, %241, %cst_106 [1] : vector<32x128xf32> to vector<32xf32>
      %256 = vector.shape_cast %255 : vector<32xf32> to vector<32x1xf32>
      %257 = vector.broadcast %256 : vector<32x1xf32> to vector<32x128xf32>
      %258 = arith.subf %241, %257 : vector<32x128xf32>
      %259 = math.exp %258 : vector<32x128xf32>
      %cst_107 = arith.constant dense<0.000000e+00> : vector<32xf32>
      %260 = vector.multi_reduction <add>, %259, %cst_107 [1] : vector<32x128xf32> to vector<32xf32>
      %261 = vector.shape_cast %260 : vector<32xf32> to vector<32x1xf32>
      %262 = math.log %261 : vector<32x1xf32>
      %263 = arith.addf %256, %262 : vector<32x1xf32>
      %264 = arith.subf %263, %254 : vector<32x1xf32>
      %265 = arith.mulf %264, %247 : vector<32x1xf32>
      %cst_108 = arith.constant dense<0.000000e+00> : vector<1xf32>
      %266 = vector.multi_reduction <add>, %265, %cst_108 [0] : vector<32x1xf32> to vector<1xf32>
      %267 = vector.shape_cast %266 : vector<1xf32> to vector<1x1xf32>
      %c0_109 = arith.constant 0 : index
      %c0_110 = arith.constant 0 : index
      %268 = vector.load %arg21[%c0_109, %c0_110] : memref<1x1xf32, #tpu.memory_space<vmem>>, vector<1x1xf32>
      tpu.vector_store %arg21[%c0_109, %c0_110], %267 {strides = array<i32>} : memref<1x1xf32, #tpu.memory_space<vmem>>, vector<1x1xf32>,
    } else {
    }
    return
  }
  func.func @transform_0(%arg0: i32) -> (i32, i32) {
    %c0_i32 = arith.constant 0 : i32
    %c0_i32_0 = arith.constant 0 : i32
    %c0_i32_1 = arith.constant 0 : i32
    return %c0_i32, %c0_i32_0 : i32, i32
  }
  func.func @transform_1(%arg0: i32) -> (i32, i32) {
    %c0_i32 = arith.constant 0 : i32
    %c0_i32_0 = arith.constant 0 : i32
    %c0_i32_1 = arith.constant 0 : i32
    return %c0_i32, %c0_i32_0 : i32, i32
  }
  func.func @transform_2(%arg0: i32) -> (i32, i32, i32) {
    %c0_i32 = arith.constant 0 : i32
    %c0_i32_0 = arith.constant 0 : i32
    %c0_i32_1 = arith.constant 0 : i32
    %c0_i32_2 = arith.constant 0 : i32
    return %c0_i32, %c0_i32_0, %c0_i32_1 : i32, i32, i32
  }
  func.func @transform_3(%arg0: i32) -> (i32, i32) {
    %c0_i32 = arith.constant 0 : i32
    %c0_i32_0 = arith.constant 0 : i32
    %c0_i32_1 = arith.constant 0 : i32
    return %c0_i32, %c0_i32_0 : i32, i32
  }
  func.func @transform_4(%arg0: i32) -> (i32, i32, i32) {
    %c0_i32 = arith.constant 0 : i32
    %c0_i32_0 = arith.constant 0 : i32
    %c0_i32_1 = arith.constant 0 : i32
    return %arg0, %c0_i32, %c0_i32_0 : i32, i32, i32
  }
  func.func @transform_5(%arg0: i32) -> (i32, i32, i32) {
    %c0_i32 = arith.constant 0 : i32
    %c0_i32_0 = arith.constant 0 : i32
    %c0_i32_1 = arith.constant 0 : i32
    return %arg0, %c0_i32, %c0_i32_0 : i32, i32, i32
  }
  func.func @transform_6(%arg0: i32) -> (i32, i32, i32) {
    %c0_i32 = arith.constant 0 : i32
    %c0_i32_0 = arith.constant 0 : i32
    %c0_i32_1 = arith.constant 0 : i32
    return %arg0, %c0_i32, %c0_i32_0 : i32, i32, i32
  }
  func.func @transform_7(%arg0: i32) -> (i32, i32, i32) {
    %c0_i32 = arith.constant 0 : i32
    %c0_i32_0 = arith.constant 0 : i32
    %c0_i32_1 = arith.constant 0 : i32
    return %arg0, %c0_i32, %c0_i32_0 : i32, i32, i32
  }
  func.func @transform_8(%arg0: i32) -> (i32, i32, i32) {
    %c0_i32 = arith.constant 0 : i32
    %c0_i32_0 = arith.constant 0 : i32
    %c0_i32_1 = arith.constant 0 : i32
    return %arg0, %c0_i32, %c0_i32_0 : i32, i32, i32
  }
  func.func @transform_9(%arg0: i32) -> (i32, i32, i32) {
    %c0_i32 = arith.constant 0 : i32
    %c0_i32_0 = arith.constant 0 : i32
    %c0_i32_1 = arith.constant 0 : i32
    return %arg0, %c0_i32, %c0_i32_0 : i32, i32, i32
  }
  func.func @transform_10(%arg0: i32) -> (i32, i32, i32) {
    %c0_i32 = arith.constant 0 : i32
    %c0_i32_0 = arith.constant 0 : i32
    %c0_i32_1 = arith.constant 0 : i32
    return %arg0, %c0_i32, %c0_i32_0 : i32, i32, i32
  }
  func.func @transform_11(%arg0: i32) -> (i32, i32, i32) {
    %c0_i32 = arith.constant 0 : i32
    %c0_i32_0 = arith.constant 0 : i32
    %c0_i32_1 = arith.constant 0 : i32
    return %arg0, %c0_i32, %c0_i32_0 : i32, i32, i32
  }
  func.func @transform_12(%arg0: i32) -> (i32, i32, i32) {
    %c0_i32 = arith.constant 0 : i32
    %c0_i32_0 = arith.constant 0 : i32
    %c0_i32_1 = arith.constant 0 : i32
    return %arg0, %c0_i32, %c0_i32_0 : i32, i32, i32
  }
  func.func @transform_13(%arg0: i32) -> (i32, i32, i32) {
    %c0_i32 = arith.constant 0 : i32
    %c0_i32_0 = arith.constant 0 : i32
    %c0_i32_1 = arith.constant 0 : i32
    return %arg0, %c0_i32, %c0_i32_0 : i32, i32, i32
  }
  func.func @transform_14(%arg0: i32) -> (i32, i32, i32) {
    %c0_i32 = arith.constant 0 : i32
    %c0_i32_0 = arith.constant 0 : i32
    %c0_i32_1 = arith.constant 0 : i32
    return %arg0, %c0_i32, %c0_i32_0 : i32, i32, i32
  }
  func.func @transform_15(%arg0: i32) -> (i32, i32, i32) {
    %c0_i32 = arith.constant 0 : i32
    %c0_i32_0 = arith.constant 0 : i32
    %c0_i32_1 = arith.constant 0 : i32
    return %arg0, %c0_i32, %c0_i32_0 : i32, i32, i32
  }
  func.func @transform_16(%arg0: i32) -> (i32, i32) {
    %c0_i32 = arith.constant 0 : i32
    %c0_i32_0 = arith.constant 0 : i32
    %c0_i32_1 = arith.constant 0 : i32
    return %c0_i32, %c0_i32_0 : i32, i32
  }
  func.func @transform_17(%arg0: i32) -> (i32, i32) {
    %c0_i32 = arith.constant 0 : i32
    %c0_i32_0 = arith.constant 0 : i32
    %c0_i32_1 = arith.constant 0 : i32
    return %c0_i32, %c0_i32_0 : i32, i32
  }
  func.func @transform_18(%arg0: i32) -> (i32, i32) {
    %c0_i32 = arith.constant 0 : i32
    %c0_i32_0 = arith.constant 0 : i32
    %c0_i32_1 = arith.constant 0 : i32
    return %c0_i32, %c0_i32_0 : i32, i32
  }
  func.func @transform_19(%arg0: i32) -> (i32, i32) {
    %c0_i32 = arith.constant 0 : i32
    %c0_i32_0 = arith.constant 0 : i32
    %c0_i32_1 = arith.constant 0 : i32
    return %c0_i32, %c0_i32_0 : i32, i32
  }
  func.func @transform_20(%arg0: i32) -> (i32, i32) {
    %c0_i32 = arith.constant 0 : i32
    %c0_i32_0 = arith.constant 0 : i32
    %c0_i32_1 = arith.constant 0 : i32
    return %c0_i32, %c0_i32_0 : i32, i32
  }
}

</mosaic_0001>

<llo_original>
// kernel: encoder_decoder_forward.2
$region0: #{encoder_decoder_forward.2}
  #allocation0 [shape = 'u32[]', space=smem, size = 0x4, offset = 0x4, fixed_abs, tag = 'smem constant byte address 0x4 - core index']
  #allocation1 [shape = 'u32[144,128]{1,0:T(1,128)}', space=vmem, size = 0x12000, scoped, tag = 'internal scratch']
  #allocation2 [shape = 'f32[16,32]{1,0:T(8,128)}', space=vmem, size = 0x2000, scoped, tag = 'scratch operand']
  #allocation3 [shape = 'f32[8,8]{1,0:T(8,128)}', space=vmem, size = 0x1000, scoped, tag = 'scratch operand']
  %s0 = inlined_call_operand.vmem [shape: bf16[8,192], index: 0, kind: input, shape index: {}]
  %s1 = inlined_call_operand.vmem [shape: bf16[192,32], index: 1, kind: input, shape index: {}]
  %s2 = inlined_call_operand.vmem [shape: f32[1,32], index: 2, kind: input, shape index: {}]
  %s3 = inlined_call_operand.vmem [shape: f32[1,32], index: 3, kind: input, shape index: {}]
  %s4 = inlined_call_operand.vmem [shape: f32[8,32], index: 4, kind: input, shape index: {}]
  %s5 = inlined_call_operand.vmem [shape: f32[2,1,32], index: 5, kind: input, shape index: {}]
  %s6 = inlined_call_operand.vmem [shape: f32[2,1,32], index: 6, kind: input, shape index: {}]
  %s7 = inlined_call_operand.vmem [shape: bf16[2,32,96], index: 7, kind: input, shape index: {}]
  %s8 = inlined_call_operand.vmem [shape: f32[2,1,96], index: 8, kind: input, shape index: {}]
  %s9 = inlined_call_operand.vmem [shape: bf16[2,32,32], index: 9, kind: input, shape index: {}]
  %s10 = inlined_call_operand.vmem [shape: f32[2,1,32], index: 10, kind: input, shape index: {}]
  %s11 = inlined_call_operand.vmem [shape: f32[2,1,32], index: 11, kind: input, shape index: {}]
  %s12 = inlined_call_operand.vmem [shape: f32[2,1,32], index: 12, kind: input, shape index: {}]
  %s13 = inlined_call_operand.vmem [shape: bf16[2,32,64], index: 13, kind: input, shape index: {}]
  %s14 = inlined_call_operand.vmem [shape: f32[2,1,64], index: 14, kind: input, shape index: {}]
  %s15 = inlined_call_operand.vmem [shape: bf16[2,64,32], index: 15, kind: input, shape index: {}]
  %s16 = inlined_call_operand.vmem [shape: f32[2,1,32], index: 16, kind: input, shape index: {}]
  %s17 = inlined_call_operand.vmem [shape: f32[1,32], index: 17, kind: input, shape index: {}]
  %s18 = inlined_call_operand.vmem [shape: f32[1,32], index: 18, kind: input, shape index: {}]
  %s19 = inlined_call_operand.vmem [shape: bf16[32,32], index: 19, kind: input, shape index: {}]
  %s20 = inlined_call_operand.vmem [shape: f32[1,32], index: 20, kind: input, shape index: {}]
  %s21 = inlined_call_operand.vmem [shape: f32[2,32], index: 21, kind: output, shape index: {}]
  %s22 = sld [smem:[#allocation0]]
  $region125: #{encoder_decoder_forward.2} parent=0
    _
  %s24 = ssub.s32 1, %s22
  %s25 = scalar_select 0, %s24, %s22
  loop: start=0, step=1, limit=4
  $region2: #{encoder_decoder_forward.2} parent=0 // loop_pre_header
    _
  $region3: #{encoder_decoder_forward.2} parent=0 // loop_header
    %s27 = sphi 0, %s31
    %p28 = scmp.ge.s32.totalorder %s27, 4
    %s35 = sphi 0, %s35
    %s37 = sphi 0, %s35
    %s38 = sphi 0, %s37
    %s52 = sphi 0, %s38
    %s56 = sphi 0, %s56
    %s58 = sphi 0, %s56
    %s59 = sphi 0, %s58
    %s73 = sphi 0, %s59
    %s77 = sphi 0, %s77
    %s79 = sphi 0, %s77
    %s80 = sphi 0, %s79
    %s94 = sphi 0, %s80
    %s98 = sphi 0, %s98
    %s100 = sphi 0, %s98
    %s101 = sphi 0, %s100
    %s115 = sphi 0, %s101
    %s119 = sphi 0, %s119
    %s121 = sphi 0, %s119
    %s122 = sphi 0, %s121
    %s136 = sphi 0, %s122
    %s142 = sphi 0, %s144
    %s145 = sphi 0, %s142
    %s146 = sphi 0, %s145
    %s162 = sphi 0, %s146
    %s168 = sphi 0, %s170
    %s171 = sphi 0, %s168
    %s172 = sphi 0, %s171
    %s188 = sphi 0, %s172
    %s194 = sphi 0, %s196
    %s197 = sphi 0, %s194
    %s198 = sphi 0, %s197
    %s214 = sphi 0, %s198
    %s220 = sphi 0, %s222
    %s223 = sphi 0, %s220
    %s224 = sphi 0, %s223
    %s240 = sphi 0, %s224
    %s246 = sphi 0, %s248
    %s249 = sphi 0, %s246
    %s250 = sphi 0, %s249
    %s266 = sphi 0, %s250
    %s272 = sphi 0, %s274
    %s275 = sphi 0, %s272
    %s276 = sphi 0, %s275
    %s292 = sphi 0, %s276
    %s298 = sphi 0, %s300
    %s301 = sphi 0, %s298
    %s302 = sphi 0, %s301
    %s318 = sphi 0, %s302
    %s324 = sphi 0, %s326
    %s327 = sphi 0, %s324
    %s328 = sphi 0, %s327
    %s344 = sphi 0, %s328
    %s350 = sphi 0, %s352
    %s353 = sphi 0, %s350
    %s354 = sphi 0, %s353
    %s370 = sphi 0, %s354
    %s376 = sphi 0, %s378
    %s379 = sphi 0, %s376
    %s380 = sphi 0, %s379
    %s396 = sphi 0, %s380
    %s402 = sphi 0, %s404
    %s405 = sphi 0, %s402
    %s406 = sphi 0, %s405
    %s422 = sphi 0, %s406
    %s428 = sphi 0, %s430
    %s431 = sphi 0, %s428
    %s432 = sphi 0, %s431
    %s448 = sphi 0, %s432
    %s452 = sphi 0, %s452
    %s454 = sphi 0, %s452
    %s455 = sphi 0, %s454
    %s469 = sphi 0, %s455
    %s473 = sphi 0, %s473
    %s475 = sphi 0, %s473
    %s476 = sphi 0, %s475
    %s490 = sphi 0, %s476
    %s494 = sphi 0, %s494
    %s496 = sphi 0, %s494
    %s497 = sphi 0, %s496
    %s511 = sphi 0, %s497
    %s515 = sphi 0, %s515
    %s517 = sphi 0, %s515
    %s518 = sphi 0, %s517
    %s532 = sphi 0, %s518
    %s536 = sphi 0, %s536
    %s538 = sphi 0, %s536
    %s539 = sphi 0, %s538
    %s553 = sphi 0, %s539
  $region4: #{encoder_decoder_forward.2} parent=0 // loop_header_branch
    %30 = sbr.rel (%p28) target = $region8
  $region5: #{encoder_decoder_forward.2} parent=0 // loop_body
    %s32 = ssub.s32 %s27, 1
    %s33 = ssub.s32 %s27, 2
    %s34 = sadd.s32 %s27, 1
    %s36 = sadd.s32 %s35, 1
    %p39 = scmp.eq.s32.totalorder %s27, 1
    %p40 = scmp.ne.s32.totalorder %s35, %s37
    %p41 = scmp.eq.s32.totalorder %s27, 0
    %p42 = por %p40, %p41
    %p43 = scmp.ne.s32.totalorder %s35, %s37
    %p44 = scmp.eq.s32.totalorder %s32, 1
    %p45 = por %p43, %p44
    %p46 = scmp.ne.s32.totalorder %s37, %s38
    %p47 = scmp.eq.s32.totalorder %s32, 0
    %p48 = por %p46, %p47
    %p49 = scmp.ne.s32.totalorder %s37, %s38
    %p50 = scmp.eq.s32.totalorder %s33, 1
    %p51 = por %p49, %p50
    %p53 = scmp.ne.s32.totalorder %s38, %s52
    %p54 = scmp.eq.s32.totalorder %s33, 0
    %p55 = por %p53, %p54
    %s57 = sadd.s32 %s56, 1
    %p60 = scmp.eq.s32.totalorder %s27, 1
    %p61 = scmp.ne.s32.totalorder %s56, %s58
    %p62 = scmp.eq.s32.totalorder %s27, 0
    %p63 = por %p61, %p62
    %p64 = scmp.ne.s32.totalorder %s56, %s58
    %p65 = scmp.eq.s32.totalorder %s32, 1
    %p66 = por %p64, %p65
    %p67 = scmp.ne.s32.totalorder %s58, %s59
    %p68 = scmp.eq.s32.totalorder %s32, 0
    %p69 = por %p67, %p68
    %p70 = scmp.ne.s32.totalorder %s58, %s59
    %p71 = scmp.eq.s32.totalorder %s33, 1
    %p72 = por %p70, %p71
    %p74 = scmp.ne.s32.totalorder %s59, %s73
    %p75 = scmp.eq.s32.totalorder %s33, 0
    %p76 = por %p74, %p75
    %s78 = sadd.s32 %s77, 1
    %p81 = scmp.eq.s32.totalorder %s27, 1
    %p82 = scmp.ne.s32.totalorder %s77, %s79
    %p83 = scmp.eq.s32.totalorder %s27, 0
    %p84 = por %p82, %p83
    %p85 = scmp.ne.s32.totalorder %s77, %s79
    %p86 = scmp.eq.s32.totalorder %s32, 1
    %p87 = por %p85, %p86
    %p88 = scmp.ne.s32.totalorder %s79, %s80
    %p89 = scmp.eq.s32.totalorder %s32, 0
    %p90 = por %p88, %p89
    %p91 = scmp.ne.s32.totalorder %s79, %s80
    %p92 = scmp.eq.s32.totalorder %s33, 1
    %p93 = por %p91, %p92
    %p95 = scmp.ne.s32.totalorder %s80, %s94
    %p96 = scmp.eq.s32.totalorder %s33, 0
    %p97 = por %p95, %p96
    %s99 = sadd.s32 %s98, 1
    %p102 = scmp.eq.s32.totalorder %s27, 1
    %p103 = scmp.ne.s32.totalorder %s98, %s100
    %p104 = scmp.eq.s32.totalorder %s27, 0
    %p105 = por %p103, %p104
    %p106 = scmp.ne.s32.totalorder %s98, %s100
    %p107 = scmp.eq.s32.totalorder %s32, 1
    %p108 = por %p106, %p107
    %p109 = scmp.ne.s32.totalorder %s100, %s101
    %p110 = scmp.eq.s32.totalorder %s32, 0
    %p111 = por %p109, %p110
    %p112 = scmp.ne.s32.totalorder %s100, %s101
    %p113 = scmp.eq.s32.totalorder %s33, 1
    %p114 = por %p112, %p113
    %p116 = scmp.ne.s32.totalorder %s101, %s115
    %p117 = scmp.eq.s32.totalorder %s33, 0
    %p118 = por %p116, %p117
    %s120 = sadd.s32 %s119, 1
    %p123 = scmp.eq.s32.totalorder %s27, 1
    %p124 = scmp.ne.s32.totalorder %s119, %s121
    %p125 = scmp.eq.s32.totalorder %s27, 0
    %p126 = por %p124, %p125
    %p127 = scmp.ne.s32.totalorder %s119, %s121
    %p128 = scmp.eq.s32.totalorder %s32, 1
    %p129 = por %p127, %p128
    %p130 = scmp.ne.s32.totalorder %s121, %s122
    %p131 = scmp.eq.s32.totalorder %s32, 0
    %p132 = por %p130, %p131
    %p133 = scmp.ne.s32.totalorder %s121, %s122
    %p134 = scmp.eq.s32.totalorder %s33, 1
    %p135 = por %p133, %p134
    %p137 = scmp.ne.s32.totalorder %s122, %s136
    %p138 = scmp.eq.s32.totalorder %s33, 0
    %p139 = por %p137, %p138
    %s140 = ssub.s32 %s27, %s34
    %p141 = scmp.eq.s32.totalorder %s140, 0
    %s143 = sadd.s32 %s142, 1
    %s144 = scalar_select %p141, %s142, %s143
    %p147 = pneg %p141
    %p148 = scmp.eq.s32.totalorder %s27, 1
    %p149 = por %p147, %p148
    %p150 = scmp.ne.s32.totalorder %s142, %s145
    %p151 = scmp.eq.s32.totalorder %s27, 0
    %p152 = por %p150, %p151
    %p153 = scmp.ne.s32.totalorder %s142, %s145
    %p154 = scmp.eq.s32.totalorder %s32, 1
    %p155 = por %p153, %p154
    %p156 = scmp.ne.s32.totalorder %s145, %s146
    %p157 = scmp.eq.s32.totalorder %s32, 0
    %p158 = por %p156, %p157
    %p159 = scmp.ne.s32.totalorder %s145, %s146
    %p160 = scmp.eq.s32.totalorder %s33, 1
    %p161 = por %p159, %p160
    %p163 = scmp.ne.s32.totalorder %s146, %s162
    %p164 = scmp.eq.s32.totalorder %s33, 0
    %p165 = por %p163, %p164
    %s166 = ssub.s32 %s27, %s34
    %p167 = scmp.eq.s32.totalorder %s166, 0
    %s169 = sadd.s32 %s168, 1
    %s170 = scalar_select %p167, %s168, %s169
    %p173 = pneg %p167
    %p174 = scmp.eq.s32.totalorder %s27, 1
    %p175 = por %p173, %p174
    %p176 = scmp.ne.s32.totalorder %s168, %s171
    %p177 = scmp.eq.s32.totalorder %s27, 0
    %p178 = por %p176, %p177
    %p179 = scmp.ne.s32.totalorder %s168, %s171
    %p180 = scmp.eq.s32.totalorder %s32, 1
    %p181 = por %p179, %p180
    %p182 = scmp.ne.s32.totalorder %s171, %s172
    %p183 = scmp.eq.s32.totalorder %s32, 0
    %p184 = por %p182, %p183
    %p185 = scmp.ne.s32.totalorder %s171, %s172
    %p186 = scmp.eq.s32.totalorder %s33, 1
    %p187 = por %p185, %p186
    %p189 = scmp.ne.s32.totalorder %s172, %s188
    %p190 = scmp.eq.s32.totalorder %s33, 0
    %p191 = por %p189, %p190
    %s192 = ssub.s32 %s27, %s34
    %p193 = scmp.eq.s32.totalorder %s192, 0
    %s195 = sadd.s32 %s194, 1
    %s196 = scalar_select %p193, %s194, %s195
    %p199 = pneg %p193
    %p200 = scmp.eq.s32.totalorder %s27, 1
    %p201 = por %p199, %p200
    %p202 = scmp.ne.s32.totalorder %s194, %s197
    %p203 = scmp.eq.s32.totalorder %s27, 0
    %p204 = por %p202, %p203
    %p205 = scmp.ne.s32.totalorder %s194, %s197
    %p206 = scmp.eq.s32.totalorder %s32, 1
    %p207 = por %p205, %p206
    %p208 = scmp.ne.s32.totalorder %s197, %s198
    %p209 = scmp.eq.s32.totalorder %s32, 0
    %p210 = por %p208, %p209
    %p211 = scmp.ne.s32.totalorder %s197, %s198
    %p212 = scmp.eq.s32.totalorder %s33, 1
    %p213 = por %p211, %p212
    %p215 = scmp.ne.s32.totalorder %s198, %s214
    %p216 = scmp.eq.s32.totalorder %s33, 0
    %p217 = por %p215, %p216
    %s218 = ssub.s32 %s27, %s34
    %p219 = scmp.eq.s32.totalorder %s218, 0
    %s221 = sadd.s32 %s220, 1
    %s222 = scalar_select %p219, %s220, %s221
    %p225 = pneg %p219
    %p226 = scmp.eq.s32.totalorder %s27, 1
    %p227 = por %p225, %p226
    %p228 = scmp.ne.s32.totalorder %s220, %s223
    %p229 = scmp.eq.s32.totalorder %s27, 0
    %p230 = por %p228, %p229
    %p231 = scmp.ne.s32.totalorder %s220, %s223
    %p232 = scmp.eq.s32.totalorder %s32, 1
    %p233 = por %p231, %p232
    %p234 = scmp.ne.s32.totalorder %s223, %s224
    %p235 = scmp.eq.s32.totalorder %s32, 0
    %p236 = por %p234, %p235
    %p237 = scmp.ne.s32.totalorder %s223, %s224
    %p238 = scmp.eq.s32.totalorder %s33, 1
    %p239 = por %p237, %p238
    %p241 = scmp.ne.s32.totalorder %s224, %s240
    %p242 = scmp.eq.s32.totalorder %s33, 0
    %p243 = por %p241, %p242
    %s244 = ssub.s32 %s27, %s34
    %p245 = scmp.eq.s32.totalorder %s244, 0
    %s247 = sadd.s32 %s246, 1
    %s248 = scalar_select %p245, %s246, %s247
    %p251 = pneg %p245
    %p252 = scmp.eq.s32.totalorder %s27, 1
    %p253 = por %p251, %p252
    %p254 = scmp.ne.s32.totalorder %s246, %s249
    %p255 = scmp.eq.s32.totalorder %s27, 0
    %p256 = por %p254, %p255
    %p257 = scmp.ne.s32.totalorder %s246, %s249
    %p258 = scmp.eq.s32.totalorder %s32, 1
    %p259 = por %p257, %p258
    %p260 = scmp.ne.s32.totalorder %s249, %s250
    %p261 = scmp.eq.s32.totalorder %s32, 0
    %p262 = por %p260, %p261
    %p263 = scmp.ne.s32.totalorder %s249, %s250
    %p264 = scmp.eq.s32.totalorder %s33, 1
    %p265 = por %p263, %p264
    %p267 = scmp.ne.s32.totalorder %s250, %s266
    %p268 = scmp.eq.s32.totalorder %s33, 0
    %p269 = por %p267, %p268
    %s270 = ssub.s32 %s27, %s34
    %p271 = scmp.eq.s32.totalorder %s270, 0
    %s273 = sadd.s32 %s272, 1
    %s274 = scalar_select %p271, %s272, %s273
    %p277 = pneg %p271
    %p278 = scmp.eq.s32.totalorder %s27, 1
    %p279 = por %p277, %p278
    %p280 = scmp.ne.s32.totalorder %s272, %s275
    %p281 = scmp.eq.s32.totalorder %s27, 0
    %p282 = por %p280, %p281
    %p283 = scmp.ne.s32.totalorder %s272, %s275
    %p284 = scmp.eq.s32.totalorder %s32, 1
    %p285 = por %p283, %p284
    %p286 = scmp.ne.s32.totalorder %s275, %s276
    %p287 = scmp.eq.s32.totalorder %s32, 0
    %p288 = por %p286, %p287
    %p289 = scmp.ne.s32.totalorder %s275, %s276
    %p290 = scmp.eq.s32.totalorder %s33, 1
    %p291 = por %p289, %p290
    %p293 = scmp.ne.s32.totalorder %s276, %s292
    %p294 = scmp.eq.s32.totalorder %s33, 0
    %p295 = por %p293, %p294
    %s296 = ssub.s32 %s27, %s34
    %p297 = scmp.eq.s32.totalorder %s296, 0
    %s299 = sadd.s32 %s298, 1
    %s300 = scalar_select %p297, %s298, %s299
    %p303 = pneg %p297
    %p304 = scmp.eq.s32.totalorder %s27, 1
    %p305 = por %p303, %p304
    %p306 = scmp.ne.s32.totalorder %s298, %s301
    %p307 = scmp.eq.s32.totalorder %s27, 0
    %p308 = por %p306, %p307
    %p309 = scmp.ne.s32.totalorder %s298, %s301
    %p310 = scmp.eq.s32.totalorder %s32, 1
    %p311 = por %p309, %p310
    %p312 = scmp.ne.s32.totalorder %s301, %s302
    %p313 = scmp.eq.s32.totalorder %s32, 0
    %p314 = por %p312, %p313
    %p315 = scmp.ne.s32.totalorder %s301, %s302
    %p316 = scmp.eq.s32.totalorder %s33, 1
    %p317 = por %p315, %p316
    %p319 = scmp.ne.s32.totalorder %s302, %s318
    %p320 = scmp.eq.s32.totalorder %s33, 0
    %p321 = por %p319, %p320
    %s322 = ssub.s32 %s27, %s34
    %p323 = scmp.eq.s32.totalorder %s322, 0
    %s325 = sadd.s32 %s324, 1
    %s326 = scalar_select %p323, %s324, %s325
    %p329 = pneg %p323
    %p330 = scmp.eq.s32.totalorder %s27, 1
    %p331 = por %p329, %p330
    %p332 = scmp.ne.s32.totalorder %s324, %s327
    %p333 = scmp.eq.s32.totalorder %s27, 0
    %p334 = por %p332, %p333
    %p335 = scmp.ne.s32.totalorder %s324, %s327
    %p336 = scmp.eq.s32.totalorder %s32, 1
    %p337 = por %p335, %p336
    %p338 = scmp.ne.s32.totalorder %s327, %s328
    %p339 = scmp.eq.s32.totalorder %s32, 0
    %p340 = por %p338, %p339
    %p341 = scmp.ne.s32.totalorder %s327, %s328
    %p342 = scmp.eq.s32.totalorder %s33, 1
    %p343 = por %p341, %p342
    %p345 = scmp.ne.s32.totalorder %s328, %s344
    %p346 = scmp.eq.s32.totalorder %s33, 0
    %p347 = por %p345, %p346
    %s348 = ssub.s32 %s27, %s34
    %p349 = scmp.eq.s32.totalorder %s348, 0
    %s351 = sadd.s32 %s350, 1
    %s352 = scalar_select %p349, %s350, %s351
    %p355 = pneg %p349
    %p356 = scmp.eq.s32.totalorder %s27, 1
    %p357 = por %p355, %p356
    %p358 = scmp.ne.s32.totalorder %s350, %s353
    %p359 = scmp.eq.s32.totalorder %s27, 0
    %p360 = por %p358, %p359
    %p361 = scmp.ne.s32.totalorder %s350, %s353
    %p362 = scmp.eq.s32.totalorder %s32, 1
    %p363 = por %p361, %p362
    %p364 = scmp.ne.s32.totalorder %s353, %s354
    %p365 = scmp.eq.s32.totalorder %s32, 0
    %p366 = por %p364, %p365
    %p367 = scmp.ne.s32.totalorder %s353, %s354
    %p368 = scmp.eq.s32.totalorder %s33, 1
    %p369 = por %p367, %p368
    %p371 = scmp.ne.s32.totalorder %s354, %s370
    %p372 = scmp.eq.s32.totalorder %s33, 0
    %p373 = por %p371, %p372
    %s374 = ssub.s32 %s27, %s34
    %p375 = scmp.eq.s32.totalorder %s374, 0
    %s377 = sadd.s32 %s376, 1
    %s378 = scalar_select %p375, %s376, %s377
    %p381 = pneg %p375
    %p382 = scmp.eq.s32.totalorder %s27, 1
    %p383 = por %p381, %p382
    %p384 = scmp.ne.s32.totalorder %s376, %s379
    %p385 = scmp.eq.s32.totalorder %s27, 0
    %p386 = por %p384, %p385
    %p387 = scmp.ne.s32.totalorder %s376, %s379
    %p388 = scmp.eq.s32.totalorder %s32, 1
    %p389 = por %p387, %p388
    %p390 = scmp.ne.s32.totalorder %s379, %s380
    %p391 = scmp.eq.s32.totalorder %s32, 0
    %p392 = por %p390, %p391
    %p393 = scmp.ne.s32.totalorder %s379, %s380
    %p394 = scmp.eq.s32.totalorder %s33, 1
    %p395 = por %p393, %p394
    %p397 = scmp.ne.s32.totalorder %s380, %s396
    %p398 = scmp.eq.s32.totalorder %s33, 0
    %p399 = por %p397, %p398
    %s400 = ssub.s32 %s27, %s34
    %p401 = scmp.eq.s32.totalorder %s400, 0
    %s403 = sadd.s32 %s402, 1
    %s404 = scalar_select %p401, %s402, %s403
    %p407 = pneg %p401
    %p408 = scmp.eq.s32.totalorder %s27, 1
    %p409 = por %p407, %p408
    %p410 = scmp.ne.s32.totalorder %s402, %s405
    %p411 = scmp.eq.s32.totalorder %s27, 0
    %p412 = por %p410, %p411
    %p413 = scmp.ne.s32.totalorder %s402, %s405
    %p414 = scmp.eq.s32.totalorder %s32, 1
    %p415 = por %p413, %p414
    %p416 = scmp.ne.s32.totalorder %s405, %s406
    %p417 = scmp.eq.s32.totalorder %s32, 0
    %p418 = por %p416, %p417
    %p419 = scmp.ne.s32.totalorder %s405, %s406
    %p420 = scmp.eq.s32.totalorder %s33, 1
    %p421 = por %p419, %p420
    %p423 = scmp.ne.s32.totalorder %s406, %s422
    %p424 = scmp.eq.s32.totalorder %s33, 0
    %p425 = por %p423, %p424
    %s426 = ssub.s32 %s27, %s34
    %p427 = scmp.eq.s32.totalorder %s426, 0
    %s429 = sadd.s32 %s428, 1
    %s430 = scalar_select %p427, %s428, %s429
    %p433 = pneg %p427
    %p434 = scmp.eq.s32.totalorder %s27, 1
    %p435 = por %p433, %p434
    %p436 = scmp.ne.s32.totalorder %s428, %s431
    %p437 = scmp.eq.s32.totalorder %s27, 0
    %p438 = por %p436, %p437
    %p439 = scmp.ne.s32.totalorder %s428, %s431
    %p440 = scmp.eq.s32.totalorder %s32, 1
    %p441 = por %p439, %p440
    %p442 = scmp.ne.s32.totalorder %s431, %s432
    %p443 = scmp.eq.s32.totalorder %s32, 0
    %p444 = por %p442, %p443
    %p445 = scmp.ne.s32.totalorder %s431, %s432
    %p446 = scmp.eq.s32.totalorder %s33, 1
    %p447 = por %p445, %p446
    %p449 = scmp.ne.s32.totalorder %s432, %s448
    %p450 = scmp.eq.s32.totalorder %s33, 0
    %p451 = por %p449, %p450
    %s453 = sadd.s32 %s452, 1
    %p456 = scmp.eq.s32.totalorder %s27, 1
    %p457 = scmp.ne.s32.totalorder %s452, %s454
    %p458 = scmp.eq.s32.totalorder %s27, 0
    %p459 = por %p457, %p458
    %p460 = scmp.ne.s32.totalorder %s452, %s454
    %p461 = scmp.eq.s32.totalorder %s32, 1
    %p462 = por %p460, %p461
    %p463 = scmp.ne.s32.totalorder %s454, %s455
    %p464 = scmp.eq.s32.totalorder %s32, 0
    %p465 = por %p463, %p464
    %p466 = scmp.ne.s32.totalorder %s454, %s455
    %p467 = scmp.eq.s32.totalorder %s33, 1
    %p468 = por %p466, %p467
    %p470 = scmp.ne.s32.totalorder %s455, %s469
    %p471 = scmp.eq.s32.totalorder %s33, 0
    %p472 = por %p470, %p471
    %s474 = sadd.s32 %s473, 1
    %p477 = scmp.eq.s32.totalorder %s27, 1
    %p478 = scmp.ne.s32.totalorder %s473, %s475
    %p479 = scmp.eq.s32.totalorder %s27, 0
    %p480 = por %p478, %p479
    %p481 = scmp.ne.s32.totalorder %s473, %s475
    %p482 = scmp.eq.s32.totalorder %s32, 1
    %p483 = por %p481, %p482
    %p484 = scmp.ne.s32.totalorder %s475, %s476
    %p485 = scmp.eq.s32.totalorder %s32, 0
    %p486 = por %p484, %p485
    %p487 = scmp.ne.s32.totalorder %s475, %s476
    %p488 = scmp.eq.s32.totalorder %s33, 1
    %p489 = por %p487, %p488
    %p491 = scmp.ne.s32.totalorder %s476, %s490
    %p492 = scmp.eq.s32.totalorder %s33, 0
    %p493 = por %p491, %p492
    %s495 = sadd.s32 %s494, 1
    %p498 = scmp.eq.s32.totalorder %s27, 1
    %p499 = scmp.ne.s32.totalorder %s494, %s496
    %p500 = scmp.eq.s32.totalorder %s27, 0
    %p501 = por %p499, %p500
    %p502 = scmp.ne.s32.totalorder %s494, %s496
    %p503 = scmp.eq.s32.totalorder %s32, 1
    %p504 = por %p502, %p503
    %p505 = scmp.ne.s32.totalorder %s496, %s497
    %p506 = scmp.eq.s32.totalorder %s32, 0
    %p507 = por %p505, %p506
    %p508 = scmp.ne.s32.totalorder %s496, %s497
    %p509 = scmp.eq.s32.totalorder %s33, 1
    %p510 = por %p508, %p509
    %p512 = scmp.ne.s32.totalorder %s497, %s511
    %p513 = scmp.eq.s32.totalorder %s33, 0
    %p514 = por %p512, %p513
    %s516 = sadd.s32 %s515, 1
    %p519 = scmp.eq.s32.totalorder %s27, 1
    %p520 = scmp.ne.s32.totalorder %s515, %s517
    %p521 = scmp.eq.s32.totalorder %s27, 0
    %p522 = por %p520, %p521
    %p523 = scmp.ne.s32.totalorder %s515, %s517
    %p524 = scmp.eq.s32.totalorder %s32, 1
    %p525 = por %p523, %p524
    %p526 = scmp.ne.s32.totalorder %s517, %s518
    %p527 = scmp.eq.s32.totalorder %s32, 0
    %p528 = por %p526, %p527
    %p529 = scmp.ne.s32.totalorder %s517, %s518
    %p530 = scmp.eq.s32.totalorder %s33, 1
    %p531 = por %p529, %p530
    %p533 = scmp.ne.s32.totalorder %s518, %s532
    %p534 = scmp.eq.s32.totalorder %s33, 0
    %p535 = por %p533, %p534
    %s537 = sadd.s32 %s536, 1
    %p540 = scmp.eq.s32.totalorder %s27, 1
    %p541 = scmp.ne.s32.totalorder %s536, %s538
    %p542 = scmp.eq.s32.totalorder %s27, 0
    %p543 = por %p541, %p542
    %p544 = scmp.ne.s32.totalorder %s536, %s538
    %p545 = scmp.eq.s32.totalorder %s32, 1
    %p546 = por %p544, %p545
    %p547 = scmp.ne.s32.totalorder %s538, %s539
    %p548 = scmp.eq.s32.totalorder %s32, 0
    %p549 = por %p547, %p548
    %p550 = scmp.ne.s32.totalorder %s538, %s539
    %p551 = scmp.eq.s32.totalorder %s33, 1
    %p552 = por %p550, %p551
    %p554 = scmp.ne.s32.totalorder %s539, %s553
    %p555 = scmp.eq.s32.totalorder %s33, 0
    %p556 = por %p554, %p555
    %p557 = scmp.le.s32.totalorder 1, %s27
    %p558 = scmp.lt.s32.totalorder %s27, 3
    %p559 = pnand %p557, %p558
    %p560 = pneg %p559
    // Predicated region
    $region9: #{encoder_decoder_forward.2} parent=5 // pred_check
      _
    $region10: #{encoder_decoder_forward.2} parent=5 // pred_check_branch
      %562 = sbr.rel (%p559) target = $region12
    $region11: #{encoder_decoder_forward.2} parent=5 // pred_region
      %s563 = ssub.s32 %s27, 1
      // Predicated region
      $region13: #{encoder_decoder_forward.2} parent=11 // pred_check
        %p564 = pneg %p48
      $region14: #{encoder_decoder_forward.2} parent=11 // pred_check_branch
        %566 = sbr.rel (%p564) target = $region16
      $region15: #{encoder_decoder_forward.2} parent=11 // pred_region
        _
      $region16: #{encoder_decoder_forward.2} parent=11 // pred_fallthru
        _
      // Predicated region
      $region17: #{encoder_decoder_forward.2} parent=11 // pred_check
        %p567 = pneg %p69
      $region18: #{encoder_decoder_forward.2} parent=11 // pred_check_branch
        %569 = sbr.rel (%p567) target = $region20
      $region19: #{encoder_decoder_forward.2} parent=11 // pred_region
        _
      $region20: #{encoder_decoder_forward.2} parent=11 // pred_fallthru
        _
      // Predicated region
      $region21: #{encoder_decoder_forward.2} parent=11 // pred_check
        %p570 = pneg %p90
      $region22: #{encoder_decoder_forward.2} parent=11 // pred_check_branch
        %572 = sbr.rel (%p570) target = $region24
      $region23: #{encoder_decoder_forward.2} parent=11 // pred_region
        _
      $region24: #{encoder_decoder_forward.2} parent=11 // pred_fallthru
        _
      // Predicated region
      $region25: #{encoder_decoder_forward.2} parent=11 // pred_check
        %p573 = pneg %p111
      $region26: #{encoder_decoder_forward.2} parent=11 // pred_check_branch
        %575 = sbr.rel (%p573) target = $region28
      $region27: #{encoder_decoder_forward.2} parent=11 // pred_region
        _
      $region28: #{encoder_decoder_forward.2} parent=11 // pred_fallthru
        _
      // Predicated region
      $region29: #{encoder_decoder_forward.2} parent=11 // pred_check
        %p576 = pneg %p132
      $region30: #{encoder_decoder_forward.2} parent=11 // pred_check_branch
        %578 = sbr.rel (%p576) target = $region32
      $region31: #{encoder_decoder_forward.2} parent=11 // pred_region
        _
      $region32: #{encoder_decoder_forward.2} parent=11 // pred_fallthru
        _
      // Predicated region
      $region33: #{encoder_decoder_forward.2} parent=11 // pred_check
        %p579 = pneg %p465
      $region34: #{encoder_decoder_forward.2} parent=11 // pred_check_branch
        %581 = sbr.rel (%p579) target = $region36
      $region35: #{encoder_decoder_forward.2} parent=11 // pred_region
        _
      $region36: #{encoder_decoder_forward.2} parent=11 // pred_fallthru
        _
      // Predicated region
      $region37: #{encoder_decoder_forward.2} parent=11 // pred_check
        %p582 = pneg %p486
      $region38: #{encoder_decoder_forward.2} parent=11 // pred_check_branch
        %584 = sbr.rel (%p582) target = $region40
      $region39: #{encoder_decoder_forward.2} parent=11 // pred_region
        _
      $region40: #{encoder_decoder_forward.2} parent=11 // pred_fallthru
        _
      // Predicated region
      $region41: #{encoder_decoder_forward.2} parent=11 // pred_check
        %p585 = pneg %p507
      $region42: #{encoder_decoder_forward.2} parent=11 // pred_check_branch
        %587 = sbr.rel (%p585) target = $region44
      $region43: #{encoder_decoder_forward.2} parent=11 // pred_region
        _
      $region44: #{encoder_decoder_forward.2} parent=11 // pred_fallthru
        _
      // Predicated region
      $region45: #{encoder_decoder_forward.2} parent=11 // pred_check
        %p588 = pneg %p528
      $region46: #{encoder_decoder_forward.2} parent=11 // pred_check_branch
        %590 = sbr.rel (%p588) target = $region48
      $region47: #{encoder_decoder_forward.2} parent=11 // pred_region
        _
      $region48: #{encoder_decoder_forward.2} parent=11 // pred_fallthru
        _
    $region12: #{encoder_decoder_forward.2} parent=5 // pred_fallthru
      _
    %p591 = scmp.lt.s32.totalorder %s27, 2
    // Predicated region
    $region49: #{encoder_decoder_forward.2} parent=5 // pred_check
      %p592 = pneg %p591
    $region50: #{encoder_decoder_forward.2} parent=5 // pred_check_branch
      %594 = sbr.rel (%p592) target = $region52
    $region51: #{encoder_decoder_forward.2} parent=5 // pred_region
      // Predicated region
      $region53: #{encoder_decoder_forward.2} parent=51 // pred_check
        %p595 = pneg %p152
      $region54: #{encoder_decoder_forward.2} parent=51 // pred_check_branch
        %597 = sbr.rel (%p595) target = $region56
      $region55: #{encoder_decoder_forward.2} parent=51 // pred_region
        %p598 = scmp.lt.s32.totalorder %s27, 1
        %s599 = scalar_select %p598, %s27, 1
        %s600 = scalar_lea.vmem %s5, %s599
      $region56: #{encoder_decoder_forward.2} parent=51 // pred_fallthru
        _
      // Predicated region
      $region57: #{encoder_decoder_forward.2} parent=51 // pred_check
        %p601 = pneg %p178
      $region58: #{encoder_decoder_forward.2} parent=51 // pred_check_branch
        %603 = sbr.rel (%p601) target = $region60
      $region59: #{encoder_decoder_forward.2} parent=51 // pred_region
        %p604 = scmp.lt.s32.totalorder %s27, 1
        %s605 = scalar_select %p604, %s27, 1
        %s606 = scalar_lea.vmem %s6, %s605
      $region60: #{encoder_decoder_forward.2} parent=51 // pred_fallthru
        _
      // Predicated region
      $region61: #{encoder_decoder_forward.2} parent=51 // pred_check
        %p607 = pneg %p204
      $region62: #{encoder_decoder_forward.2} parent=51 // pred_check_branch
        %609 = sbr.rel (%p607) target = $region64
      $region63: #{encoder_decoder_forward.2} parent=51 // pred_region
        %p610 = scmp.lt.s32.totalorder %s27, 1
        %s611 = scalar_select %p610, %s27, 1
        %s612 = smul.addr %s611, 4
        %s613 = smul.addr %s612, 4
        %s614 = scalar_lea.vmem %s7, %s613
      $region64: #{encoder_decoder_forward.2} parent=51 // pred_fallthru
        _
      // Predicated region
      $region65: #{encoder_decoder_forward.2} parent=51 // pred_check
        %p615 = pneg %p230
      $region66: #{encoder_decoder_forward.2} parent=51 // pred_check_branch
        %617 = sbr.rel (%p615) target = $region68
      $region67: #{encoder_decoder_forward.2} parent=51 // pred_region
        %p618 = scmp.lt.s32.totalorder %s27, 1
        %s619 = scalar_select %p618, %s27, 1
        %s620 = scalar_lea.vmem %s8, %s619
      $region68: #{encoder_decoder_forward.2} parent=51 // pred_fallthru
        _
      // Predicated region
      $region69: #{encoder_decoder_forward.2} parent=51 // pred_check
        %p621 = pneg %p256
      $region70: #{encoder_decoder_forward.2} parent=51 // pred_check_branch
        %623 = sbr.rel (%p621) target = $region72
      $region71: #{encoder_decoder_forward.2} parent=51 // pred_region
        %p624 = scmp.lt.s32.totalorder %s27, 1
        %s625 = scalar_select %p624, %s27, 1
        %s626 = smul.addr %s625, 4
        %s627 = smul.addr %s626, 4
        %s628 = scalar_lea.vmem %s9, %s627
      $region72: #{encoder_decoder_forward.2} parent=51 // pred_fallthru
        _
      // Predicated region
      $region73: #{encoder_decoder_forward.2} parent=51 // pred_check
        %p629 = pneg %p282
      $region74: #{encoder_decoder_forward.2} parent=51 // pred_check_branch
        %631 = sbr.rel (%p629) target = $region76
      $region75: #{encoder_decoder_forward.2} parent=51 // pred_region
        %p632 = scmp.lt.s32.totalorder %s27, 1
        %s633 = scalar_select %p632, %s27, 1
        %s634 = scalar_lea.vmem %s10, %s633
      $region76: #{encoder_decoder_forward.2} parent=51 // pred_fallthru
        _
      // Predicated region
      $region77: #{encoder_decoder_forward.2} parent=51 // pred_check
        %p635 = pneg %p308
      $region78: #{encoder_decoder_forward.2} parent=51 // pred_check_branch
        %637 = sbr.rel (%p635) target = $region80
      $region79: #{encoder_decoder_forward.2} parent=51 // pred_region
        %p638 = scmp.lt.s32.totalorder %s27, 1
        %s639 = scalar_select %p638, %s27, 1
        %s640 = scalar_lea.vmem %s11, %s639
      $region80: #{encoder_decoder_forward.2} parent=51 // pred_fallthru
        _
      // Predicated region
      $region81: #{encoder_decoder_forward.2} parent=51 // pred_check
        %p641 = pneg %p334
      $region82: #{encoder_decoder_forward.2} parent=51 // pred_check_branch
        %643 = sbr.rel (%p641) target = $region84
      $region83: #{encoder_decoder_forward.2} parent=51 // pred_region
        %p644 = scmp.lt.s32.totalorder %s27, 1
        %s645 = scalar_select %p644, %s27, 1
        %s646 = scalar_lea.vmem %s12, %s645
      $region84: #{encoder_decoder_forward.2} parent=51 // pred_fallthru
        _
      // Predicated region
      $region85: #{encoder_decoder_forward.2} parent=51 // pred_check
        %p647 = pneg %p360
      $region86: #{encoder_decoder_forward.2} parent=51 // pred_check_branch
        %649 = sbr.rel (%p647) target = $region88
      $region87: #{encoder_decoder_forward.2} parent=51 // pred_region
        %p650 = scmp.lt.s32.totalorder %s27, 1
        %s651 = scalar_select %p650, %s27, 1
        %s652 = smul.addr %s651, 4
        %s653 = smul.addr %s652, 4
        %s654 = scalar_lea.vmem %s13, %s653
      $region88: #{encoder_decoder_forward.2} parent=51 // pred_fallthru
        _
      // Predicated region
      $region89: #{encoder_decoder_forward.2} parent=51 // pred_check
        %p655 = pneg %p386
      $region90: #{encoder_decoder_forward.2} parent=51 // pred_check_branch
        %657 = sbr.rel (%p655) target = $region92
      $region91: #{encoder_decoder_forward.2} parent=51 // pred_region
        %p658 = scmp.lt.s32.totalorder %s27, 1
        %s659 = scalar_select %p658, %s27, 1
        %s660 = scalar_lea.vmem %s14, %s659
      $region92: #{encoder_decoder_forward.2} parent=51 // pred_fallthru
        _
      // Predicated region
      $region93: #{encoder_decoder_forward.2} parent=51 // pred_check
        %p661 = pneg %p412
      $region94: #{encoder_decoder_forward.2} parent=51 // pred_check_branch
        %663 = sbr.rel (%p661) target = $region96
      $region95: #{encoder_decoder_forward.2} parent=51 // pred_region
        %p664 = scmp.lt.s32.totalorder %s27, 1
        %s665 = scalar_select %p664, %s27, 1
        %s666 = smul.addr %s665, 8
        %s667 = smul.addr %s666, 4
        %s668 = scalar_lea.vmem %s15, %s667
      $region96: #{encoder_decoder_forward.2} parent=51 // pred_fallthru
        _
      // Predicated region
      $region97: #{encoder_decoder_forward.2} parent=51 // pred_check
        %p669 = pneg %p438
      $region98: #{encoder_decoder_forward.2} parent=51 // pred_check_branch
        %671 = sbr.rel (%p669) target = $region100
      $region99: #{encoder_decoder_forward.2} parent=51 // pred_region
        %p672 = scmp.lt.s32.totalorder %s27, 1
        %s673 = scalar_select %p672, %s27, 1
        %s674 = scalar_lea.vmem %s16, %s673
      $region100: #{encoder_decoder_forward.2} parent=51 // pred_fallthru
        _
    $region52: #{encoder_decoder_forward.2} parent=5 // pred_fallthru
      _
    %p675 = scmp.le.s32.totalorder 1, %s27
    %p676 = scmp.lt.s32.totalorder %s27, 3
    %p677 = pnand %p675, %p676
    %p678 = pneg %p677
    // Predicated region
    $region101: #{encoder_decoder_forward.2} parent=5 // pred_check
      _
    $region102: #{encoder_decoder_forward.2} parent=5 // pred_check_branch
      %680 = sbr.rel (%p677) target = $region104
    $region103: #{encoder_decoder_forward.2} parent=5 // pred_region
      %s681 = ssub.s32 %s27, 1
      %p682 = pneg %p48
      %p683 = pneg %p45
      %p684 = pneg %p69
      %p685 = pneg %p66
      %p686 = pneg %p90
      %p687 = pneg %p87
      %p688 = pneg %p111
      %p689 = pneg %p108
      %p690 = pneg %p132
      %p691 = pneg %p129
      %p692 = scmp.lt.s32.totalorder %s32, 1
      %s693 = scalar_select %p692, %s32, 1
      %s694 = scalar_lea.vmem %s5, %s693
      %p695 = pneg %p158
      %p696 = pneg %p155
      %p697 = scmp.lt.s32.totalorder %s32, 1
      %s698 = scalar_select %p697, %s32, 1
      %s699 = scalar_lea.vmem %s6, %s698
      %p700 = pneg %p184
      %p701 = pneg %p181
      %p702 = scmp.lt.s32.totalorder %s32, 1
      %s703 = scalar_select %p702, %s32, 1
      %s704 = smul.addr %s703, 4
      %s705 = smul.addr %s704, 4
      %s706 = scalar_lea.vmem %s7, %s705
      %p707 = pneg %p210
      %p708 = pneg %p207
      %p709 = scmp.lt.s32.totalorder %s32, 1
      %s710 = scalar_select %p709, %s32, 1
      %s711 = scalar_lea.vmem %s8, %s710
      %p712 = pneg %p236
      %p713 = pneg %p233
      %p714 = scmp.lt.s32.totalorder %s32, 1
      %s715 = scalar_select %p714, %s32, 1
      %s716 = smul.addr %s715, 4
      %s717 = smul.addr %s716, 4
      %s718 = scalar_lea.vmem %s9, %s717
      %p719 = pneg %p262
      %p720 = pneg %p259
      %p721 = scmp.lt.s32.totalorder %s32, 1
      %s722 = scalar_select %p721, %s32, 1
      %s723 = scalar_lea.vmem %s10, %s722
      %p724 = pneg %p288
      %p725 = pneg %p285
      %p726 = scmp.lt.s32.totalorder %s32, 1
      %s727 = scalar_select %p726, %s32, 1
      %s728 = scalar_lea.vmem %s11, %s727
      %p729 = pneg %p314
      %p730 = pneg %p311
      %p731 = scmp.lt.s32.totalorder %s32, 1
      %s732 = scalar_select %p731, %s32, 1
      %s733 = scalar_lea.vmem %s12, %s732
      %p734 = pneg %p340
      %p735 = pneg %p337
      %p736 = scmp.lt.s32.totalorder %s32, 1
      %s737 = scalar_select %p736, %s32, 1
      %s738 = smul.addr %s737, 4
      %s739 = smul.addr %s738, 4
      %s740 = scalar_lea.vmem %s13, %s739
      %p741 = pneg %p366
      %p742 = pneg %p363
      %p743 = scmp.lt.s32.totalorder %s32, 1
      %s744 = scalar_select %p743, %s32, 1
      %s745 = scalar_lea.vmem %s14, %s744
      %p746 = pneg %p392
      %p747 = pneg %p389
      %p748 = scmp.lt.s32.totalorder %s32, 1
      %s749 = scalar_select %p748, %s32, 1
      %s750 = smul.addr %s749, 8
      %s751 = smul.addr %s750, 4
      %s752 = scalar_lea.vmem %s15, %s751
      %p753 = pneg %p418
      %p754 = pneg %p415
      %p755 = scmp.lt.s32.totalorder %s32, 1
      %s756 = scalar_select %p755, %s32, 1
      %s757 = scalar_lea.vmem %s16, %s756
      %p758 = pneg %p444
      %p759 = pneg %p441
      %p760 = pneg %p465
      %p761 = pneg %p462
      %p762 = pneg %p486
      %p763 = pneg %p483
      %p764 = pneg %p507
      %p765 = pneg %p504
      %p766 = pneg %p528
      %p767 = pneg %p525
      %p768 = pneg %p549
      %p769 = pneg %p546
      %p770 = scmp.lt.s32.totalorder %s32, 1
      %s771 = scalar_select %p770, %s32, 1
      %s772 = scalar_lea.vmem %s5, %s771
      %p773 = scmp.lt.s32.totalorder %s32, 1
      %s774 = scalar_select %p773, %s32, 1
      %s775 = scalar_lea.vmem %s6, %s774
      %p776 = scmp.lt.s32.totalorder %s32, 1
      %s777 = scalar_select %p776, %s32, 1
      %s778 = smul.addr %s777, 4
      %s779 = smul.addr %s778, 4
      %s780 = scalar_lea.vmem %s7, %s779
      %p781 = scmp.lt.s32.totalorder %s32, 1
      %s782 = scalar_select %p781, %s32, 1
      %s783 = scalar_lea.vmem %s8, %s782
      %p784 = scmp.lt.s32.totalorder %s32, 1
      %s785 = scalar_select %p784, %s32, 1
      %s786 = smul.addr %s785, 4
      %s787 = smul.addr %s786, 4
      %s788 = scalar_lea.vmem %s9, %s787
      %p789 = scmp.lt.s32.totalorder %s32, 1
      %s790 = scalar_select %p789, %s32, 1
      %s791 = scalar_lea.vmem %s10, %s790
      %p792 = scmp.lt.s32.totalorder %s32, 1
      %s793 = scalar_select %p792, %s32, 1
      %s794 = scalar_lea.vmem %s11, %s793
      %p795 = scmp.lt.s32.totalorder %s32, 1
      %s796 = scalar_select %p795, %s32, 1
      %s797 = scalar_lea.vmem %s12, %s796
      %p798 = scmp.lt.s32.totalorder %s32, 1
      %s799 = scalar_select %p798, %s32, 1
      %s800 = smul.addr %s799, 4
      %s801 = smul.addr %s800, 4
      %s802 = scalar_lea.vmem %s13, %s801
      %p803 = scmp.lt.s32.totalorder %s32, 1
      %s804 = scalar_select %p803, %s32, 1
      %s805 = scalar_lea.vmem %s14, %s804
      %p806 = scmp.lt.s32.totalorder %s32, 1
      %s807 = scalar_select %p806, %s32, 1
      %s808 = smul.addr %s807, 8
      %s809 = smul.addr %s808, 4
      %s810 = scalar_lea.vmem %s15, %s809
      %p811 = scmp.lt.s32.totalorder %s32, 1
      %s812 = scalar_select %p811, %s32, 1
      %s813 = scalar_lea.vmem %s16, %s812
      %p815 = scmp.eq.s32.totalorder %s32, 0
      // Predicated region
      $region105: #{encoder_decoder_forward.2} parent=103 // pred_check
        %p816 = pneg %p815
      $region106: #{encoder_decoder_forward.2} parent=103 // pred_check_branch
        %818 = sbr.rel (%p816) target = $region108
      $region107: #{encoder_decoder_forward.2} parent=103 // pred_region
        %v819 = vld [vmem:[%s0] sm:$0xff]
        %v820 = vld [vmem:[%s1] sm:$0xf]
        %v821 = vld [vmem:[%s1 + $0x4] sm:$0xf]
        %v822 = vld [vmem:[%s1 + $0x8] sm:$0xf]
        %v823 = vld [vmem:[%s1 + $0xc] sm:$0xf]
        %v824 = vld [vmem:[%s1 + $0x10] sm:$0xf]
        %v825 = vld [vmem:[%s1 + $0x14] sm:$0xf]
        %v826 = vld [vmem:[%s1 + $0x18] sm:$0xf]
        %v827 = vld [vmem:[%s1 + $0x1c] sm:$0xf]
        %v828 = vld [vmem:[%s1 + $0x20] sm:$0xf]
        %v829 = vld [vmem:[%s1 + $0x24] sm:$0xf]
        %v830 = vld [vmem:[%s1 + $0x28] sm:$0xf]
        %v831 = vld [vmem:[%s1 + $0x2c] sm:$0xf]
        %v832 = vld [vmem:[%s1 + $0x30] sm:$0xf]
        %v833 = vld [vmem:[%s1 + $0x34] sm:$0xf]
        %v834 = vld [vmem:[%s1 + $0x38] sm:$0xf]
        %v835 = vld [vmem:[%s1 + $0x3c] sm:$0xf]
        %v836 = vld [vmem:[%s1 + $0x40] sm:$0xf]
        %v837 = vld [vmem:[%s1 + $0x44] sm:$0xf]
        %v838 = vld [vmem:[%s1 + $0x48] sm:$0xf]
        %v839 = vld [vmem:[%s1 + $0x4c] sm:$0xf]
        %v840 = vld [vmem:[%s1 + $0x50] sm:$0xf]
        %v841 = vld [vmem:[%s1 + $0x54] sm:$0xf]
        %v842 = vld [vmem:[%s1 + $0x58] sm:$0xf]
        %v843 = vld [vmem:[%s1 + $0x5c] sm:$0xf]
        %v844 = vld [vmem:[%s2] sm:$0x1]
        %v846 = vlaneseq
        %v847 = vshrl.u32 %v846, 7
        %v848 = vsub.s32 0, %v847
        %v849 = vrot.slane %v844, %v848
        %v852 = vunpack.c.l.b16 %v819
        %v853 = vunpack.c.h.b16 %v819
        %v854 = vpack.c.b16 %v852, %v852
        %v855 = vpack.c.b16 %v853, %v853
        %v881 = vunpack.c.l.b16 %v820
        %v882 = vunpack.c.l.b16 %v821
        %v883 = vunpack.c.l.b16 %v822
        %v884 = vunpack.c.l.b16 %v823
        %v885 = vunpack.c.l.b16 %v824
        %v886 = vunpack.c.l.b16 %v825
        %v887 = vunpack.c.l.b16 %v826
        %v888 = vunpack.c.l.b16 %v827
        %v889 = vunpack.c.l.b16 %v828
        %v890 = vunpack.c.l.b16 %v829
        %v891 = vunpack.c.l.b16 %v830
        %v892 = vunpack.c.l.b16 %v831
        %v893 = vunpack.c.l.b16 %v832
        %v894 = vunpack.c.l.b16 %v833
        %v895 = vunpack.c.l.b16 %v834
        %v896 = vunpack.c.l.b16 %v835
        %v897 = vunpack.c.l.b16 %v836
        %v898 = vunpack.c.l.b16 %v837
        %v899 = vunpack.c.l.b16 %v838
        %v900 = vunpack.c.l.b16 %v839
        %v901 = vunpack.c.l.b16 %v840
        %v902 = vunpack.c.l.b16 %v841
        %v903 = vunpack.c.l.b16 %v842
        %v904 = vunpack.c.l.b16 %v843
        %v905 = vpack.c.b16 %v882, %v881
        %v906 = vpack.c.b16 %v884, %v883
        %v907 = vpack.c.b16 %v886, %v885
        %v908 = vpack.c.b16 %v888, %v887
        %v909 = vpack.c.b16 %v890, %v889
        %v910 = vpack.c.b16 %v892, %v891
        %v911 = vpack.c.b16 %v894, %v893
        %v912 = vpack.c.b16 %v896, %v895
        %v913 = vpack.c.b16 %v898, %v897
        %v914 = vpack.c.b16 %v900, %v899
        %v915 = vpack.c.b16 %v902, %v901
        %v916 = vpack.c.b16 %v904, %v903
        %vm929 = vcmask 523264
        %v931 = vsel %vm929, %v855, 0
        %933 = vmatprep.subr.bf16.mxu0 0
        %934 = vmatpush1.bf16.msra.mxu0 %v912
        %935 = vmatprep.subr.bf16.mxu0 0
        %936 = vmatpush1.bf16.msra.mxu0 %v911
        %937 = vmatprep.subr.bf16.mxu0 0
        %938 = vmatpush1.bf16.msra.mxu0 %v910
        %939 = vmatprep.subr.bf16.mxu0 0
        %940 = vmatpush1.bf16.msra.mxu0 %v909
        %941 = vmatprep.subr.bf16.mxu0 0
        %942 = vmatpush1.bf16.msra.mxu0 %v908
        %943 = vmatprep.subr.bf16.mxu0 0
        %944 = vmatpush1.bf16.msra.mxu0 %v907
        %945 = vmatprep.subr.bf16.mxu0 0
        %946 = vmatpush1.bf16.msra.mxu0 %v906
        %947 = vmatprep.subr.bf16.mxu0 0
        %948 = vmatpush1.bf16.msra.mxu0 %v905
        %949 = vmatprep.subr.bf16.mxu0 0
        %950 = vmatpush2.bf16.msra.mxu0 0
        %951 = vmatprep.subr.bf16.mxu0 0
        %952 = vmatpush2.bf16.msra.mxu0 0
        %953 = vmatprep.subr.bf16.mxu0 0
        %954 = vmatpush2.bf16.msra.mxu0 0
        %955 = vmatprep.subr.bf16.mxu0 0
        %956 = vmatpush2.bf16.msra.mxu0 0
        %957 = vmatprep.subr.bf16.mxu0 0
        %958 = vmatpush2.bf16.msra.mxu0 %v916
        %959 = vmatprep.subr.bf16.mxu0 0
        %960 = vmatpush2.bf16.msra.mxu0 %v915
        %961 = vmatprep.subr.bf16.mxu0 0
        %962 = vmatpush2.bf16.msra.mxu0 %v914
        %963 = vmatprep.subr.bf16.mxu0 0
        %964 = vmatpush2.bf16.msra.mxu0 %v913
        %965 = vmatprep.mubr.bf16.mxu0 %v931
        %966 = vmatmul.mubr.bf16.gmra.mxu0 %v854
        %v967 = vpop.f32.mrf.mxu0
        %v968 = vadd.f32 %v849, %v967
        %v969 = vpop.f32.mrf.mxu0
        %v970 = vpop.f32.mrf.mxu0
        %v971 = vpop.f32.mrf.mxu0
        %972 = vdwg.mxu0
        %v973 = vld [vmem:[%s3] sm:$0x1]
        %v974 = vld [vmem:[%s4] sm:$0xff]
        %v976 = vrot.slane %v968, 7
        %vm978 = vcmask 1040384
        %v979 = vsel %vm978, %v973, %v976
        %vm980 = vcmask 1044480
        %v981 = vsel %vm980, %v979, 0.0
        %v982 = vadd.f32 %v981, %v974
        %vm983 = vcmask 261120
        %984 = vst.msk [vmem:[#allocation2] sm:$0xff] %vm983, %v982
        %v985 = vrot.slane %v968, 3
        %v987 = vsel %vm978, %v973, %v985
        %v988 = vsel %vm980, %v987, 0.0
        %v989 = vadd.f32 %v988, %v974
        %990 = vst.msk [vmem:[#allocation2 + $0x8] sm:$0xff] %vm983, %v989
        %v991 = vlaneseq
        %v992 = vand.u32 %v991, 127
        %vm993 = vcmp.lt.s32.totalorder %v992, 5
        %v994 = vsel %vm993, 0.0, -1e+09
        %vm995 = vcmask 64512
        %996 = vst.msk [vmem:[#allocation3] sm:$0xff] %vm995, %v994
      $region108: #{encoder_decoder_forward.2} parent=103 // pred_fallthru
        _
      %v997 = vld [vmem:[#allocation3] sm:$0xff]
      %v998 = vld [vmem:[#allocation2] sm:$0xff]
      %v999 = vld [vmem:[#allocation2 + $0x8] sm:$0xff]
      %v1000 = vld [vmem:[%s788] sm:$0xf]
      %v1001 = vld [vmem:[%s788 + $0x4] sm:$0xf]
      %v1002 = vld [vmem:[%s788 + $0x8] sm:$0xf]
      %v1003 = vld [vmem:[%s788 + $0xc] sm:$0xf]
      %v1004 = vld [vmem:[%s772] sm:$0x1]
      %v1005 = vld [vmem:[%s775] sm:$0x1]
      %vm1006 = vcmask 261120
      %v1007 = vsel %vm1006, %v998, 0.0
      %1008 = vadd.xlane.f32.xlu0 %v1007
      %v1009 = vpop.xlane.xlu0 %1008
      %v1010 = vsel %vm1006, %v999, 0.0
      %1011 = vadd.xlane.f32.xlu0 %v1010
      %v1012 = vpop.xlane.xlu0 %1011
      %v1013 = vrcp.pop 32.0
      %v1014 = vmul.f32 %v1009, %v1013
      %v1015 = vmul.f32 %v1012, %v1013
      %v1016 = vsub.f32 %v998, %v1014
      %v1017 = vsub.f32 %v999, %v1015
      %v1018 = vmul.f32 %v1016, %v1016
      %v1019 = vmul.f32 %v1017, %v1017
      %v1020 = vsel %vm1006, %v1018, 0.0
      %1021 = vadd.xlane.f32.xlu0 %v1020
      %v1022 = vpop.xlane.xlu0 %1021
      %v1023 = vsel %vm1006, %v1019, 0.0
      %1024 = vadd.xlane.f32.xlu0 %v1023
      %v1025 = vpop.xlane.xlu0 %1024
      %v1026 = vmul.f32 %v1022, %v1013
      %v1027 = vmul.f32 %v1025, %v1013
      %v1028 = vadd.f32 %v1026, 1e-12
      %v1029 = vadd.f32 %v1027, 1e-12
      %v1030 = vrsqrt.pop %v1028
      %v1031 = vrsqrt.pop %v1029
      %v1032 = vmul.f32 %v1016, %v1030
      %v1033 = vmul.f32 %v1017, %v1031
      %v1035 = vlaneseq
      %v1036 = vshrl.u32 %v1035, 7
      %v1037 = vsub.s32 0, %v1036
      %v1038 = vrot.slane %v1004, %v1037
      %v1040 = vmul.f32 %v1032, %v1038
      %v1041 = vmul.f32 %v1033, %v1038
      %v1043 = vlaneseq
      %v1044 = vshrl.u32 %v1043, 7
      %v1045 = vsub.s32 0, %v1044
      %v1046 = vrot.slane %v1005, %v1045
      %v1048 = vadd.f32 %v1040, %v1046
      %v1049 = vadd.f32 %v1041, %v1046
      %v1050 = vpack.c.bf16 %v1049, %v1048
      %v1051 = vld [vmem:[%s780] sm:$0xf]
      %v1052 = vld [vmem:[%s780 + $0x4] sm:$0xf]
      %v1053 = vld [vmem:[%s780 + $0x8] sm:$0xf]
      %v1054 = vld [vmem:[%s780 + $0xc] sm:$0xf]
      %v1055 = vld [vmem:[%s783] sm:$0x1]
      %v1057 = vlaneseq
      %v1058 = vshrl.u32 %v1057, 7
      %v1059 = vsub.s32 0, %v1058
      %v1060 = vrot.slane %v1055, %v1059
      %v1066 = vunpack.c.l.b16 %v1051
      %v1067 = vunpack.c.l.b16 %v1052
      %v1068 = vunpack.c.l.b16 %v1053
      %v1069 = vunpack.c.l.b16 %v1054
      %v1070 = vpack.c.b16 %v1067, %v1066
      %v1071 = vpack.c.b16 %v1069, %v1068
      %v1075 = vsel %vm1006, %v1050, 0
      %1077 = vmatprep.subr.bf16.mxu0 0
      %1078 = vmatpush1.bf16.msra.mxu0 0
      %1079 = vmatprep.subr.bf16.mxu0 0
      %1080 = vmatpush1.bf16.msra.mxu0 0
      %1081 = vmatprep.subr.bf16.mxu0 0
      %1082 = vmatpush1.bf16.msra.mxu0 0
      %1083 = vmatprep.subr.bf16.mxu0 0
      %1084 = vmatpush1.bf16.msra.mxu0 0
      %1085 = vmatprep.subr.bf16.mxu0 0
      %1086 = vmatpush1.bf16.msra.mxu0 0
      %1087 = vmatprep.subr.bf16.mxu0 0
      %1088 = vmatpush1.bf16.msra.mxu0 0
      %1089 = vmatprep.subr.bf16.mxu0 0
      %1090 = vmatpush1.bf16.msra.mxu0 %v1071
      %1091 = vmatprep.subr.bf16.mxu0 0
      %1092 = vmatpush1.bf16.msra.mxu0 %v1070
      %1093 = vmatprep.subr.bf16.mxu0 0
      %1094 = vmatpush2.bf16.msra.mxu0 0
      %1095 = vmatprep.subr.bf16.mxu0 0
      %1096 = vmatpush2.bf16.msra.mxu0 0
      %1097 = vmatprep.subr.bf16.mxu0 0
      %1098 = vmatpush2.bf16.msra.mxu0 0
      %1099 = vmatprep.subr.bf16.mxu0 0
      %1100 = vmatpush2.bf16.msra.mxu0 0
      %1101 = vmatprep.subr.bf16.mxu0 0
      %1102 = vmatpush2.bf16.msra.mxu0 0
      %1103 = vmatprep.subr.bf16.mxu0 0
      %1104 = vmatpush2.bf16.msra.mxu0 0
      %1105 = vmatprep.subr.bf16.mxu0 0
      %1106 = vmatpush2.bf16.msra.mxu0 0
      %1107 = vmatprep.subr.bf16.mxu0 0
      %1108 = vmatpush2.bf16.msra.mxu0 0
      %1109 = vmatprep.mubr.bf16.mxu0 0
      %1110 = vmatmul.mubr.bf16.gmra.mxu0 %v1075
      %v1111 = vpop.f32.mrf.mxu0
      %v1112 = vadd.f32 %v1060, %v1111
      %v1113 = vpop.f32.mrf.mxu0
      %v1114 = vpop.f32.mrf.mxu0
      %v1115 = vadd.f32 %v1060, %v1114
      %v1116 = vpop.f32.mrf.mxu0
      %1117 = vdwg.mxu0
      %v1118 = vpack.c.bf16 %v1112, %v1112
      %1120 = vrot.lane.b32.xlu0 %v1118, 96
      %v1121 = vpop.permute.xlu0 %1120
      %vm1122 = vcmask 130048
      %v1124 = vsel %vm1122, %v1118, 0
      %v1127 = vsel %vm1122, %v1121, 0
      %1129 = vmatprep.subr.bf16.mxu0 0
      %1130 = vmatpush1.bf16.xpose.msra.mxu0 0
      %1131 = vmatprep.subr.bf16.mxu0 0
      %1132 = vmatpush1.bf16.xpose.msra.mxu0 0
      %1133 = vmatprep.subr.bf16.mxu0 0
      %1134 = vmatpush1.bf16.xpose.msra.mxu0 0
      %1135 = vmatprep.subr.bf16.mxu0 0
      %1136 = vmatpush1.bf16.xpose.msra.mxu0 0
      %1137 = vmatprep.subr.bf16.mxu0 0
      %1138 = vmatpush1.bf16.xpose.msra.mxu0 0
      %1139 = vmatprep.subr.bf16.mxu0 0
      %1140 = vmatpush1.bf16.xpose.msra.mxu0 0
      %1141 = vmatprep.subr.bf16.mxu0 0
      %1142 = vmatpush1.bf16.xpose.msra.mxu0 0
      %1143 = vmatprep.subr.bf16.mxu0 0
      %1144 = vmatpush1.bf16.xpose.msra.mxu0 %v1127
      %1145 = vmatprep.subr.bf16.mxu0 0
      %1146 = vmatpush2.bf16.xpose.msra.mxu0 0
      %1147 = vmatprep.subr.bf16.mxu0 0
      %1148 = vmatpush2.bf16.xpose.msra.mxu0 0
      %1149 = vmatprep.subr.bf16.mxu0 0
      %1150 = vmatpush2.bf16.xpose.msra.mxu0 0
      %1151 = vmatprep.subr.bf16.mxu0 0
      %1152 = vmatpush2.bf16.xpose.msra.mxu0 0
      %1153 = vmatprep.subr.bf16.mxu0 0
      %1154 = vmatpush2.bf16.xpose.msra.mxu0 0
      %1155 = vmatprep.subr.bf16.mxu0 0
      %1156 = vmatpush2.bf16.xpose.msra.mxu0 0
      %1157 = vmatprep.subr.bf16.mxu0 0
      %1158 = vmatpush2.bf16.xpose.msra.mxu0 0
      %1159 = vmatprep.subr.bf16.mxu0 0
      %1160 = vmatpush2.bf16.xpose.msra.mxu0 0
      %1161 = vmatprep.mubr.bf16.mxu0 0
      %1162 = vmatmul.mubr.bf16.gmra.mxu0 %v1124
      %v1163 = vpop.f32.mrf.mxu0
      %v1164 = vadd.f32 0.0, %v1163
      %v1165 = vpop.f32.mrf.mxu0
      %v1166 = vpop.f32.mrf.mxu0
      %v1167 = vpop.f32.mrf.mxu0
      %1168 = vdwg.mxu0
      %v1169 = vmul.f32 %v1164, 0.25
      %v1170 = vadd.f32 %v1169, %v997
      %vm1171 = vcmask 64512
      %v1172 = vsel %vm1171, %v1170, -inf
      %1173 = vmax.xlane.f32.xlu0 %v1172
      %v1174 = vpop.xlane.xlu0 %1173
      %v1175 = vsub.f32 %v1170, %v1174
      %v1176 = vmul.f32 %v1175, 1.442695
      %v1177 = vpow.pop %v1176
      %v1178 = vsel %vm1171, %v1177, 0.0
      %1179 = vadd.xlane.f32.xlu0 %v1178
      %v1180 = vpop.xlane.xlu0 %1179
      %v1181 = vrcp.pop %v1180
      %v1182 = vmul.f32 %v1177, %v1181
      %v1183 = vpack.c.bf16 %v1182, %v1182
      %1184 = vrot.lane.b32.xlu0 %v1118, 64
      %v1185 = vpop.permute.xlu0 %1184
      %v1187 = vsel %vm1171, %v1183, 0
      %vm1189 = vcmask 1043456
      %v1191 = vsel %vm1189, %v1185, 0
      %1193 = vmatprep.subr.bf16.mxu0 0
      %1194 = vmatpush1.bf16.msra.mxu0 0
      %1195 = vmatprep.subr.bf16.mxu0 0
      %1196 = vmatpush1.bf16.msra.mxu0 0
      %1197 = vmatprep.subr.bf16.mxu0 0
      %1198 = vmatpush1.bf16.msra.mxu0 0
      %1199 = vmatprep.subr.bf16.mxu0 0
      %1200 = vmatpush1.bf16.msra.mxu0 0
      %1201 = vmatprep.subr.bf16.mxu0 0
      %1202 = vmatpush1.bf16.msra.mxu0 0
      %1203 = vmatprep.subr.bf16.mxu0 0
      %1204 = vmatpush1.bf16.msra.mxu0 0
      %1205 = vmatprep.subr.bf16.mxu0 0
      %1206 = vmatpush1.bf16.msra.mxu0 0
      %1207 = vmatprep.subr.bf16.mxu0 0
      %1208 = vmatpush1.bf16.msra.mxu0 %v1191
      %1209 = vmatprep.subr.bf16.mxu0 0
      %1210 = vmatpush2.bf16.msra.mxu0 0
      %1211 = vmatprep.subr.bf16.mxu0 0
      %1212 = vmatpush2.bf16.msra.mxu0 0
      %1213 = vmatprep.subr.bf16.mxu0 0
      %1214 = vmatpush2.bf16.msra.mxu0 0
      %1215 = vmatprep.subr.bf16.mxu0 0
      %1216 = vmatpush2.bf16.msra.mxu0 0
      %1217 = vmatprep.subr.bf16.mxu0 0
      %1218 = vmatpush2.bf16.msra.mxu0 0
      %1219 = vmatprep.subr.bf16.mxu0 0
      %1220 = vmatpush2.bf16.msra.mxu0 0
      %1221 = vmatprep.subr.bf16.mxu0 0
      %1222 = vmatpush2.bf16.msra.mxu0 0
      %1223 = vmatprep.subr.bf16.mxu0 0
      %1224 = vmatpush2.bf16.msra.mxu0 0
      %1225 = vmatprep.mubr.bf16.mxu0 0
      %1226 = vmatmul.mubr.bf16.gmra.mxu0 %v1187
      %v1227 = vpop.f32.mrf.mxu0
      %v1228 = vadd.f32 0.0, %v1227
      %v1229 = vpop.f32.mrf.mxu0
      %v1230 = vpop.f32.mrf.mxu0
      %v1231 = vpop.f32.mrf.mxu0
      %1232 = vdwg.mxu0
      %v1233 = vpack.c.bf16 %v1228, %v1228
      %1234 = vrot.lane.b32.xlu0 %v1118, 112
      %v1235 = vpop.permute.xlu0 %1234
      %1236 = vrot.lane.b32.xlu0 %v1118, 80
      %v1237 = vpop.permute.xlu0 %1236
      %v1239 = vsel %vm1122, %v1235, 0
      %v1242 = vsel %vm1122, %v1237, 0
      %1244 = vmatprep.subr.bf16.mxu0 0
      %1245 = vmatpush1.bf16.xpose.msra.mxu0 0
      %1246 = vmatprep.subr.bf16.mxu0 0
      %1247 = vmatpush1.bf16.xpose.msra.mxu0 0
      %1248 = vmatprep.subr.bf16.mxu0 0
      %1249 = vmatpush1.bf16.xpose.msra.mxu0 0
      %1250 = vmatprep.subr.bf16.mxu0 0
      %1251 = vmatpush1.bf16.xpose.msra.mxu0 0
      %1252 = vmatprep.subr.bf16.mxu0 0
      %1253 = vmatpush1.bf16.xpose.msra.mxu0 0
      %1254 = vmatprep.subr.bf16.mxu0 0
      %1255 = vmatpush1.bf16.xpose.msra.mxu0 0
      %1256 = vmatprep.subr.bf16.mxu0 0
      %1257 = vmatpush1.bf16.xpose.msra.mxu0 0
      %1258 = vmatprep.subr.bf16.mxu0 0
      %1259 = vmatpush1.bf16.xpose.msra.mxu0 %v1242
      %1260 = vmatprep.subr.bf16.mxu0 0
      %1261 = vmatpush2.bf16.xpose.msra.mxu0 0
      %1262 = vmatprep.subr.bf16.mxu0 0
      %1263 = vmatpush2.bf16.xpose.msra.mxu0 0
      %1264 = vmatprep.subr.bf16.mxu0 0
      %1265 = vmatpush2.bf16.xpose.msra.mxu0 0
      %1266 = vmatprep.subr.bf16.mxu0 0
      %1267 = vmatpush2.bf16.xpose.msra.mxu0 0
      %1268 = vmatprep.subr.bf16.mxu0 0
      %1269 = vmatpush2.bf16.xpose.msra.mxu0 0
      %1270 = vmatprep.subr.bf16.mxu0 0
      %1271 = vmatpush2.bf16.xpose.msra.mxu0 0
      %1272 = vmatprep.subr.bf16.mxu0 0
      %1273 = vmatpush2.bf16.xpose.msra.mxu0 0
      %1274 = vmatprep.subr.bf16.mxu0 0
      %1275 = vmatpush2.bf16.xpose.msra.mxu0 0
      %1276 = vmatprep.mubr.bf16.mxu0 0
      %1277 = vmatmul.mubr.bf16.gmra.mxu0 %v1239
      %v1278 = vpop.f32.mrf.mxu0
      %v1279 = vadd.f32 0.0, %v1278
      %v1280 = vpop.f32.mrf.mxu0
      %v1281 = vpop.f32.mrf.mxu0
      %v1282 = vpop.f32.mrf.mxu0
      %1283 = vdwg.mxu0
      %v1284 = vmul.f32 %v1279, 0.25
      %v1285 = vadd.f32 %v1284, %v997
      %v1286 = vsel %vm1171, %v1285, -inf
      %1287 = vmax.xlane.f32.xlu0 %v1286
      %v1288 = vpop.xlane.xlu0 %1287
      %v1289 = vsub.f32 %v1285, %v1288
      %v1290 = vmul.f32 %v1289, 1.442695
      %v1291 = vpow.pop %v1290
      %v1292 = vsel %vm1171, %v1291, 0.0
      %1293 = vadd.xlane.f32.xlu0 %v1292
      %v1294 = vpop.xlane.xlu0 %1293
      %v1295 = vrcp.pop %v1294
      %v1296 = vmul.f32 %v1291, %v1295
      %v1297 = vpack.c.bf16 %v1296, %v1296
      %1298 = vrot.lane.b32.xlu0 %v1118, 48
      %v1299 = vpop.permute.xlu0 %1298
      %v1301 = vsel %vm1171, %v1297, 0
      %v1304 = vsel %vm1189, %v1299, 0
      %1306 = vmatprep.subr.bf16.mxu0 0
      %1307 = vmatpush1.bf16.msra.mxu0 0
      %1308 = vmatprep.subr.bf16.mxu0 0
      %1309 = vmatpush1.bf16.msra.mxu0 0
      %1310 = vmatprep.subr.bf16.mxu0 0
      %1311 = vmatpush1.bf16.msra.mxu0 0
      %1312 = vmatprep.subr.bf16.mxu0 0
      %1313 = vmatpush1.bf16.msra.mxu0 0
      %1314 = vmatprep.subr.bf16.mxu0 0
      %1315 = vmatpush1.bf16.msra.mxu0 0
      %1316 = vmatprep.subr.bf16.mxu0 0
      %1317 = vmatpush1.bf16.msra.mxu0 0
      %1318 = vmatprep.subr.bf16.mxu0 0
      %1319 = vmatpush1.bf16.msra.mxu0 0
      %1320 = vmatprep.subr.bf16.mxu0 0
      %1321 = vmatpush1.bf16.msra.mxu0 %v1304
      %1322 = vmatprep.subr.bf16.mxu0 0
      %1323 = vmatpush2.bf16.msra.mxu0 0
      %1324 = vmatprep.subr.bf16.mxu0 0
      %1325 = vmatpush2.bf16.msra.mxu0 0
      %1326 = vmatprep.subr.bf16.mxu0 0
      %1327 = vmatpush2.bf16.msra.mxu0 0
      %1328 = vmatprep.subr.bf16.mxu0 0
      %1329 = vmatpush2.bf16.msra.mxu0 0
      %1330 = vmatprep.subr.bf16.mxu0 0
      %1331 = vmatpush2.bf16.msra.mxu0 0
      %1332 = vmatprep.subr.bf16.mxu0 0
      %1333 = vmatpush2.bf16.msra.mxu0 0
      %1334 = vmatprep.subr.bf16.mxu0 0
      %1335 = vmatpush2.bf16.msra.mxu0 0
      %1336 = vmatprep.subr.bf16.mxu0 0
      %1337 = vmatpush2.bf16.msra.mxu0 0
      %1338 = vmatprep.mubr.bf16.mxu0 0
      %1339 = vmatmul.mubr.bf16.gmra.mxu0 %v1301
      %v1340 = vpop.f32.mrf.mxu0
      %v1341 = vadd.f32 0.0, %v1340
      %v1342 = vpop.f32.mrf.mxu0
      %v1343 = vpop.f32.mrf.mxu0
      %v1344 = vpop.f32.mrf.mxu0
      %1345 = vdwg.mxu0
      %v1346 = vpack.c.bf16 %v1341, %v1341
      %v1349 = vunpack.c.l.b16 %v1002
      %v1350 = vunpack.c.l.b16 %v1003
      %v1351 = vpack.c.b16 %v1350, %v1349
      %v1354 = vsel %vm1122, %v1346, 0
      %1356 = vmatprep.subr.bf16.mxu0 0
      %1357 = vmatpush1.bf16.msra.mxu0 0
      %1358 = vmatprep.subr.bf16.mxu0 0
      %1359 = vmatpush1.bf16.msra.mxu0 0
      %1360 = vmatprep.subr.bf16.mxu0 0
      %1361 = vmatpush1.bf16.msra.mxu0 0
      %1362 = vmatprep.subr.bf16.mxu0 0
      %1363 = vmatpush1.bf16.msra.mxu0 0
      %1364 = vmatprep.subr.bf16.mxu0 0
      %1365 = vmatpush1.bf16.msra.mxu0 0
      %1366 = vmatprep.subr.bf16.mxu0 0
      %1367 = vmatpush1.bf16.msra.mxu0 0
      %1368 = vmatprep.subr.bf16.mxu0 0
      %1369 = vmatpush1.bf16.msra.mxu0 0
      %1370 = vmatprep.subr.bf16.mxu0 0
      %1371 = vmatpush1.bf16.msra.mxu0 %v1351
      %1372 = vmatprep.subr.bf16.mxu0 0
      %1373 = vmatpush2.bf16.msra.mxu0 0
      %1374 = vmatprep.subr.bf16.mxu0 0
      %1375 = vmatpush2.bf16.msra.mxu0 0
      %1376 = vmatprep.subr.bf16.mxu0 0
      %1377 = vmatpush2.bf16.msra.mxu0 0
      %1378 = vmatprep.subr.bf16.mxu0 0
      %1379 = vmatpush2.bf16.msra.mxu0 0
      %1380 = vmatprep.subr.bf16.mxu0 0
      %1381 = vmatpush2.bf16.msra.mxu0 0
      %1382 = vmatprep.subr.bf16.mxu0 0
      %1383 = vmatpush2.bf16.msra.mxu0 0
      %1384 = vmatprep.subr.bf16.mxu0 0
      %1385 = vmatpush2.bf16.msra.mxu0 0
      %1386 = vmatprep.subr.bf16.mxu0 0
      %1387 = vmatpush2.bf16.msra.mxu0 0
      %1388 = vmatprep.mubr.bf16.mxu0 0
      %1389 = vmatmul.mubr.bf16.gmra.mxu0 %v1354
      %v1390 = vpop.f32.mrf.mxu0
      %v1391 = vadd.f32 0.0, %v1390
      %v1392 = vpop.f32.mrf.mxu0
      %v1393 = vpop.f32.mrf.mxu0
      %v1394 = vpop.f32.mrf.mxu0
      %1395 = vdwg.mxu0
      %v1398 = vunpack.c.l.b16 %v1000
      %v1399 = vunpack.c.l.b16 %v1001
      %v1400 = vpack.c.b16 %v1399, %v1398
      %v1403 = vsel %vm1122, %v1233, 0
      %1405 = vmatprep.subr.bf16.mxu0 0
      %1406 = vmatpush1.bf16.msra.mxu0 0
      %1407 = vmatprep.subr.bf16.mxu0 0
      %1408 = vmatpush1.bf16.msra.mxu0 0
      %1409 = vmatprep.subr.bf16.mxu0 0
      %1410 = vmatpush1.bf16.msra.mxu0 0
      %1411 = vmatprep.subr.bf16.mxu0 0
      %1412 = vmatpush1.bf16.msra.mxu0 0
      %1413 = vmatprep.subr.bf16.mxu0 0
      %1414 = vmatpush1.bf16.msra.mxu0 0
      %1415 = vmatprep.subr.bf16.mxu0 0
      %1416 = vmatpush1.bf16.msra.mxu0 0
      %1417 = vmatprep.subr.bf16.mxu0 0
      %1418 = vmatpush1.bf16.msra.mxu0 0
      %1419 = vmatprep.subr.bf16.mxu0 0
      %1420 = vmatpush1.bf16.msra.mxu0 %v1400
      %1421 = vmatprep.subr.bf16.mxu0 0
      %1422 = vmatpush2.bf16.msra.mxu0 0
      %1423 = vmatprep.subr.bf16.mxu0 0
      %1424 = vmatpush2.bf16.msra.mxu0 0
      %1425 = vmatprep.subr.bf16.mxu0 0
      %1426 = vmatpush2.bf16.msra.mxu0 0
      %1427 = vmatprep.subr.bf16.mxu0 0
      %1428 = vmatpush2.bf16.msra.mxu0 0
      %1429 = vmatprep.subr.bf16.mxu0 0
      %1430 = vmatpush2.bf16.msra.mxu0 0
      %1431 = vmatprep.subr.bf16.mxu0 0
      %1432 = vmatpush2.bf16.msra.mxu0 0
      %1433 = vmatprep.subr.bf16.mxu0 0
      %1434 = vmatpush2.bf16.msra.mxu0 0
      %1435 = vmatprep.subr.bf16.mxu0 0
      %1436 = vmatpush2.bf16.msra.mxu0 0
      %1437 = vmatprep.mubr.bf16.mxu0 0
      %1438 = vmatmul.mubr.bf16.gmra.mxu0 %v1403
      %v1439 = vpop.f32.mrf.mxu0
      %v1440 = vadd.f32 %v1391, %v1439
      %v1441 = vpop.f32.mrf.mxu0
      %v1442 = vpop.f32.mrf.mxu0
      %v1443 = vpop.f32.mrf.mxu0
      %1444 = vdwg.mxu0
      %v1445 = vpack.c.bf16 %v1115, %v1115
      %1447 = vrot.lane.b32.xlu0 %v1445, 96
      %v1448 = vpop.permute.xlu0 %1447
      %v1450 = vsel %vm1122, %v1445, 0
      %v1453 = vsel %vm1122, %v1448, 0
      %1455 = vmatprep.subr.bf16.mxu0 0
      %1456 = vmatpush1.bf16.xpose.msra.mxu0 0
      %1457 = vmatprep.subr.bf16.mxu0 0
      %1458 = vmatpush1.bf16.xpose.msra.mxu0 0
      %1459 = vmatprep.subr.bf16.mxu0 0
      %1460 = vmatpush1.bf16.xpose.msra.mxu0 0
      %1461 = vmatprep.subr.bf16.mxu0 0
      %1462 = vmatpush1.bf16.xpose.msra.mxu0 0
      %1463 = vmatprep.subr.bf16.mxu0 0
      %1464 = vmatpush1.bf16.xpose.msra.mxu0 0
      %1465 = vmatprep.subr.bf16.mxu0 0
      %1466 = vmatpush1.bf16.xpose.msra.mxu0 0
      %1467 = vmatprep.subr.bf16.mxu0 0
      %1468 = vmatpush1.bf16.xpose.msra.mxu0 0
      %1469 = vmatprep.subr.bf16.mxu0 0
      %1470 = vmatpush1.bf16.xpose.msra.mxu0 %v1453
      %1471 = vmatprep.subr.bf16.mxu0 0
      %1472 = vmatpush2.bf16.xpose.msra.mxu0 0
      %1473 = vmatprep.subr.bf16.mxu0 0
      %1474 = vmatpush2.bf16.xpose.msra.mxu0 0
      %1475 = vmatprep.subr.bf16.mxu0 0
      %1476 = vmatpush2.bf16.xpose.msra.mxu0 0
      %1477 = vmatprep.subr.bf16.mxu0 0
      %1478 = vmatpush2.bf16.xpose.msra.mxu0 0
      %1479 = vmatprep.subr.bf16.mxu0 0
      %1480 = vmatpush2.bf16.xpose.msra.mxu0 0
      %1481 = vmatprep.subr.bf16.mxu0 0
      %1482 = vmatpush2.bf16.xpose.msra.mxu0 0
      %1483 = vmatprep.subr.bf16.mxu0 0
      %1484 = vmatpush2.bf16.xpose.msra.mxu0 0
      %1485 = vmatprep.subr.bf16.mxu0 0
      %1486 = vmatpush2.bf16.xpose.msra.mxu0 0
      %1487 = vmatprep.mubr.bf16.mxu0 0
      %1488 = vmatmul.mubr.bf16.gmra.mxu0 %v1450
      %v1489 = vpop.f32.mrf.mxu0
      %v1490 = vadd.f32 0.0, %v1489
      %v1491 = vpop.f32.mrf.mxu0
      %v1492 = vpop.f32.mrf.mxu0
      %v1493 = vpop.f32.mrf.mxu0
      %1494 = vdwg.mxu0
      %v1495 = vmul.f32 %v1490, 0.25
      %v1496 = vadd.f32 %v1495, %v997
      %v1497 = vsel %vm1171, %v1496, -inf
      %1498 = vmax.xlane.f32.xlu0 %v1497
      %v1499 = vpop.xlane.xlu0 %1498
      %v1500 = vsub.f32 %v1496, %v1499
      %v1501 = vmul.f32 %v1500, 1.442695
      %v1502 = vpow.pop %v1501
      %v1503 = vsel %vm1171, %v1502, 0.0
      %1504 = vadd.xlane.f32.xlu0 %v1503
      %v1505 = vpop.xlane.xlu0 %1504
      %v1506 = vrcp.pop %v1505
      %v1507 = vmul.f32 %v1502, %v1506
      %v1508 = vpack.c.bf16 %v1507, %v1507
      %1509 = vrot.lane.b32.xlu0 %v1445, 64
      %v1510 = vpop.permute.xlu0 %1509
      %v1512 = vsel %vm1171, %v1508, 0
      %v1515 = vsel %vm1189, %v1510, 0
      %1517 = vmatprep.subr.bf16.mxu0 0
      %1518 = vmatpush1.bf16.msra.mxu0 0
      %1519 = vmatprep.subr.bf16.mxu0 0
      %1520 = vmatpush1.bf16.msra.mxu0 0
      %1521 = vmatprep.subr.bf16.mxu0 0
      %1522 = vmatpush1.bf16.msra.mxu0 0
      %1523 = vmatprep.subr.bf16.mxu0 0
      %1524 = vmatpush1.bf16.msra.mxu0 0
      %1525 = vmatprep.subr.bf16.mxu0 0
      %1526 = vmatpush1.bf16.msra.mxu0 0
      %1527 = vmatprep.subr.bf16.mxu0 0
      %1528 = vmatpush1.bf16.msra.mxu0 0
      %1529 = vmatprep.subr.bf16.mxu0 0
      %1530 = vmatpush1.bf16.msra.mxu0 0
      %1531 = vmatprep.subr.bf16.mxu0 0
      %1532 = vmatpush1.bf16.msra.mxu0 %v1515
      %1533 = vmatprep.subr.bf16.mxu0 0
      %1534 = vmatpush2.bf16.msra.mxu0 0
      %1535 = vmatprep.subr.bf16.mxu0 0
      %1536 = vmatpush2.bf16.msra.mxu0 0
      %1537 = vmatprep.subr.bf16.mxu0 0
      %1538 = vmatpush2.bf16.msra.mxu0 0
      %1539 = vmatprep.subr.bf16.mxu0 0
      %1540 = vmatpush2.bf16.msra.mxu0 0
      %1541 = vmatprep.subr.bf16.mxu0 0
      %1542 = vmatpush2.bf16.msra.mxu0 0
      %1543 = vmatprep.subr.bf16.mxu0 0
      %1544 = vmatpush2.bf16.msra.mxu0 0
      %1545 = vmatprep.subr.bf16.mxu0 0
      %1546 = vmatpush2.bf16.msra.mxu0 0
      %1547 = vmatprep.subr.bf16.mxu0 0
      %1548 = vmatpush2.bf16.msra.mxu0 0
      %1549 = vmatprep.mubr.bf16.mxu0 0
      %1550 = vmatmul.mubr.bf16.gmra.mxu0 %v1512
      %v1551 = vpop.f32.mrf.mxu0
      %v1552 = vadd.f32 0.0, %v1551
      %v1553 = vpop.f32.mrf.mxu0
      %v1554 = vpop.f32.mrf.mxu0
      %v1555 = vpop.f32.mrf.mxu0
      %1556 = vdwg.mxu0
      %v1557 = vpack.c.bf16 %v1552, %v1552
      %1558 = vrot.lane.b32.xlu0 %v1445, 112
      %v1559 = vpop.permute.xlu0 %1558
      %1560 = vrot.lane.b32.xlu0 %v1445, 80
      %v1561 = vpop.permute.xlu0 %1560
      %v1563 = vsel %vm1122, %v1559, 0
      %v1566 = vsel %vm1122, %v1561, 0
      %1568 = vmatprep.subr.bf16.mxu0 0
      %1569 = vmatpush1.bf16.xpose.msra.mxu0 0
      %1570 = vmatprep.subr.bf16.mxu0 0
      %1571 = vmatpush1.bf16.xpose.msra.mxu0 0
      %1572 = vmatprep.subr.bf16.mxu0 0
      %1573 = vmatpush1.bf16.xpose.msra.mxu0 0
      %1574 = vmatprep.subr.bf16.mxu0 0
      %1575 = vmatpush1.bf16.xpose.msra.mxu0 0
      %1576 = vmatprep.subr.bf16.mxu0 0
      %1577 = vmatpush1.bf16.xpose.msra.mxu0 0
      %1578 = vmatprep.subr.bf16.mxu0 0
      %1579 = vmatpush1.bf16.xpose.msra.mxu0 0
      %1580 = vmatprep.subr.bf16.mxu0 0
      %1581 = vmatpush1.bf16.xpose.msra.mxu0 0
      %1582 = vmatprep.subr.bf16.mxu0 0
      %1583 = vmatpush1.bf16.xpose.msra.mxu0 %v1566
      %1584 = vmatprep.subr.bf16.mxu0 0
      %1585 = vmatpush2.bf16.xpose.msra.mxu0 0
      %1586 = vmatprep.subr.bf16.mxu0 0
      %1587 = vmatpush2.bf16.xpose.msra.mxu0 0
      %1588 = vmatprep.subr.bf16.mxu0 0
      %1589 = vmatpush2.bf16.xpose.msra.mxu0 0
      %1590 = vmatprep.subr.bf16.mxu0 0
      %1591 = vmatpush2.bf16.xpose.msra.mxu0 0
      %1592 = vmatprep.subr.bf16.mxu0 0
      %1593 = vmatpush2.bf16.xpose.msra.mxu0 0
      %1594 = vmatprep.subr.bf16.mxu0 0
      %1595 = vmatpush2.bf16.xpose.msra.mxu0 0
      %1596 = vmatprep.subr.bf16.mxu0 0
      %1597 = vmatpush2.bf16.xpose.msra.mxu0 0
      %1598 = vmatprep.subr.bf16.mxu0 0
      %1599 = vmatpush2.bf16.xpose.msra.mxu0 0
      %1600 = vmatprep.mubr.bf16.mxu0 0
      %1601 = vmatmul.mubr.bf16.gmra.mxu0 %v1563
      %v1602 = vpop.f32.mrf.mxu0
      %v1603 = vadd.f32 0.0, %v1602
      %v1604 = vpop.f32.mrf.mxu0
      %v1605 = vpop.f32.mrf.mxu0
      %v1606 = vpop.f32.mrf.mxu0
      %1607 = vdwg.mxu0
      %v1608 = vmul.f32 %v1603, 0.25
      %v1609 = vadd.f32 %v1608, %v997
      %v1610 = vsel %vm1171, %v1609, -inf
      %1611 = vmax.xlane.f32.xlu0 %v1610
      %v1612 = vpop.xlane.xlu0 %1611
      %v1613 = vsub.f32 %v1609, %v1612
      %v1614 = vmul.f32 %v1613, 1.442695
      %v1615 = vpow.pop %v1614
      %v1616 = vsel %vm1171, %v1615, 0.0
      %1617 = vadd.xlane.f32.xlu0 %v1616
      %v1618 = vpop.xlane.xlu0 %1617
      %v1619 = vrcp.pop %v1618
      %v1620 = vmul.f32 %v1615, %v1619
      %v1621 = vpack.c.bf16 %v1620, %v1620
      %1622 = vrot.lane.b32.xlu0 %v1445, 48
      %v1623 = vpop.permute.xlu0 %1622
      %v1625 = vsel %vm1171, %v1621, 0
      %v1628 = vsel %vm1189, %v1623, 0
      %1630 = vmatprep.subr.bf16.mxu0 0
      %1631 = vmatpush1.bf16.msra.mxu0 0
      %1632 = vmatprep.subr.bf16.mxu0 0
      %1633 = vmatpush1.bf16.msra.mxu0 0
      %1634 = vmatprep.subr.bf16.mxu0 0
      %1635 = vmatpush1.bf16.msra.mxu0 0
      %1636 = vmatprep.subr.bf16.mxu0 0
      %1637 = vmatpush1.bf16.msra.mxu0 0
      %1638 = vmatprep.subr.bf16.mxu0 0
      %1639 = vmatpush1.bf16.msra.mxu0 0
      %1640 = vmatprep.subr.bf16.mxu0 0
      %1641 = vmatpush1.bf16.msra.mxu0 0
      %1642 = vmatprep.subr.bf16.mxu0 0
      %1643 = vmatpush1.bf16.msra.mxu0 0
      %1644 = vmatprep.subr.bf16.mxu0 0
      %1645 = vmatpush1.bf16.msra.mxu0 %v1628
      %1646 = vmatprep.subr.bf16.mxu0 0
      %1647 = vmatpush2.bf16.msra.mxu0 0
      %1648 = vmatprep.subr.bf16.mxu0 0
      %1649 = vmatpush2.bf16.msra.mxu0 0
      %1650 = vmatprep.subr.bf16.mxu0 0
      %1651 = vmatpush2.bf16.msra.mxu0 0
      %1652 = vmatprep.subr.bf16.mxu0 0
      %1653 = vmatpush2.bf16.msra.mxu0 0
      %1654 = vmatprep.subr.bf16.mxu0 0
      %1655 = vmatpush2.bf16.msra.mxu0 0
      %1656 = vmatprep.subr.bf16.mxu0 0
      %1657 = vmatpush2.bf16.msra.mxu0 0
      %1658 = vmatprep.subr.bf16.mxu0 0
      %1659 = vmatpush2.bf16.msra.mxu0 0
      %1660 = vmatprep.subr.bf16.mxu0 0
      %1661 = vmatpush2.bf16.msra.mxu0 0
      %1662 = vmatprep.mubr.bf16.mxu0 0
      %1663 = vmatmul.mubr.bf16.gmra.mxu0 %v1625
      %v1664 = vpop.f32.mrf.mxu0
      %v1665 = vadd.f32 0.0, %v1664
      %v1666 = vpop.f32.mrf.mxu0
      %v1667 = vpop.f32.mrf.mxu0
      %v1668 = vpop.f32.mrf.mxu0
      %1669 = vdwg.mxu0
      %v1670 = vpack.c.bf16 %v1665, %v1665
      %v1672 = vsel %vm1122, %v1670, 0
      %1674 = vmatprep.subr.bf16.mxu0 0
      %1675 = vmatpush1.bf16.msra.mxu0 0
      %1676 = vmatprep.subr.bf16.mxu0 0
      %1677 = vmatpush1.bf16.msra.mxu0 0
      %1678 = vmatprep.subr.bf16.mxu0 0
      %1679 = vmatpush1.bf16.msra.mxu0 0
      %1680 = vmatprep.subr.bf16.mxu0 0
      %1681 = vmatpush1.bf16.msra.mxu0 0
      %1682 = vmatprep.subr.bf16.mxu0 0
      %1683 = vmatpush1.bf16.msra.mxu0 0
      %1684 = vmatprep.subr.bf16.mxu0 0
      %1685 = vmatpush1.bf16.msra.mxu0 0
      %1686 = vmatprep.subr.bf16.mxu0 0
      %1687 = vmatpush1.bf16.msra.mxu0 0
      %1688 = vmatprep.subr.bf16.mxu0 0
      %1689 = vmatpush1.bf16.msra.mxu0 %v1351
      %1690 = vmatprep.subr.bf16.mxu0 0
      %1691 = vmatpush2.bf16.msra.mxu0 0
      %1692 = vmatprep.subr.bf16.mxu0 0
      %1693 = vmatpush2.bf16.msra.mxu0 0
      %1694 = vmatprep.subr.bf16.mxu0 0
      %1695 = vmatpush2.bf16.msra.mxu0 0
      %1696 = vmatprep.subr.bf16.mxu0 0
      %1697 = vmatpush2.bf16.msra.mxu0 0
      %1698 = vmatprep.subr.bf16.mxu0 0
      %1699 = vmatpush2.bf16.msra.mxu0 0
      %1700 = vmatprep.subr.bf16.mxu0 0
      %1701 = vmatpush2.bf16.msra.mxu0 0
      %1702 = vmatprep.subr.bf16.mxu0 0
      %1703 = vmatpush2.bf16.msra.mxu0 0
      %1704 = vmatprep.subr.bf16.mxu0 0
      %1705 = vmatpush2.bf16.msra.mxu0 0
      %1706 = vmatprep.mubr.bf16.mxu0 0
      %1707 = vmatmul.mubr.bf16.gmra.mxu0 %v1672
      %v1708 = vpop.f32.mrf.mxu0
      %v1709 = vadd.f32 0.0, %v1708
      %v1710 = vpop.f32.mrf.mxu0
      %v1711 = vpop.f32.mrf.mxu0
      %v1712 = vpop.f32.mrf.mxu0
      %1713 = vdwg.mxu0
      %v1715 = vsel %vm1122, %v1557, 0
      %1717 = vmatprep.subr.bf16.mxu0 0
      %1718 = vmatpush1.bf16.msra.mxu0 0
      %1719 = vmatprep.subr.bf16.mxu0 0
      %1720 = vmatpush1.bf16.msra.mxu0 0
      %1721 = vmatprep.subr.bf16.mxu0 0
      %1722 = vmatpush1.bf16.msra.mxu0 0
      %1723 = vmatprep.subr.bf16.mxu0 0
      %1724 = vmatpush1.bf16.msra.mxu0 0
      %1725 = vmatprep.subr.bf16.mxu0 0
      %1726 = vmatpush1.bf16.msra.mxu0 0
      %1727 = vmatprep.subr.bf16.mxu0 0
      %1728 = vmatpush1.bf16.msra.mxu0 0
      %1729 = vmatprep.subr.bf16.mxu0 0
      %1730 = vmatpush1.bf16.msra.mxu0 0
      %1731 = vmatprep.subr.bf16.mxu0 0
      %1732 = vmatpush1.bf16.msra.mxu0 %v1400
      %1733 = vmatprep.subr.bf16.mxu0 0
      %1734 = vmatpush2.bf16.msra.mxu0 0
      %1735 = vmatprep.subr.bf16.mxu0 0
      %1736 = vmatpush2.bf16.msra.mxu0 0
      %1737 = vmatprep.subr.bf16.mxu0 0
      %1738 = vmatpush2.bf16.msra.mxu0 0
      %1739 = vmatprep.subr.bf16.mxu0 0
      %1740 = vmatpush2.bf16.msra.mxu0 0
      %1741 = vmatprep.subr.bf16.mxu0 0
      %1742 = vmatpush2.bf16.msra.mxu0 0
      %1743 = vmatprep.subr.bf16.mxu0 0
      %1744 = vmatpush2.bf16.msra.mxu0 0
      %1745 = vmatprep.subr.bf16.mxu0 0
      %1746 = vmatpush2.bf16.msra.mxu0 0
      %1747 = vmatprep.subr.bf16.mxu0 0
      %1748 = vmatpush2.bf16.msra.mxu0 0
      %1749 = vmatprep.mubr.bf16.mxu0 0
      %1750 = vmatmul.mubr.bf16.gmra.mxu0 %v1715
      %v1751 = vpop.f32.mrf.mxu0
      %v1752 = vadd.f32 %v1709, %v1751
      %v1753 = vpop.f32.mrf.mxu0
      %v1754 = vpop.f32.mrf.mxu0
      %v1755 = vpop.f32.mrf.mxu0
      %1756 = vdwg.mxu0
      %v1757 = vld [vmem:[%s791] sm:$0x1]
      %v1759 = vlaneseq
      %v1760 = vshrl.u32 %v1759, 7
      %v1761 = vsub.s32 0, %v1760
      %v1762 = vrot.slane %v1757, %v1761
      %v1764 = vadd.f32 %v1440, %v1762
      %v1765 = vadd.f32 %v1752, %v1762
      %v1766 = vadd.f32 %v998, %v1764
      %v1767 = vadd.f32 %v999, %v1765
      %v1768 = vld [vmem:[%s794] sm:$0x1]
      %v1769 = vld [vmem:[%s797] sm:$0x1]
      %v1770 = vsel %vm1006, %v1766, 0.0
      %1771 = vadd.xlane.f32.xlu0 %v1770
      %v1772 = vpop.xlane.xlu0 %1771
      %v1773 = vsel %vm1006, %v1767, 0.0
      %1774 = vadd.xlane.f32.xlu0 %v1773
      %v1775 = vpop.xlane.xlu0 %1774
      %v1776 = vmul.f32 %v1772, %v1013
      %v1777 = vmul.f32 %v1775, %v1013
      %v1778 = vsub.f32 %v1766, %v1776
      %v1779 = vsub.f32 %v1767, %v1777
      %v1780 = vmul.f32 %v1778, %v1778
      %v1781 = vmul.f32 %v1779, %v1779
      %v1782 = vsel %vm1006, %v1780, 0.0
      %1783 = vadd.xlane.f32.xlu0 %v1782
      %v1784 = vpop.xlane.xlu0 %1783
      %v1785 = vsel %vm1006, %v1781, 0.0
      %1786 = vadd.xlane.f32.xlu0 %v1785
      %v1787 = vpop.xlane.xlu0 %1786
      %v1788 = vmul.f32 %v1784, %v1013
      %v1789 = vmul.f32 %v1787, %v1013
      %v1790 = vadd.f32 %v1788, 1e-12
      %v1791 = vadd.f32 %v1789, 1e-12
      %v1792 = vrsqrt.pop %v1790
      %v1793 = vrsqrt.pop %v1791
      %v1794 = vmul.f32 %v1778, %v1792
      %v1795 = vmul.f32 %v1779, %v1793
      %v1797 = vlaneseq
      %v1798 = vshrl.u32 %v1797, 7
      %v1799 = vsub.s32 0, %v1798
      %v1800 = vrot.slane %v1768, %v1799
      %v1802 = vmul.f32 %v1794, %v1800
      %v1803 = vmul.f32 %v1795, %v1800
      %v1805 = vlaneseq
      %v1806 = vshrl.u32 %v1805, 7
      %v1807 = vsub.s32 0, %v1806
      %v1808 = vrot.slane %v1769, %v1807
      %v1810 = vadd.f32 %v1802, %v1808
      %v1811 = vadd.f32 %v1803, %v1808
      %v1812 = vpack.c.bf16 %v1811, %v1810
      %v1813 = vld [vmem:[%s802] sm:$0xf]
      %v1814 = vld [vmem:[%s802 + $0x4] sm:$0xf]
      %v1815 = vld [vmem:[%s802 + $0x8] sm:$0xf]
      %v1816 = vld [vmem:[%s802 + $0xc] sm:$0xf]
      %v1817 = vld [vmem:[%s805] sm:$0x1]
      %v1819 = vlaneseq
      %v1820 = vshrl.u32 %v1819, 7
      %v1821 = vsub.s32 0, %v1820
      %v1822 = vrot.slane %v1817, %v1821
      %v1828 = vunpack.c.l.b16 %v1813
      %v1829 = vunpack.c.l.b16 %v1814
      %v1830 = vunpack.c.l.b16 %v1815
      %v1831 = vunpack.c.l.b16 %v1816
      %v1832 = vpack.c.b16 %v1829, %v1828
      %v1833 = vpack.c.b16 %v1831, %v1830
      %v1837 = vsel %vm1006, %v1812, 0
      %1839 = vmatprep.subr.bf16.mxu0 0
      %1840 = vmatpush1.bf16.msra.mxu0 0
      %1841 = vmatprep.subr.bf16.mxu0 0
      %1842 = vmatpush1.bf16.msra.mxu0 0
      %1843 = vmatprep.subr.bf16.mxu0 0
      %1844 = vmatpush1.bf16.msra.mxu0 0
      %1845 = vmatprep.subr.bf16.mxu0 0
      %1846 = vmatpush1.bf16.msra.mxu0 0
      %1847 = vmatprep.subr.bf16.mxu0 0
      %1848 = vmatpush1.bf16.msra.mxu0 0
      %1849 = vmatprep.subr.bf16.mxu0 0
      %1850 = vmatpush1.bf16.msra.mxu0 0
      %1851 = vmatprep.subr.bf16.mxu0 0
      %1852 = vmatpush1.bf16.msra.mxu0 %v1833
      %1853 = vmatprep.subr.bf16.mxu0 0
      %1854 = vmatpush1.bf16.msra.mxu0 %v1832
      %1855 = vmatprep.subr.bf16.mxu0 0
      %1856 = vmatpush2.bf16.msra.mxu0 0
      %1857 = vmatprep.subr.bf16.mxu0 0
      %1858 = vmatpush2.bf16.msra.mxu0 0
      %1859 = vmatprep.subr.bf16.mxu0 0
      %1860 = vmatpush2.bf16.msra.mxu0 0
      %1861 = vmatprep.subr.bf16.mxu0 0
      %1862 = vmatpush2.bf16.msra.mxu0 0
      %1863 = vmatprep.subr.bf16.mxu0 0
      %1864 = vmatpush2.bf16.msra.mxu0 0
      %1865 = vmatprep.subr.bf16.mxu0 0
      %1866 = vmatpush2.bf16.msra.mxu0 0
      %1867 = vmatprep.subr.bf16.mxu0 0
      %1868 = vmatpush2.bf16.msra.mxu0 0
      %1869 = vmatprep.subr.bf16.mxu0 0
      %1870 = vmatpush2.bf16.msra.mxu0 0
      %1871 = vmatprep.mubr.bf16.mxu0 0
      %1872 = vmatmul.mubr.bf16.gmra.mxu0 %v1837
      %v1873 = vpop.f32.mrf.mxu0
      %v1874 = vadd.f32 %v1822, %v1873
      %v1875 = vpop.f32.mrf.mxu0
      %v1876 = vpop.f32.mrf.mxu0
      %v1877 = vadd.f32 %v1822, %v1876
      %v1878 = vpop.f32.mrf.mxu0
      %1879 = vdwg.mxu0
      %v1880 = vmul.f32 %v1874, 0.5
      %v1881 = vmul.f32 %v1877, 0.5
      %v1882 = vmul.f32 %v1874, 0.044715
      %v1883 = vmul.f32 %v1877, 0.044715
      %v1884 = vmul.f32 %v1882, %v1874
      %v1885 = vmul.f32 %v1883, %v1877
      %v1886 = vmul.f32 %v1884, %v1874
      %v1887 = vmul.f32 %v1885, %v1877
      %v1888 = vadd.f32 %v1874, %v1886
      %v1889 = vadd.f32 %v1877, %v1887
      %v1890 = vmul.f32 %v1888, 0.7978846
      %v1891 = vmul.f32 %v1889, 0.7978846
      %v1892 = vtanh.pop %v1890
      %v1893 = vtanh.pop %v1891
      %v1894 = vadd.f32 %v1892, 1.0
      %v1895 = vadd.f32 %v1893, 1.0
      %v1896 = vmul.f32 %v1880, %v1894
      %v1897 = vmul.f32 %v1881, %v1895
      %v1898 = vpack.c.bf16 %v1897, %v1896
      %v1899 = vld [vmem:[%s810] sm:$0xf]
      %v1900 = vld [vmem:[%s810 + $0x4] sm:$0xf]
      %v1901 = vld [vmem:[%s810 + $0x8] sm:$0xf]
      %v1902 = vld [vmem:[%s810 + $0xc] sm:$0xf]
      %v1903 = vld [vmem:[%s810 + $0x10] sm:$0xf]
      %v1904 = vld [vmem:[%s810 + $0x14] sm:$0xf]
      %v1905 = vld [vmem:[%s810 + $0x18] sm:$0xf]
      %v1906 = vld [vmem:[%s810 + $0x1c] sm:$0xf]
      %v1907 = vld [vmem:[%s813] sm:$0x1]
      %v1909 = vlaneseq
      %v1910 = vshrl.u32 %v1909, 7
      %v1911 = vsub.s32 0, %v1910
      %v1912 = vrot.slane %v1907, %v1911
      %v1922 = vunpack.c.l.b16 %v1899
      %v1923 = vunpack.c.l.b16 %v1900
      %v1924 = vunpack.c.l.b16 %v1901
      %v1925 = vunpack.c.l.b16 %v1902
      %v1926 = vunpack.c.l.b16 %v1903
      %v1927 = vunpack.c.l.b16 %v1904
      %v1928 = vunpack.c.l.b16 %v1905
      %v1929 = vunpack.c.l.b16 %v1906
      %v1930 = vpack.c.b16 %v1923, %v1922
      %v1931 = vpack.c.b16 %v1925, %v1924
      %v1932 = vpack.c.b16 %v1927, %v1926
      %v1933 = vpack.c.b16 %v1929, %v1928
      %vm1938 = vcmask 523264
      %v1940 = vsel %vm1938, %v1898, 0
      %1942 = vmatprep.subr.bf16.mxu0 0
      %1943 = vmatpush1.bf16.msra.mxu0 0
      %1944 = vmatprep.subr.bf16.mxu0 0
      %1945 = vmatpush1.bf16.msra.mxu0 0
      %1946 = vmatprep.subr.bf16.mxu0 0
      %1947 = vmatpush1.bf16.msra.mxu0 0
      %1948 = vmatprep.subr.bf16.mxu0 0
      %1949 = vmatpush1.bf16.msra.mxu0 0
      %1950 = vmatprep.subr.bf16.mxu0 0
      %1951 = vmatpush1.bf16.msra.mxu0 %v1933
      %1952 = vmatprep.subr.bf16.mxu0 0
      %1953 = vmatpush1.bf16.msra.mxu0 %v1932
      %1954 = vmatprep.subr.bf16.mxu0 0
      %1955 = vmatpush1.bf16.msra.mxu0 %v1931
      %1956 = vmatprep.subr.bf16.mxu0 0
      %1957 = vmatpush1.bf16.msra.mxu0 %v1930
      %1958 = vmatprep.subr.bf16.mxu0 0
      %1959 = vmatpush2.bf16.msra.mxu0 0
      %1960 = vmatprep.subr.bf16.mxu0 0
      %1961 = vmatpush2.bf16.msra.mxu0 0
      %1962 = vmatprep.subr.bf16.mxu0 0
      %1963 = vmatpush2.bf16.msra.mxu0 0
      %1964 = vmatprep.subr.bf16.mxu0 0
      %1965 = vmatpush2.bf16.msra.mxu0 0
      %1966 = vmatprep.subr.bf16.mxu0 0
      %1967 = vmatpush2.bf16.msra.mxu0 0
      %1968 = vmatprep.subr.bf16.mxu0 0
      %1969 = vmatpush2.bf16.msra.mxu0 0
      %1970 = vmatprep.subr.bf16.mxu0 0
      %1971 = vmatpush2.bf16.msra.mxu0 0
      %1972 = vmatprep.subr.bf16.mxu0 0
      %1973 = vmatpush2.bf16.msra.mxu0 0
      %1974 = vmatprep.mubr.bf16.mxu0 0
      %1975 = vmatmul.mubr.bf16.gmra.mxu0 %v1940
      %v1976 = vpop.f32.mrf.mxu0
      %v1977 = vadd.f32 %v1912, %v1976
      %v1978 = vpop.f32.mrf.mxu0
      %v1979 = vpop.f32.mrf.mxu0
      %v1980 = vadd.f32 %v1912, %v1979
      %v1981 = vpop.f32.mrf.mxu0
      %1982 = vdwg.mxu0
      %v1983 = vadd.f32 %v1766, %v1977
      %v1984 = vadd.f32 %v1767, %v1980
      %1985 = vst.msk [vmem:[#allocation2] sm:$0xff] %vm1006, %v1983
      %1986 = vst.msk [vmem:[#allocation2 + $0x8] sm:$0xff] %vm1006, %v1984
      %p1987 = scmp.eq.s32.totalorder %s32, 1
      // Predicated region
      $region109: #{encoder_decoder_forward.2} parent=103 // pred_check
        %p1988 = pneg %p1987
      $region110: #{encoder_decoder_forward.2} parent=103 // pred_check_branch
        %1990 = sbr.rel (%p1988) target = $region112
      $region111: #{encoder_decoder_forward.2} parent=103 // pred_region
        %v1991 = vld [vmem:[#allocation2] sm:$0x1]
        %v1992 = vld [vmem:[#allocation2 + $0x8] sm:$0x1]
        %v1994 = vrot.slane %v1992, 7
        %vm1996 = vcmask 1040384
        %v1997 = vsel %vm1996, %v1991, %v1994
        %v1998 = vld [vmem:[%s17] sm:$0x1]
        %v1999 = vld [vmem:[%s18] sm:$0x1]
        %vm2000 = vcmask 254976
        %v2001 = vsel %vm2000, %v1997, 0.0
        %2002 = vadd.xlane.f32.xlu0 %v2001
        %v2003 = vpop.xlane.xlu0 %2002
        %v2004 = vmul.f32 %v2003, %v1013
        %v2005 = vsub.f32 %v1997, %v2004
        %v2006 = vmul.f32 %v2005, %v2005
        %v2007 = vsel %vm2000, %v2006, 0.0
        %2008 = vadd.xlane.f32.xlu0 %v2007
        %v2009 = vpop.xlane.xlu0 %2008
        %v2010 = vmul.f32 %v2009, %v1013
        %v2011 = vadd.f32 %v2010, 1e-12
        %v2012 = vrsqrt.pop %v2011
        %v2013 = vmul.f32 %v2005, %v2012
        %v2015 = vlaneseq
        %v2016 = vshrl.u32 %v2015, 7
        %v2017 = vsub.s32 0, %v2016
        %v2018 = vrot.slane %v1998, %v2017
        %v2020 = vmul.f32 %v2013, %v2018
        %v2022 = vlaneseq
        %v2023 = vshrl.u32 %v2022, 7
        %v2024 = vsub.s32 0, %v2023
        %v2025 = vrot.slane %v1999, %v2024
        %v2027 = vadd.f32 %v2020, %v2025
        %v2028 = vpack.c.bf16 %v2027, %v2027
        %v2029 = vld [vmem:[%s19] sm:$0xf]
        %v2030 = vld [vmem:[%s19 + $0x4] sm:$0xf]
        %v2031 = vld [vmem:[%s19 + $0x8] sm:$0xf]
        %v2032 = vld [vmem:[%s19 + $0xc] sm:$0xf]
        %v2033 = vld [vmem:[%s20] sm:$0x1]
        %v2035 = vlaneseq
        %v2036 = vshrl.u32 %v2035, 7
        %v2037 = vsub.s32 0, %v2036
        %v2038 = vrot.slane %v2033, %v2037
        %v2044 = vunpack.c.l.b16 %v2029
        %v2045 = vunpack.c.l.b16 %v2030
        %v2046 = vunpack.c.l.b16 %v2031
        %v2047 = vunpack.c.l.b16 %v2032
        %v2048 = vpack.c.b16 %v2045, %v2044
        %v2049 = vpack.c.b16 %v2047, %v2046
        %v2053 = vsel %vm1006, %v2028, 0
        %2055 = vmatprep.subr.bf16.mxu0 0
        %2056 = vmatpush1.bf16.msra.mxu0 0
        %2057 = vmatprep.subr.bf16.mxu0 0
        %2058 = vmatpush1.bf16.msra.mxu0 0
        %2059 = vmatprep.subr.bf16.mxu0 0
        %2060 = vmatpush1.bf16.msra.mxu0 0
        %2061 = vmatprep.subr.bf16.mxu0 0
        %2062 = vmatpush1.bf16.msra.mxu0 0
        %2063 = vmatprep.subr.bf16.mxu0 0
        %2064 = vmatpush1.bf16.msra.mxu0 0
        %2065 = vmatprep.subr.bf16.mxu0 0
        %2066 = vmatpush1.bf16.msra.mxu0 0
        %2067 = vmatprep.subr.bf16.mxu0 0
        %2068 = vmatpush1.bf16.msra.mxu0 %v2049
        %2069 = vmatprep.subr.bf16.mxu0 0
        %2070 = vmatpush1.bf16.msra.mxu0 %v2048
        %2071 = vmatprep.subr.bf16.mxu0 0
        %2072 = vmatpush2.bf16.msra.mxu0 0
        %2073 = vmatprep.subr.bf16.mxu0 0
        %2074 = vmatpush2.bf16.msra.mxu0 0
        %2075 = vmatprep.subr.bf16.mxu0 0
        %2076 = vmatpush2.bf16.msra.mxu0 0
        %2077 = vmatprep.subr.bf16.mxu0 0
        %2078 = vmatpush2.bf16.msra.mxu0 0
        %2079 = vmatprep.subr.bf16.mxu0 0
        %2080 = vmatpush2.bf16.msra.mxu0 0
        %2081 = vmatprep.subr.bf16.mxu0 0
        %2082 = vmatpush2.bf16.msra.mxu0 0
        %2083 = vmatprep.subr.bf16.mxu0 0
        %2084 = vmatpush2.bf16.msra.mxu0 0
        %2085 = vmatprep.subr.bf16.mxu0 0
        %2086 = vmatpush2.bf16.msra.mxu0 0
        %2087 = vmatprep.mubr.bf16.mxu0 0
        %2088 = vmatmul.mubr.bf16.gmra.mxu0 %v2053
        %v2089 = vpop.f32.mrf.mxu0
        %v2090 = vadd.f32 %v2038, %v2089
        %v2091 = vpop.f32.mrf.mxu0
        %v2092 = vpop.f32.mrf.mxu0
        %v2093 = vpop.f32.mrf.mxu0
        %2094 = vdwg.mxu0
        %2095 = vst.msk [vmem:[%s21] sm:$0x3] %vm2000, %v2090
      $region112: #{encoder_decoder_forward.2} parent=103 // pred_fallthru
        _
      // Predicated region
      $region113: #{encoder_decoder_forward.2} parent=103 // pred_check
        %p2096 = pneg %p546
      $region114: #{encoder_decoder_forward.2} parent=103 // pred_check_branch
        %2098 = sbr.rel (%p2096) target = $region116
      $region115: #{encoder_decoder_forward.2} parent=103 // pred_region
        _
      $region116: #{encoder_decoder_forward.2} parent=103 // pred_fallthru
        _
      // Predicated region
      $region117: #{encoder_decoder_forward.2} parent=103 // pred_check
        %p2099 = pneg %p546
      $region118: #{encoder_decoder_forward.2} parent=103 // pred_check_branch
        %2101 = sbr.rel (%p2099) target = $region120
      $region119: #{encoder_decoder_forward.2} parent=103 // pred_region
        _
      $region120: #{encoder_decoder_forward.2} parent=103 // pred_fallthru
        _
    $region104: #{encoder_decoder_forward.2} parent=5 // pred_fallthru
      _
    %p2102 = scmp.le.s32.totalorder 2, %s27
    // Predicated region
    $region121: #{encoder_decoder_forward.2} parent=5 // pred_check
      %p2103 = pneg %p2102
    $region122: #{encoder_decoder_forward.2} parent=5 // pred_check_branch
      %2105 = sbr.rel (%p2103) target = $region124
    $region123: #{encoder_decoder_forward.2} parent=5 // pred_region
      %s2106 = ssub.s32 %s27, 2
    $region124: #{encoder_decoder_forward.2} parent=5 // pred_fallthru
      _
  $region6: #{encoder_decoder_forward.2} parent=0 // loop_footer
    %s31 = sadd.s32 1, %s27
  $region7: #{encoder_decoder_forward.2} parent=0 // loop_footer_branch
    %26 = sbr.rel target = $region3
  $region8: #{encoder_decoder_forward.2} parent=0 // loop_exit
    _

// kernel: encoder_decoder_forward.3
$region0: #{encoder_decoder_forward.3}
  #allocation0 [shape = 'u32[]', space=smem, size = 0x4, offset = 0x4, fixed_abs, tag = 'smem constant byte address 0x4 - core index']
  #allocation1 [shape = 'u32[144,128]{1,0:T(1,128)}', space=vmem, size = 0x12000, scoped, tag = 'internal scratch']
  #allocation2 [shape = 'f32[32,32]{1,0:T(8,128)}', space=vmem, size = 0x4000, scoped, tag = 'scratch operand']
  #allocation3 [shape = 'f32[2,16,16]{2,1,0:T(8,128)}', space=vmem, size = 0x4000, scoped, tag = 'scratch operand']
  %s0 = inlined_call_operand.vmem [shape: f32[32,32], index: 0, kind: input, shape index: {}]
  %s1 = inlined_call_operand.vmem [shape: f32[16,32], index: 1, kind: input, shape index: {}]
  %s2 = inlined_call_operand.vmem [shape: f32[2,1,16], index: 2, kind: input, shape index: {}]
  %s3 = inlined_call_operand.vmem [shape: s32[32,1], index: 3, kind: input, shape index: {}]
  %s4 = inlined_call_operand.vmem [shape: f32[2,1,32], index: 4, kind: input, shape index: {}]
  %s5 = inlined_call_operand.vmem [shape: f32[2,1,32], index: 5, kind: input, shape index: {}]
  %s6 = inlined_call_operand.vmem [shape: bf16[2,32,96], index: 6, kind: input, shape index: {}]
  %s7 = inlined_call_operand.vmem [shape: f32[2,1,96], index: 7, kind: input, shape index: {}]
  %s8 = inlined_call_operand.vmem [shape: bf16[2,32,32], index: 8, kind: input, shape index: {}]
  %s9 = inlined_call_operand.vmem [shape: f32[2,1,32], index: 9, kind: input, shape index: {}]
  %s10 = inlined_call_operand.vmem [shape: f32[2,1,32], index: 10, kind: input, shape index: {}]
  %s11 = inlined_call_operand.vmem [shape: f32[2,1,32], index: 11, kind: input, shape index: {}]
  %s12 = inlined_call_operand.vmem [shape: bf16[2,32,128], index: 12, kind: input, shape index: {}]
  %s13 = inlined_call_operand.vmem [shape: f32[2,1,128], index: 13, kind: input, shape index: {}]
  %s14 = inlined_call_operand.vmem [shape: bf16[2,128,32], index: 14, kind: input, shape index: {}]
  %s15 = inlined_call_operand.vmem [shape: f32[2,1,32], index: 15, kind: input, shape index: {}]
  %s16 = inlined_call_operand.vmem [shape: f32[1,32], index: 16, kind: input, shape index: {}]
  %s17 = inlined_call_operand.vmem [shape: f32[1,32], index: 17, kind: input, shape index: {}]
  %s18 = inlined_call_operand.vmem [shape: bf16[128,32], index: 18, kind: input, shape index: {}]
  %s19 = inlined_call_operand.vmem [shape: f32[32,128], index: 19, kind: output, shape index: {0}]
  %s20 = inlined_call_operand.hbm [shape: f32[1,1], index: 20, kind: output, shape index: {1}]
  %21 = xla_tuple %s19, %s20
  %s22 = sld [smem:[#allocation0]]
  $region125: #{encoder_decoder_forward.3} parent=0
    _
  %s24 = ssub.s32 1, %s22
  %s25 = scalar_select 0, %s24, %s22
  $region1: #{encoder_decoder_forward.3} parent=0
    #allocation4 [shape = 'u8[512]{0}', space=vmem, size = 0x400, scoped, tag = 'output window, operand 1, single buffered']
    #allocation5 [shape = 's32[2]{0}', space=sflag, size = 0x8, scoped, tag = 'scoped memory for encoder_decoder_forward.3']
    %26 = vsyncpa [#allocation5], 0
    loop: start=0, step=1, limit=4
    $region2: #{encoder_decoder_forward.3} parent=1 // loop_pre_header
      _
    $region3: #{encoder_decoder_forward.3} parent=1 // loop_header
      %s28 = sphi 0, %s32
      %p29 = scmp.ge.s32.totalorder %s28, 4
      %s36 = sphi 0, %s36
      %s38 = sphi 0, %s36
      %s39 = sphi 0, %s38
      %s53 = sphi 0, %s39
      %s57 = sphi 0, %s57
      %s59 = sphi 0, %s57
      %s60 = sphi 0, %s59
      %s74 = sphi 0, %s60
      %s78 = sphi 0, %s78
      %s80 = sphi 0, %s78
      %s81 = sphi 0, %s80
      %s95 = sphi 0, %s81
      %s99 = sphi 0, %s99
      %s101 = sphi 0, %s99
      %s102 = sphi 0, %s101
      %s116 = sphi 0, %s102
      %s122 = sphi 0, %s124
      %s125 = sphi 0, %s122
      %s126 = sphi 0, %s125
      %s142 = sphi 0, %s126
      %s148 = sphi 0, %s150
      %s151 = sphi 0, %s148
      %s152 = sphi 0, %s151
      %s168 = sphi 0, %s152
      %s174 = sphi 0, %s176
      %s177 = sphi 0, %s174
      %s178 = sphi 0, %s177
      %s194 = sphi 0, %s178
      %s200 = sphi 0, %s202
      %s203 = sphi 0, %s200
      %s204 = sphi 0, %s203
      %s220 = sphi 0, %s204
      %s226 = sphi 0, %s228
      %s229 = sphi 0, %s226
      %s230 = sphi 0, %s229
      %s246 = sphi 0, %s230
      %s252 = sphi 0, %s254
      %s255 = sphi 0, %s252
      %s256 = sphi 0, %s255
      %s272 = sphi 0, %s256
      %s278 = sphi 0, %s280
      %s281 = sphi 0, %s278
      %s282 = sphi 0, %s281
      %s298 = sphi 0, %s282
      %s304 = sphi 0, %s306
      %s307 = sphi 0, %s304
      %s308 = sphi 0, %s307
      %s324 = sphi 0, %s308
      %s330 = sphi 0, %s332
      %s333 = sphi 0, %s330
      %s334 = sphi 0, %s333
      %s350 = sphi 0, %s334
      %s356 = sphi 0, %s358
      %s359 = sphi 0, %s356
      %s360 = sphi 0, %s359
      %s376 = sphi 0, %s360
      %s382 = sphi 0, %s384
      %s385 = sphi 0, %s382
      %s386 = sphi 0, %s385
      %s402 = sphi 0, %s386
      %s408 = sphi 0, %s410
      %s411 = sphi 0, %s408
      %s412 = sphi 0, %s411
      %s428 = sphi 0, %s412
      %s432 = sphi 0, %s432
      %s434 = sphi 0, %s432
      %s435 = sphi 0, %s434
      %s449 = sphi 0, %s435
      %s453 = sphi 0, %s453
      %s455 = sphi 0, %s453
      %s456 = sphi 0, %s455
      %s470 = sphi 0, %s456
      %s474 = sphi 0, %s474
      %s476 = sphi 0, %s474
      %s477 = sphi 0, %s476
      %s491 = sphi 0, %s477
      %s495 = sphi 0, %s495
      %s497 = sphi 0, %s495
      %s498 = sphi 0, %s497
      %s512 = sphi 0, %s498
      %s516 = sphi 0, %s516
      %s518 = sphi 0, %s516
      %s519 = sphi 0, %s518
      %s533 = sphi 0, %s519
    $region4: #{encoder_decoder_forward.3} parent=1 // loop_header_branch
      %31 = sbr.rel (%p29) target = $region8
    $region5: #{encoder_decoder_forward.3} parent=1 // loop_body
      %s33 = ssub.s32 %s28, 1
      %s34 = ssub.s32 %s28, 2
      %s35 = sadd.s32 %s28, 1
      %s37 = sadd.s32 %s36, 1
      %p40 = scmp.eq.s32.totalorder %s28, 1
      %p41 = scmp.ne.s32.totalorder %s36, %s38
      %p42 = scmp.eq.s32.totalorder %s28, 0
      %p43 = por %p41, %p42
      %p44 = scmp.ne.s32.totalorder %s36, %s38
      %p45 = scmp.eq.s32.totalorder %s33, 1
      %p46 = por %p44, %p45
      %p47 = scmp.ne.s32.totalorder %s38, %s39
      %p48 = scmp.eq.s32.totalorder %s33, 0
      %p49 = por %p47, %p48
      %p50 = scmp.ne.s32.totalorder %s38, %s39
      %p51 = scmp.eq.s32.totalorder %s34, 1
      %p52 = por %p50, %p51
      %p54 = scmp.ne.s32.totalorder %s39, %s53
      %p55 = scmp.eq.s32.totalorder %s34, 0
      %p56 = por %p54, %p55
      %s58 = sadd.s32 %s57, 1
      %p61 = scmp.eq.s32.totalorder %s28, 1
      %p62 = scmp.ne.s32.totalorder %s57, %s59
      %p63 = scmp.eq.s32.totalorder %s28, 0
      %p64 = por %p62, %p63
      %p65 = scmp.ne.s32.totalorder %s57, %s59
      %p66 = scmp.eq.s32.totalorder %s33, 1
      %p67 = por %p65, %p66
      %p68 = scmp.ne.s32.totalorder %s59, %s60
      %p69 = scmp.eq.s32.totalorder %s33, 0
      %p70 = por %p68, %p69
      %p71 = scmp.ne.s32.totalorder %s59, %s60
      %p72 = scmp.eq.s32.totalorder %s34, 1
      %p73 = por %p71, %p72
      %p75 = scmp.ne.s32.totalorder %s60, %s74
      %p76 = scmp.eq.s32.totalorder %s34, 0
      %p77 = por %p75, %p76
      %s79 = sadd.s32 %s78, 1
      %p82 = scmp.eq.s32.totalorder %s28, 1
      %p83 = scmp.ne.s32.totalorder %s78, %s80
      %p84 = scmp.eq.s32.totalorder %s28, 0
      %p85 = por %p83, %p84
      %p86 = scmp.ne.s32.totalorder %s78, %s80
      %p87 = scmp.eq.s32.totalorder %s33, 1
      %p88 = por %p86, %p87
      %p89 = scmp.ne.s32.totalorder %s80, %s81
      %p90 = scmp.eq.s32.totalorder %s33, 0
      %p91 = por %p89, %p90
      %p92 = scmp.ne.s32.totalorder %s80, %s81
      %p93 = scmp.eq.s32.totalorder %s34, 1
      %p94 = por %p92, %p93
      %p96 = scmp.ne.s32.totalorder %s81, %s95
      %p97 = scmp.eq.s32.totalorder %s34, 0
      %p98 = por %p96, %p97
      %s100 = sadd.s32 %s99, 1
      %p103 = scmp.eq.s32.totalorder %s28, 1
      %p104 = scmp.ne.s32.totalorder %s99, %s101
      %p105 = scmp.eq.s32.totalorder %s28, 0
      %p106 = por %p104, %p105
      %p107 = scmp.ne.s32.totalorder %s99, %s101
      %p108 = scmp.eq.s32.totalorder %s33, 1
      %p109 = por %p107, %p108
      %p110 = scmp.ne.s32.totalorder %s101, %s102
      %p111 = scmp.eq.s32.totalorder %s33, 0
      %p112 = por %p110, %p111
      %p113 = scmp.ne.s32.totalorder %s101, %s102
      %p114 = scmp.eq.s32.totalorder %s34, 1
      %p115 = por %p113, %p114
      %p117 = scmp.ne.s32.totalorder %s102, %s116
      %p118 = scmp.eq.s32.totalorder %s34, 0
      %p119 = por %p117, %p118
      %s120 = ssub.s32 %s28, %s35
      %p121 = scmp.eq.s32.totalorder %s120, 0
      %s123 = sadd.s32 %s122, 1
      %s124 = scalar_select %p121, %s122, %s123
      %p127 = pneg %p121
      %p128 = scmp.eq.s32.totalorder %s28, 1
      %p129 = por %p127, %p128
      %p130 = scmp.ne.s32.totalorder %s122, %s125
      %p131 = scmp.eq.s32.totalorder %s28, 0
      %p132 = por %p130, %p131
      %p133 = scmp.ne.s32.totalorder %s122, %s125
      %p134 = scmp.eq.s32.totalorder %s33, 1
      %p135 = por %p133, %p134
      %p136 = scmp.ne.s32.totalorder %s125, %s126
      %p137 = scmp.eq.s32.totalorder %s33, 0
      %p138 = por %p136, %p137
      %p139 = scmp.ne.s32.totalorder %s125, %s126
      %p140 = scmp.eq.s32.totalorder %s34, 1
      %p141 = por %p139, %p140
      %p143 = scmp.ne.s32.totalorder %s126, %s142
      %p144 = scmp.eq.s32.totalorder %s34, 0
      %p145 = por %p143, %p144
      %s146 = ssub.s32 %s28, %s35
      %p147 = scmp.eq.s32.totalorder %s146, 0
      %s149 = sadd.s32 %s148, 1
      %s150 = scalar_select %p147, %s148, %s149
      %p153 = pneg %p147
      %p154 = scmp.eq.s32.totalorder %s28, 1
      %p155 = por %p153, %p154
      %p156 = scmp.ne.s32.totalorder %s148, %s151
      %p157 = scmp.eq.s32.totalorder %s28, 0
      %p158 = por %p156, %p157
      %p159 = scmp.ne.s32.totalorder %s148, %s151
      %p160 = scmp.eq.s32.totalorder %s33, 1
      %p161 = por %p159, %p160
      %p162 = scmp.ne.s32.totalorder %s151, %s152
      %p163 = scmp.eq.s32.totalorder %s33, 0
      %p164 = por %p162, %p163
      %p165 = scmp.ne.s32.totalorder %s151, %s152
      %p166 = scmp.eq.s32.totalorder %s34, 1
      %p167 = por %p165, %p166
      %p169 = scmp.ne.s32.totalorder %s152, %s168
      %p170 = scmp.eq.s32.totalorder %s34, 0
      %p171 = por %p169, %p170
      %s172 = ssub.s32 %s28, %s35
      %p173 = scmp.eq.s32.totalorder %s172, 0
      %s175 = sadd.s32 %s174, 1
      %s176 = scalar_select %p173, %s174, %s175
      %p179 = pneg %p173
      %p180 = scmp.eq.s32.totalorder %s28, 1
      %p181 = por %p179, %p180
      %p182 = scmp.ne.s32.totalorder %s174, %s177
      %p183 = scmp.eq.s32.totalorder %s28, 0
      %p184 = por %p182, %p183
      %p185 = scmp.ne.s32.totalorder %s174, %s177
      %p186 = scmp.eq.s32.totalorder %s33, 1
      %p187 = por %p185, %p186
      %p188 = scmp.ne.s32.totalorder %s177, %s178
      %p189 = scmp.eq.s32.totalorder %s33, 0
      %p190 = por %p188, %p189
      %p191 = scmp.ne.s32.totalorder %s177, %s178
      %p192 = scmp.eq.s32.totalorder %s34, 1
      %p193 = por %p191, %p192
      %p195 = scmp.ne.s32.totalorder %s178, %s194
      %p196 = scmp.eq.s32.totalorder %s34, 0
      %p197 = por %p195, %p196
      %s198 = ssub.s32 %s28, %s35
      %p199 = scmp.eq.s32.totalorder %s198, 0
      %s201 = sadd.s32 %s200, 1
      %s202 = scalar_select %p199, %s200, %s201
      %p205 = pneg %p199
      %p206 = scmp.eq.s32.totalorder %s28, 1
      %p207 = por %p205, %p206
      %p208 = scmp.ne.s32.totalorder %s200, %s203
      %p209 = scmp.eq.s32.totalorder %s28, 0
      %p210 = por %p208, %p209
      %p211 = scmp.ne.s32.totalorder %s200, %s203
      %p212 = scmp.eq.s32.totalorder %s33, 1
      %p213 = por %p211, %p212
      %p214 = scmp.ne.s32.totalorder %s203, %s204
      %p215 = scmp.eq.s32.totalorder %s33, 0
      %p216 = por %p214, %p215
      %p217 = scmp.ne.s32.totalorder %s203, %s204
      %p218 = scmp.eq.s32.totalorder %s34, 1
      %p219 = por %p217, %p218
      %p221 = scmp.ne.s32.totalorder %s204, %s220
      %p222 = scmp.eq.s32.totalorder %s34, 0
      %p223 = por %p221, %p222
      %s224 = ssub.s32 %s28, %s35
      %p225 = scmp.eq.s32.totalorder %s224, 0
      %s227 = sadd.s32 %s226, 1
      %s228 = scalar_select %p225, %s226, %s227
      %p231 = pneg %p225
      %p232 = scmp.eq.s32.totalorder %s28, 1
      %p233 = por %p231, %p232
      %p234 = scmp.ne.s32.totalorder %s226, %s229
      %p235 = scmp.eq.s32.totalorder %s28, 0
      %p236 = por %p234, %p235
      %p237 = scmp.ne.s32.totalorder %s226, %s229
      %p238 = scmp.eq.s32.totalorder %s33, 1
      %p239 = por %p237, %p238
      %p240 = scmp.ne.s32.totalorder %s229, %s230
      %p241 = scmp.eq.s32.totalorder %s33, 0
      %p242 = por %p240, %p241
      %p243 = scmp.ne.s32.totalorder %s229, %s230
      %p244 = scmp.eq.s32.totalorder %s34, 1
      %p245 = por %p243, %p244
      %p247 = scmp.ne.s32.totalorder %s230, %s246
      %p248 = scmp.eq.s32.totalorder %s34, 0
      %p249 = por %p247, %p248
      %s250 = ssub.s32 %s28, %s35
      %p251 = scmp.eq.s32.totalorder %s250, 0
      %s253 = sadd.s32 %s252, 1
      %s254 = scalar_select %p251, %s252, %s253
      %p257 = pneg %p251
      %p258 = scmp.eq.s32.totalorder %s28, 1
      %p259 = por %p257, %p258
      %p260 = scmp.ne.s32.totalorder %s252, %s255
      %p261 = scmp.eq.s32.totalorder %s28, 0
      %p262 = por %p260, %p261
      %p263 = scmp.ne.s32.totalorder %s252, %s255
      %p264 = scmp.eq.s32.totalorder %s33, 1
      %p265 = por %p263, %p264
      %p266 = scmp.ne.s32.totalorder %s255, %s256
      %p267 = scmp.eq.s32.totalorder %s33, 0
      %p268 = por %p266, %p267
      %p269 = scmp.ne.s32.totalorder %s255, %s256
      %p270 = scmp.eq.s32.totalorder %s34, 1
      %p271 = por %p269, %p270
      %p273 = scmp.ne.s32.totalorder %s256, %s272
      %p274 = scmp.eq.s32.totalorder %s34, 0
      %p275 = por %p273, %p274
      %s276 = ssub.s32 %s28, %s35
      %p277 = scmp.eq.s32.totalorder %s276, 0
      %s279 = sadd.s32 %s278, 1
      %s280 = scalar_select %p277, %s278, %s279
      %p283 = pneg %p277
      %p284 = scmp.eq.s32.totalorder %s28, 1
      %p285 = por %p283, %p284
      %p286 = scmp.ne.s32.totalorder %s278, %s281
      %p287 = scmp.eq.s32.totalorder %s28, 0
      %p288 = por %p286, %p287
      %p289 = scmp.ne.s32.totalorder %s278, %s281
      %p290 = scmp.eq.s32.totalorder %s33, 1
      %p291 = por %p289, %p290
      %p292 = scmp.ne.s32.totalorder %s281, %s282
      %p293 = scmp.eq.s32.totalorder %s33, 0
      %p294 = por %p292, %p293
      %p295 = scmp.ne.s32.totalorder %s281, %s282
      %p296 = scmp.eq.s32.totalorder %s34, 1
      %p297 = por %p295, %p296
      %p299 = scmp.ne.s32.totalorder %s282, %s298
      %p300 = scmp.eq.s32.totalorder %s34, 0
      %p301 = por %p299, %p300
      %s302 = ssub.s32 %s28, %s35
      %p303 = scmp.eq.s32.totalorder %s302, 0
      %s305 = sadd.s32 %s304, 1
      %s306 = scalar_select %p303, %s304, %s305
      %p309 = pneg %p303
      %p310 = scmp.eq.s32.totalorder %s28, 1
      %p311 = por %p309, %p310
      %p312 = scmp.ne.s32.totalorder %s304, %s307
      %p313 = scmp.eq.s32.totalorder %s28, 0
      %p314 = por %p312, %p313
      %p315 = scmp.ne.s32.totalorder %s304, %s307
      %p316 = scmp.eq.s32.totalorder %s33, 1
      %p317 = por %p315, %p316
      %p318 = scmp.ne.s32.totalorder %s307, %s308
      %p319 = scmp.eq.s32.totalorder %s33, 0
      %p320 = por %p318, %p319
      %p321 = scmp.ne.s32.totalorder %s307, %s308
      %p322 = scmp.eq.s32.totalorder %s34, 1
      %p323 = por %p321, %p322
      %p325 = scmp.ne.s32.totalorder %s308, %s324
      %p326 = scmp.eq.s32.totalorder %s34, 0
      %p327 = por %p325, %p326
      %s328 = ssub.s32 %s28, %s35
      %p329 = scmp.eq.s32.totalorder %s328, 0
      %s331 = sadd.s32 %s330, 1
      %s332 = scalar_select %p329, %s330, %s331
      %p335 = pneg %p329
      %p336 = scmp.eq.s32.totalorder %s28, 1
      %p337 = por %p335, %p336
      %p338 = scmp.ne.s32.totalorder %s330, %s333
      %p339 = scmp.eq.s32.totalorder %s28, 0
      %p340 = por %p338, %p339
      %p341 = scmp.ne.s32.totalorder %s330, %s333
      %p342 = scmp.eq.s32.totalorder %s33, 1
      %p343 = por %p341, %p342
      %p344 = scmp.ne.s32.totalorder %s333, %s334
      %p345 = scmp.eq.s32.totalorder %s33, 0
      %p346 = por %p344, %p345
      %p347 = scmp.ne.s32.totalorder %s333, %s334
      %p348 = scmp.eq.s32.totalorder %s34, 1
      %p349 = por %p347, %p348
      %p351 = scmp.ne.s32.totalorder %s334, %s350
      %p352 = scmp.eq.s32.totalorder %s34, 0
      %p353 = por %p351, %p352
      %s354 = ssub.s32 %s28, %s35
      %p355 = scmp.eq.s32.totalorder %s354, 0
      %s357 = sadd.s32 %s356, 1
      %s358 = scalar_select %p355, %s356, %s357
      %p361 = pneg %p355
      %p362 = scmp.eq.s32.totalorder %s28, 1
      %p363 = por %p361, %p362
      %p364 = scmp.ne.s32.totalorder %s356, %s359
      %p365 = scmp.eq.s32.totalorder %s28, 0
      %p366 = por %p364, %p365
      %p367 = scmp.ne.s32.totalorder %s356, %s359
      %p368 = scmp.eq.s32.totalorder %s33, 1
      %p369 = por %p367, %p368
      %p370 = scmp.ne.s32.totalorder %s359, %s360
      %p371 = scmp.eq.s32.totalorder %s33, 0
      %p372 = por %p370, %p371
      %p373 = scmp.ne.s32.totalorder %s359, %s360
      %p374 = scmp.eq.s32.totalorder %s34, 1
      %p375 = por %p373, %p374
      %p377 = scmp.ne.s32.totalorder %s360, %s376
      %p378 = scmp.eq.s32.totalorder %s34, 0
      %p379 = por %p377, %p378
      %s380 = ssub.s32 %s28, %s35
      %p381 = scmp.eq.s32.totalorder %s380, 0
      %s383 = sadd.s32 %s382, 1
      %s384 = scalar_select %p381, %s382, %s383
      %p387 = pneg %p381
      %p388 = scmp.eq.s32.totalorder %s28, 1
      %p389 = por %p387, %p388
      %p390 = scmp.ne.s32.totalorder %s382, %s385
      %p391 = scmp.eq.s32.totalorder %s28, 0
      %p392 = por %p390, %p391
      %p393 = scmp.ne.s32.totalorder %s382, %s385
      %p394 = scmp.eq.s32.totalorder %s33, 1
      %p395 = por %p393, %p394
      %p396 = scmp.ne.s32.totalorder %s385, %s386
      %p397 = scmp.eq.s32.totalorder %s33, 0
      %p398 = por %p396, %p397
      %p399 = scmp.ne.s32.totalorder %s385, %s386
      %p400 = scmp.eq.s32.totalorder %s34, 1
      %p401 = por %p399, %p400
      %p403 = scmp.ne.s32.totalorder %s386, %s402
      %p404 = scmp.eq.s32.totalorder %s34, 0
      %p405 = por %p403, %p404
      %s406 = ssub.s32 %s28, %s35
      %p407 = scmp.eq.s32.totalorder %s406, 0
      %s409 = sadd.s32 %s408, 1
      %s410 = scalar_select %p407, %s408, %s409
      %p413 = pneg %p407
      %p414 = scmp.eq.s32.totalorder %s28, 1
      %p415 = por %p413, %p414
      %p416 = scmp.ne.s32.totalorder %s408, %s411
      %p417 = scmp.eq.s32.totalorder %s28, 0
      %p418 = por %p416, %p417
      %p419 = scmp.ne.s32.totalorder %s408, %s411
      %p420 = scmp.eq.s32.totalorder %s33, 1
      %p421 = por %p419, %p420
      %p422 = scmp.ne.s32.totalorder %s411, %s412
      %p423 = scmp.eq.s32.totalorder %s33, 0
      %p424 = por %p422, %p423
      %p425 = scmp.ne.s32.totalorder %s411, %s412
      %p426 = scmp.eq.s32.totalorder %s34, 1
      %p427 = por %p425, %p426
      %p429 = scmp.ne.s32.totalorder %s412, %s428
      %p430 = scmp.eq.s32.totalorder %s34, 0
      %p431 = por %p429, %p430
      %s433 = sadd.s32 %s432, 1
      %p436 = scmp.eq.s32.totalorder %s28, 1
      %p437 = scmp.ne.s32.totalorder %s432, %s434
      %p438 = scmp.eq.s32.totalorder %s28, 0
      %p439 = por %p437, %p438
      %p440 = scmp.ne.s32.totalorder %s432, %s434
      %p441 = scmp.eq.s32.totalorder %s33, 1
      %p442 = por %p440, %p441
      %p443 = scmp.ne.s32.totalorder %s434, %s435
      %p444 = scmp.eq.s32.totalorder %s33, 0
      %p445 = por %p443, %p444
      %p446 = scmp.ne.s32.totalorder %s434, %s435
      %p447 = scmp.eq.s32.totalorder %s34, 1
      %p448 = por %p446, %p447
      %p450 = scmp.ne.s32.totalorder %s435, %s449
      %p451 = scmp.eq.s32.totalorder %s34, 0
      %p452 = por %p450, %p451
      %s454 = sadd.s32 %s453, 1
      %p457 = scmp.eq.s32.totalorder %s28, 1
      %p458 = scmp.ne.s32.totalorder %s453, %s455
      %p459 = scmp.eq.s32.totalorder %s28, 0
      %p460 = por %p458, %p459
      %p461 = scmp.ne.s32.totalorder %s453, %s455
      %p462 = scmp.eq.s32.totalorder %s33, 1
      %p463 = por %p461, %p462
      %p464 = scmp.ne.s32.totalorder %s455, %s456
      %p465 = scmp.eq.s32.totalorder %s33, 0
      %p466 = por %p464, %p465
      %p467 = scmp.ne.s32.totalorder %s455, %s456
      %p468 = scmp.eq.s32.totalorder %s34, 1
      %p469 = por %p467, %p468
      %p471 = scmp.ne.s32.totalorder %s456, %s470
      %p472 = scmp.eq.s32.totalorder %s34, 0
      %p473 = por %p471, %p472
      %s475 = sadd.s32 %s474, 1
      %p478 = scmp.eq.s32.totalorder %s28, 1
      %p479 = scmp.ne.s32.totalorder %s474, %s476
      %p480 = scmp.eq.s32.totalorder %s28, 0
      %p481 = por %p479, %p480
      %p482 = scmp.ne.s32.totalorder %s474, %s476
      %p483 = scmp.eq.s32.totalorder %s33, 1
      %p484 = por %p482, %p483
      %p485 = scmp.ne.s32.totalorder %s476, %s477
      %p486 = scmp.eq.s32.totalorder %s33, 0
      %p487 = por %p485, %p486
      %p488 = scmp.ne.s32.totalorder %s476, %s477
      %p489 = scmp.eq.s32.totalorder %s34, 1
      %p490 = por %p488, %p489
      %p492 = scmp.ne.s32.totalorder %s477, %s491
      %p493 = scmp.eq.s32.totalorder %s34, 0
      %p494 = por %p492, %p493
      %s496 = sadd.s32 %s495, 1
      %p499 = scmp.eq.s32.totalorder %s28, 1
      %p500 = scmp.ne.s32.totalorder %s495, %s497
      %p501 = scmp.eq.s32.totalorder %s28, 0
      %p502 = por %p500, %p501
      %p503 = scmp.ne.s32.totalorder %s495, %s497
      %p504 = scmp.eq.s32.totalorder %s33, 1
      %p505 = por %p503, %p504
      %p506 = scmp.ne.s32.totalorder %s497, %s498
      %p507 = scmp.eq.s32.totalorder %s33, 0
      %p508 = por %p506, %p507
      %p509 = scmp.ne.s32.totalorder %s497, %s498
      %p510 = scmp.eq.s32.totalorder %s34, 1
      %p511 = por %p509, %p510
      %p513 = scmp.ne.s32.totalorder %s498, %s512
      %p514 = scmp.eq.s32.totalorder %s34, 0
      %p515 = por %p513, %p514
      %s517 = sadd.s32 %s516, 1
      %p520 = scmp.eq.s32.totalorder %s28, 1
      %p521 = scmp.ne.s32.totalorder %s516, %s518
      %p522 = scmp.eq.s32.totalorder %s28, 0
      %p523 = por %p521, %p522
      %p524 = scmp.ne.s32.totalorder %s516, %s518
      %p525 = scmp.eq.s32.totalorder %s33, 1
      %p526 = por %p524, %p525
      %p527 = scmp.ne.s32.totalorder %s518, %s519
      %p528 = scmp.eq.s32.totalorder %s33, 0
      %p529 = por %p527, %p528
      %p530 = scmp.ne.s32.totalorder %s518, %s519
      %p531 = scmp.eq.s32.totalorder %s34, 1
      %p532 = por %p530, %p531
      %p534 = scmp.ne.s32.totalorder %s519, %s533
      %p535 = scmp.eq.s32.totalorder %s34, 0
      %p536 = por %p534, %p535
      %p537 = scmp.le.s32.totalorder 1, %s28
      %p538 = scmp.lt.s32.totalorder %s28, 3
      %p539 = pnand %p537, %p538
      %p540 = pneg %p539
      // Predicated region
      $region9: #{encoder_decoder_forward.3} parent=5 // pred_check
        _
      $region10: #{encoder_decoder_forward.3} parent=5 // pred_check_branch
        %542 = sbr.rel (%p539) target = $region12
      $region11: #{encoder_decoder_forward.3} parent=5 // pred_region
        %s543 = ssub.s32 %s28, 1
        // Predicated region
        $region13: #{encoder_decoder_forward.3} parent=11 // pred_check
          %p544 = pneg %p49
        $region14: #{encoder_decoder_forward.3} parent=11 // pred_check_branch
          %546 = sbr.rel (%p544) target = $region16
        $region15: #{encoder_decoder_forward.3} parent=11 // pred_region
          _
        $region16: #{encoder_decoder_forward.3} parent=11 // pred_fallthru
          _
        // Predicated region
        $region17: #{encoder_decoder_forward.3} parent=11 // pred_check
          %p547 = pneg %p70
        $region18: #{encoder_decoder_forward.3} parent=11 // pred_check_branch
          %549 = sbr.rel (%p547) target = $region20
        $region19: #{encoder_decoder_forward.3} parent=11 // pred_region
          _
        $region20: #{encoder_decoder_forward.3} parent=11 // pred_fallthru
          _
        // Predicated region
        $region21: #{encoder_decoder_forward.3} parent=11 // pred_check
          %p550 = pneg %p91
        $region22: #{encoder_decoder_forward.3} parent=11 // pred_check_branch
          %552 = sbr.rel (%p550) target = $region24
        $region23: #{encoder_decoder_forward.3} parent=11 // pred_region
          _
        $region24: #{encoder_decoder_forward.3} parent=11 // pred_fallthru
          _
        // Predicated region
        $region25: #{encoder_decoder_forward.3} parent=11 // pred_check
          %p553 = pneg %p112
        $region26: #{encoder_decoder_forward.3} parent=11 // pred_check_branch
          %555 = sbr.rel (%p553) target = $region28
        $region27: #{encoder_decoder_forward.3} parent=11 // pred_region
          _
        $region28: #{encoder_decoder_forward.3} parent=11 // pred_fallthru
          _
        // Predicated region
        $region29: #{encoder_decoder_forward.3} parent=11 // pred_check
          %p556 = pneg %p445
        $region30: #{encoder_decoder_forward.3} parent=11 // pred_check_branch
          %558 = sbr.rel (%p556) target = $region32
        $region31: #{encoder_decoder_forward.3} parent=11 // pred_region
          _
        $region32: #{encoder_decoder_forward.3} parent=11 // pred_fallthru
          _
        // Predicated region
        $region33: #{encoder_decoder_forward.3} parent=11 // pred_check
          %p559 = pneg %p466
        $region34: #{encoder_decoder_forward.3} parent=11 // pred_check_branch
          %561 = sbr.rel (%p559) target = $region36
        $region35: #{encoder_decoder_forward.3} parent=11 // pred_region
          _
        $region36: #{encoder_decoder_forward.3} parent=11 // pred_fallthru
          _
        // Predicated region
        $region37: #{encoder_decoder_forward.3} parent=11 // pred_check
          %p562 = pneg %p487
        $region38: #{encoder_decoder_forward.3} parent=11 // pred_check_branch
          %564 = sbr.rel (%p562) target = $region40
        $region39: #{encoder_decoder_forward.3} parent=11 // pred_region
          _
        $region40: #{encoder_decoder_forward.3} parent=11 // pred_fallthru
          _
      $region12: #{encoder_decoder_forward.3} parent=5 // pred_fallthru
        _
      %p565 = scmp.lt.s32.totalorder %s28, 2
      // Predicated region
      $region41: #{encoder_decoder_forward.3} parent=5 // pred_check
        %p566 = pneg %p565
      $region42: #{encoder_decoder_forward.3} parent=5 // pred_check_branch
        %568 = sbr.rel (%p566) target = $region44
      $region43: #{encoder_decoder_forward.3} parent=5 // pred_region
        // Predicated region
        $region45: #{encoder_decoder_forward.3} parent=43 // pred_check
          %p569 = pneg %p132
        $region46: #{encoder_decoder_forward.3} parent=43 // pred_check_branch
          %571 = sbr.rel (%p569) target = $region48
        $region47: #{encoder_decoder_forward.3} parent=43 // pred_region
          %p572 = scmp.lt.s32.totalorder %s28, 1
          %s573 = scalar_select %p572, %s28, 1
          %s574 = scalar_lea.vmem %s4, %s573
        $region48: #{encoder_decoder_forward.3} parent=43 // pred_fallthru
          _
        // Predicated region
        $region49: #{encoder_decoder_forward.3} parent=43 // pred_check
          %p575 = pneg %p158
        $region50: #{encoder_decoder_forward.3} parent=43 // pred_check_branch
          %577 = sbr.rel (%p575) target = $region52
        $region51: #{encoder_decoder_forward.3} parent=43 // pred_region
          %p578 = scmp.lt.s32.totalorder %s28, 1
          %s579 = scalar_select %p578, %s28, 1
          %s580 = scalar_lea.vmem %s5, %s579
        $region52: #{encoder_decoder_forward.3} parent=43 // pred_fallthru
          _
        // Predicated region
        $region53: #{encoder_decoder_forward.3} parent=43 // pred_check
          %p581 = pneg %p184
        $region54: #{encoder_decoder_forward.3} parent=43 // pred_check_branch
          %583 = sbr.rel (%p581) target = $region56
        $region55: #{encoder_decoder_forward.3} parent=43 // pred_region
          %p584 = scmp.lt.s32.totalorder %s28, 1
          %s585 = scalar_select %p584, %s28, 1
          %s586 = smul.addr %s585, 4
          %s587 = smul.addr %s586, 4
          %s588 = scalar_lea.vmem %s6, %s587
        $region56: #{encoder_decoder_forward.3} parent=43 // pred_fallthru
          _
        // Predicated region
        $region57: #{encoder_decoder_forward.3} parent=43 // pred_check
          %p589 = pneg %p210
        $region58: #{encoder_decoder_forward.3} parent=43 // pred_check_branch
          %591 = sbr.rel (%p589) target = $region60
        $region59: #{encoder_decoder_forward.3} parent=43 // pred_region
          %p592 = scmp.lt.s32.totalorder %s28, 1
          %s593 = scalar_select %p592, %s28, 1
          %s594 = scalar_lea.vmem %s7, %s593
        $region60: #{encoder_decoder_forward.3} parent=43 // pred_fallthru
          _
        // Predicated region
        $region61: #{encoder_decoder_forward.3} parent=43 // pred_check
          %p595 = pneg %p236
        $region62: #{encoder_decoder_forward.3} parent=43 // pred_check_branch
          %597 = sbr.rel (%p595) target = $region64
        $region63: #{encoder_decoder_forward.3} parent=43 // pred_region
          %p598 = scmp.lt.s32.totalorder %s28, 1
          %s599 = scalar_select %p598, %s28, 1
          %s600 = smul.addr %s599, 4
          %s601 = smul.addr %s600, 4
          %s602 = scalar_lea.vmem %s8, %s601
        $region64: #{encoder_decoder_forward.3} parent=43 // pred_fallthru
          _
        // Predicated region
        $region65: #{encoder_decoder_forward.3} parent=43 // pred_check
          %p603 = pneg %p262
        $region66: #{encoder_decoder_forward.3} parent=43 // pred_check_branch
          %605 = sbr.rel (%p603) target = $region68
        $region67: #{encoder_decoder_forward.3} parent=43 // pred_region
          %p606 = scmp.lt.s32.totalorder %s28, 1
          %s607 = scalar_select %p606, %s28, 1
          %s608 = scalar_lea.vmem %s9, %s607
        $region68: #{encoder_decoder_forward.3} parent=43 // pred_fallthru
          _
        // Predicated region
        $region69: #{encoder_decoder_forward.3} parent=43 // pred_check
          %p609 = pneg %p288
        $region70: #{encoder_decoder_forward.3} parent=43 // pred_check_branch
          %611 = sbr.rel (%p609) target = $region72
        $region71: #{encoder_decoder_forward.3} parent=43 // pred_region
          %p612 = scmp.lt.s32.totalorder %s28, 1
          %s613 = scalar_select %p612, %s28, 1
          %s614 = scalar_lea.vmem %s10, %s613
        $region72: #{encoder_decoder_forward.3} parent=43 // pred_fallthru
          _
        // Predicated region
        $region73: #{encoder_decoder_forward.3} parent=43 // pred_check
          %p615 = pneg %p314
        $region74: #{encoder_decoder_forward.3} parent=43 // pred_check_branch
          %617 = sbr.rel (%p615) target = $region76
        $region75: #{encoder_decoder_forward.3} parent=43 // pred_region
          %p618 = scmp.lt.s32.totalorder %s28, 1
          %s619 = scalar_select %p618, %s28, 1
          %s620 = scalar_lea.vmem %s11, %s619
        $region76: #{encoder_decoder_forward.3} parent=43 // pred_fallthru
          _
        // Predicated region
        $region77: #{encoder_decoder_forward.3} parent=43 // pred_check
          %p621 = pneg %p340
        $region78: #{encoder_decoder_forward.3} parent=43 // pred_check_branch
          %623 = sbr.rel (%p621) target = $region80
        $region79: #{encoder_decoder_forward.3} parent=43 // pred_region
          %p624 = scmp.lt.s32.totalorder %s28, 1
          %s625 = scalar_select %p624, %s28, 1
          %s626 = smul.addr %s625, 4
          %s627 = smul.addr %s626, 4
          %s628 = scalar_lea.vmem %s12, %s627
        $region80: #{encoder_decoder_forward.3} parent=43 // pred_fallthru
          _
        // Predicated region
        $region81: #{encoder_decoder_forward.3} parent=43 // pred_check
          %p629 = pneg %p366
        $region82: #{encoder_decoder_forward.3} parent=43 // pred_check_branch
          %631 = sbr.rel (%p629) target = $region84
        $region83: #{encoder_decoder_forward.3} parent=43 // pred_region
          %p632 = scmp.lt.s32.totalorder %s28, 1
          %s633 = scalar_select %p632, %s28, 1
          %s634 = scalar_lea.vmem %s13, %s633
        $region84: #{encoder_decoder_forward.3} parent=43 // pred_fallthru
          _
        // Predicated region
        $region85: #{encoder_decoder_forward.3} parent=43 // pred_check
          %p635 = pneg %p392
        $region86: #{encoder_decoder_forward.3} parent=43 // pred_check_branch
          %637 = sbr.rel (%p635) target = $region88
        $region87: #{encoder_decoder_forward.3} parent=43 // pred_region
          %p638 = scmp.lt.s32.totalorder %s28, 1
          %s639 = scalar_select %p638, %s28, 1
          %s640 = smul.addr %s639, 16
          %s641 = smul.addr %s640, 4
          %s642 = scalar_lea.vmem %s14, %s641
        $region88: #{encoder_decoder_forward.3} parent=43 // pred_fallthru
          _
        // Predicated region
        $region89: #{encoder_decoder_forward.3} parent=43 // pred_check
          %p643 = pneg %p418
        $region90: #{encoder_decoder_forward.3} parent=43 // pred_check_branch
          %645 = sbr.rel (%p643) target = $region92
        $region91: #{encoder_decoder_forward.3} parent=43 // pred_region
          %p646 = scmp.lt.s32.totalorder %s28, 1
          %s647 = scalar_select %p646, %s28, 1
          %s648 = scalar_lea.vmem %s15, %s647
        $region92: #{encoder_decoder_forward.3} parent=43 // pred_fallthru
          _
      $region44: #{encoder_decoder_forward.3} parent=5 // pred_fallthru
        _
      %p649 = scmp.le.s32.totalorder 1, %s28
      %p650 = scmp.lt.s32.totalorder %s28, 3
      %p651 = pnand %p649, %p650
      %p652 = pneg %p651
      // Predicated region
      $region93: #{encoder_decoder_forward.3} parent=5 // pred_check
        _
      $region94: #{encoder_decoder_forward.3} parent=5 // pred_check_branch
        %654 = sbr.rel (%p651) target = $region96
      $region95: #{encoder_decoder_forward.3} parent=5 // pred_region
        %s655 = ssub.s32 %s28, 1
        %p656 = pneg %p49
        %p657 = pneg %p46
        %p658 = pneg %p70
        %p659 = pneg %p67
        %p660 = pneg %p91
        %p661 = pneg %p88
        %p662 = pneg %p112
        %p663 = pneg %p109
        %p664 = scmp.lt.s32.totalorder %s33, 1
        %s665 = scalar_select %p664, %s33, 1
        %s666 = scalar_lea.vmem %s4, %s665
        %p667 = pneg %p138
        %p668 = pneg %p135
        %p669 = scmp.lt.s32.totalorder %s33, 1
        %s670 = scalar_select %p669, %s33, 1
        %s671 = scalar_lea.vmem %s5, %s670
        %p672 = pneg %p164
        %p673 = pneg %p161
        %p674 = scmp.lt.s32.totalorder %s33, 1
        %s675 = scalar_select %p674, %s33, 1
        %s676 = smul.addr %s675, 4
        %s677 = smul.addr %s676, 4
        %s678 = scalar_lea.vmem %s6, %s677
        %p679 = pneg %p190
        %p680 = pneg %p187
        %p681 = scmp.lt.s32.totalorder %s33, 1
        %s682 = scalar_select %p681, %s33, 1
        %s683 = scalar_lea.vmem %s7, %s682
        %p684 = pneg %p216
        %p685 = pneg %p213
        %p686 = scmp.lt.s32.totalorder %s33, 1
        %s687 = scalar_select %p686, %s33, 1
        %s688 = smul.addr %s687, 4
        %s689 = smul.addr %s688, 4
        %s690 = scalar_lea.vmem %s8, %s689
        %p691 = pneg %p242
        %p692 = pneg %p239
        %p693 = scmp.lt.s32.totalorder %s33, 1
        %s694 = scalar_select %p693, %s33, 1
        %s695 = scalar_lea.vmem %s9, %s694
        %p696 = pneg %p268
        %p697 = pneg %p265
        %p698 = scmp.lt.s32.totalorder %s33, 1
        %s699 = scalar_select %p698, %s33, 1
        %s700 = scalar_lea.vmem %s10, %s699
        %p701 = pneg %p294
        %p702 = pneg %p291
        %p703 = scmp.lt.s32.totalorder %s33, 1
        %s704 = scalar_select %p703, %s33, 1
        %s705 = scalar_lea.vmem %s11, %s704
        %p706 = pneg %p320
        %p707 = pneg %p317
        %p708 = scmp.lt.s32.totalorder %s33, 1
        %s709 = scalar_select %p708, %s33, 1
        %s710 = smul.addr %s709, 4
        %s711 = smul.addr %s710, 4
        %s712 = scalar_lea.vmem %s12, %s711
        %p713 = pneg %p346
        %p714 = pneg %p343
        %p715 = scmp.lt.s32.totalorder %s33, 1
        %s716 = scalar_select %p715, %s33, 1
        %s717 = scalar_lea.vmem %s13, %s716
        %p718 = pneg %p372
        %p719 = pneg %p369
        %p720 = scmp.lt.s32.totalorder %s33, 1
        %s721 = scalar_select %p720, %s33, 1
        %s722 = smul.addr %s721, 16
        %s723 = smul.addr %s722, 4
        %s724 = scalar_lea.vmem %s14, %s723
        %p725 = pneg %p398
        %p726 = pneg %p395
        %p727 = scmp.lt.s32.totalorder %s33, 1
        %s728 = scalar_select %p727, %s33, 1
        %s729 = scalar_lea.vmem %s15, %s728
        %p730 = pneg %p424
        %p731 = pneg %p421
        %p732 = pneg %p445
        %p733 = pneg %p442
        %p734 = pneg %p466
        %p735 = pneg %p463
        %p736 = pneg %p487
        %p737 = pneg %p484
        %p738 = pneg %p508
        %p739 = pneg %p505
        %p740 = pneg %p529
        %p741 = pneg %p526
        %p742 = scmp.lt.s32.totalorder %s33, 1
        %s743 = scalar_select %p742, %s33, 1
        %s744 = scalar_lea.vmem %s4, %s743
        %p745 = scmp.lt.s32.totalorder %s33, 1
        %s746 = scalar_select %p745, %s33, 1
        %s747 = scalar_lea.vmem %s5, %s746
        %p748 = scmp.lt.s32.totalorder %s33, 1
        %s749 = scalar_select %p748, %s33, 1
        %s750 = smul.addr %s749, 4
        %s751 = smul.addr %s750, 4
        %s752 = scalar_lea.vmem %s6, %s751
        %p753 = scmp.lt.s32.totalorder %s33, 1
        %s754 = scalar_select %p753, %s33, 1
        %s755 = scalar_lea.vmem %s7, %s754
        %p756 = scmp.lt.s32.totalorder %s33, 1
        %s757 = scalar_select %p756, %s33, 1
        %s758 = smul.addr %s757, 4
        %s759 = smul.addr %s758, 4
        %s760 = scalar_lea.vmem %s8, %s759
        %p761 = scmp.lt.s32.totalorder %s33, 1
        %s762 = scalar_select %p761, %s33, 1
        %s763 = scalar_lea.vmem %s9, %s762
        %p764 = scmp.lt.s32.totalorder %s33, 1
        %s765 = scalar_select %p764, %s33, 1
        %s766 = scalar_lea.vmem %s10, %s765
        %p767 = scmp.lt.s32.totalorder %s33, 1
        %s768 = scalar_select %p767, %s33, 1
        %s769 = scalar_lea.vmem %s11, %s768
        %p770 = scmp.lt.s32.totalorder %s33, 1
        %s771 = scalar_select %p770, %s33, 1
        %s772 = smul.addr %s771, 4
        %s773 = smul.addr %s772, 4
        %s774 = scalar_lea.vmem %s12, %s773
        %p775 = scmp.lt.s32.totalorder %s33, 1
        %s776 = scalar_select %p775, %s33, 1
        %s777 = scalar_lea.vmem %s13, %s776
        %p778 = scmp.lt.s32.totalorder %s33, 1
        %s779 = scalar_select %p778, %s33, 1
        %s780 = smul.addr %s779, 16
        %s781 = smul.addr %s780, 4
        %s782 = scalar_lea.vmem %s14, %s781
        %p783 = scmp.lt.s32.totalorder %s33, 1
        %s784 = scalar_select %p783, %s33, 1
        %s785 = scalar_lea.vmem %s15, %s784
        %p787 = scmp.eq.s32.totalorder %s33, 0
        // Predicated region
        $region97: #{encoder_decoder_forward.3} parent=95 // pred_check
          %p788 = pneg %p787
        $region98: #{encoder_decoder_forward.3} parent=95 // pred_check_branch
          %790 = sbr.rel (%p788) target = $region100
        $region99: #{encoder_decoder_forward.3} parent=95 // pred_region
          %v791 = vld [vmem:[%s1] sm:$0xff]
          %v792 = vld [vmem:[%s1 + $0x8] sm:$0xff]
          %v793 = vld [vmem:[%s0] sm:$0xff]
          %v794 = vld [vmem:[%s0 + $0x8] sm:$0xff]
          %v795 = vadd.f32 %v793, %v791
          %v796 = vadd.f32 %v794, %v792
          %vm797 = vcmask 261120
          %798 = vst.msk [vmem:[#allocation2] sm:$0xff] %vm797, %v795
          %799 = vst.msk [vmem:[#allocation2 + $0x8] sm:$0xff] %vm797, %v796
          %v800 = vld [vmem:[%s0 + $0x10] sm:$0xff]
          %v801 = vld [vmem:[%s0 + $0x18] sm:$0xff]
          %v802 = vadd.f32 %v800, %v791
          %v803 = vadd.f32 %v801, %v792
          %804 = vst.msk [vmem:[#allocation2 + $0x10] sm:$0xff] %vm797, %v802
          %805 = vst.msk [vmem:[#allocation2 + $0x18] sm:$0xff] %vm797, %v803
          %v806 = vlaneseq
          %v807 = vshrl.u32 %v806, 7
          %v808 = vadd.s32 %v807, 8
          %v809 = vlaneseq
          %v810 = vand.u32 %v809, 127
          %vm811 = vcmp.le.s32.totalorder %v810, %v807
          %vm812 = vcmp.le.s32.totalorder %v810, %v808
          %v813 = vld [vmem:[%s2] sm:$0x1]
          %vm814 = vcmp.gt.f32.partialorder %v813, 0.5
          %v815 = vsel %vm814, 1, 0
          %v816 = vlaneseq
          %v817 = vshrl.u32 %v816, 7
          %v818 = vsub.s32 0, %v817
          %v819 = vrot.slane %v815, %v818
          %vm820 = vcmp.eq.s32.totalorder %v819, 1
          %vm821 = vmand %vm811, %vm820
          %vm822 = vmand %vm812, %vm820
          %v823 = vsel %vm821, 0.0, -1e+09
          %v824 = vsel %vm822, 0.0, -1e+09
          %vm825 = vcmask 130048
          %826 = vst.msk [vmem:[#allocation3] sm:$0xff] %vm825, %v823
          %827 = vst.msk [vmem:[#allocation3 + $0x8] sm:$0xff] %vm825, %v824
          %s828 = scalar_lea.vmem %s2, 1
          %v829 = vld [vmem:[%s828] sm:$0x1]
          %vm830 = vcmp.gt.f32.partialorder %v829, 0.5
          %v831 = vsel %vm830, 1, 0
          %v832 = vlaneseq
          %v833 = vshrl.u32 %v832, 7
          %v834 = vsub.s32 0, %v833
          %v835 = vrot.slane %v831, %v834
          %vm836 = vcmp.eq.s32.totalorder %v835, 1
          %vm837 = vmand %vm811, %vm836
          %vm838 = vmand %vm812, %vm836
          %v839 = vsel %vm837, 0.0, -1e+09
          %v840 = vsel %vm838, 0.0, -1e+09
          %s841 = scalar_lea.vmem [#allocation3], 16
          %842 = vst.msk [vmem:[%s841] sm:$0xff] %vm825, %v839
          %843 = vst.msk [vmem:[%s841 + $0x8] sm:$0xff] %vm825, %v840
        $region100: #{encoder_decoder_forward.3} parent=95 // pred_fallthru
          _
        %v844 = vld [vmem:[#allocation2] sm:$0xff]
        %v845 = vld [vmem:[#allocation2 + $0x8] sm:$0xff]
        %v846 = vld [vmem:[#allocation2 + $0x10] sm:$0xff]
        %v847 = vld [vmem:[#allocation2 + $0x18] sm:$0xff]
        %v848 = vld [vmem:[%s760] sm:$0xf]
        %v849 = vld [vmem:[%s760 + $0x4] sm:$0xf]
        %v850 = vld [vmem:[%s760 + $0x8] sm:$0xf]
        %v851 = vld [vmem:[%s760 + $0xc] sm:$0xf]
        %v852 = vld [vmem:[%s744] sm:$0x1]
        %v853 = vld [vmem:[%s747] sm:$0x1]
        %vm854 = vcmask 261120
        %v855 = vsel %vm854, %v844, 0.0
        %856 = vadd.xlane.f32.xlu0 %v855
        %v857 = vpop.xlane.xlu0 %856
        %v858 = vsel %vm854, %v845, 0.0
        %859 = vadd.xlane.f32.xlu0 %v858
        %v860 = vpop.xlane.xlu0 %859
        %v861 = vsel %vm854, %v846, 0.0
        %862 = vadd.xlane.f32.xlu0 %v861
        %v863 = vpop.xlane.xlu0 %862
        %v864 = vsel %vm854, %v847, 0.0
        %865 = vadd.xlane.f32.xlu0 %v864
        %v866 = vpop.xlane.xlu0 %865
        %v867 = vrcp.pop 32.0
        %v868 = vmul.f32 %v857, %v867
        %v869 = vmul.f32 %v860, %v867
        %v870 = vmul.f32 %v863, %v867
        %v871 = vmul.f32 %v866, %v867
        %v872 = vsub.f32 %v844, %v868
        %v873 = vsub.f32 %v845, %v869
        %v874 = vsub.f32 %v846, %v870
        %v875 = vsub.f32 %v847, %v871
        %v876 = vmul.f32 %v872, %v872
        %v877 = vmul.f32 %v873, %v873
        %v878 = vmul.f32 %v874, %v874
        %v879 = vmul.f32 %v875, %v875
        %v880 = vsel %vm854, %v876, 0.0
        %881 = vadd.xlane.f32.xlu0 %v880
        %v882 = vpop.xlane.xlu0 %881
        %v883 = vsel %vm854, %v877, 0.0
        %884 = vadd.xlane.f32.xlu0 %v883
        %v885 = vpop.xlane.xlu0 %884
        %v886 = vsel %vm854, %v878, 0.0
        %887 = vadd.xlane.f32.xlu0 %v886
        %v888 = vpop.xlane.xlu0 %887
        %v889 = vsel %vm854, %v879, 0.0
        %890 = vadd.xlane.f32.xlu0 %v889
        %v891 = vpop.xlane.xlu0 %890
        %v892 = vmul.f32 %v882, %v867
        %v893 = vmul.f32 %v885, %v867
        %v894 = vmul.f32 %v888, %v867
        %v895 = vmul.f32 %v891, %v867
        %v896 = vadd.f32 %v892, 1e-05
        %v897 = vadd.f32 %v893, 1e-05
        %v898 = vadd.f32 %v894, 1e-05
        %v899 = vadd.f32 %v895, 1e-05
        %v900 = vrsqrt.pop %v896
        %v901 = vrsqrt.pop %v897
        %v902 = vrsqrt.pop %v898
        %v903 = vrsqrt.pop %v899
        %v904 = vmul.f32 %v872, %v900
        %v905 = vmul.f32 %v873, %v901
        %v906 = vmul.f32 %v874, %v902
        %v907 = vmul.f32 %v875, %v903
        %v909 = vlaneseq
        %v910 = vshrl.u32 %v909, 7
        %v911 = vsub.s32 0, %v910
        %v912 = vrot.slane %v852, %v911
        %v914 = vmul.f32 %v904, %v912
        %v915 = vmul.f32 %v905, %v912
        %v916 = vmul.f32 %v906, %v912
        %v917 = vmul.f32 %v907, %v912
        %v919 = vlaneseq
        %v920 = vshrl.u32 %v919, 7
        %v921 = vsub.s32 0, %v920
        %v922 = vrot.slane %v853, %v921
        %v924 = vadd.f32 %v914, %v922
        %v925 = vadd.f32 %v915, %v922
        %v926 = vadd.f32 %v916, %v922
        %v927 = vadd.f32 %v917, %v922
        %v928 = vpack.c.bf16 %v925, %v924
        %v929 = vpack.c.bf16 %v927, %v926
        %v930 = vld [vmem:[%s752] sm:$0xf]
        %v931 = vld [vmem:[%s752 + $0x4] sm:$0xf]
        %v932 = vld [vmem:[%s752 + $0x8] sm:$0xf]
        %v933 = vld [vmem:[%s752 + $0xc] sm:$0xf]
        %v934 = vld [vmem:[%s755] sm:$0x1]
        %v936 = vlaneseq
        %v937 = vshrl.u32 %v936, 7
        %v938 = vsub.s32 0, %v937
        %v939 = vrot.slane %v934, %v938
        %v945 = vunpack.c.l.b16 %v930
        %v946 = vunpack.c.l.b16 %v931
        %v947 = vunpack.c.l.b16 %v932
        %v948 = vunpack.c.l.b16 %v933
        %v949 = vpack.c.b16 %v946, %v945
        %v950 = vpack.c.b16 %v948, %v947
        %v954 = vsel %vm854, %v928, 0
        %v957 = vsel %vm854, %v929, 0
        %959 = vmatprep.subr.bf16.mxu0 0
        %960 = vmatpush1.bf16.msra.mxu0 0
        %961 = vmatprep.subr.bf16.mxu0 0
        %962 = vmatpush1.bf16.msra.mxu0 0
        %963 = vmatprep.subr.bf16.mxu0 0
        %964 = vmatpush1.bf16.msra.mxu0 0
        %965 = vmatprep.subr.bf16.mxu0 0
        %966 = vmatpush1.bf16.msra.mxu0 0
        %967 = vmatprep.subr.bf16.mxu0 0
        %968 = vmatpush1.bf16.msra.mxu0 0
        %969 = vmatprep.subr.bf16.mxu0 0
        %970 = vmatpush1.bf16.msra.mxu0 0
        %971 = vmatprep.subr.bf16.mxu0 0
        %972 = vmatpush1.bf16.msra.mxu0 %v950
        %973 = vmatprep.subr.bf16.mxu0 0
        %974 = vmatpush1.bf16.msra.mxu0 %v949
        %975 = vmatprep.subr.bf16.mxu0 0
        %976 = vmatpush2.bf16.msra.mxu0 0
        %977 = vmatprep.subr.bf16.mxu0 0
        %978 = vmatpush2.bf16.msra.mxu0 0
        %979 = vmatprep.subr.bf16.mxu0 0
        %980 = vmatpush2.bf16.msra.mxu0 0
        %981 = vmatprep.subr.bf16.mxu0 0
        %982 = vmatpush2.bf16.msra.mxu0 0
        %983 = vmatprep.subr.bf16.mxu0 0
        %984 = vmatpush2.bf16.msra.mxu0 0
        %985 = vmatprep.subr.bf16.mxu0 0
        %986 = vmatpush2.bf16.msra.mxu0 0
        %987 = vmatprep.subr.bf16.mxu0 0
        %988 = vmatpush2.bf16.msra.mxu0 0
        %989 = vmatprep.subr.bf16.mxu0 0
        %990 = vmatpush2.bf16.msra.mxu0 0
        %991 = vmatprep.mubr.bf16.mxu0 0
        %992 = vmatmul.mubr.bf16.gmra.mxu0 %v954
        %v993 = vpop.f32.mrf.mxu0
        %v994 = vadd.f32 %v939, %v993
        %v995 = vpop.f32.mrf.mxu0
        %v996 = vpop.f32.mrf.mxu0
        %v997 = vadd.f32 %v939, %v996
        %v998 = vpop.f32.mrf.mxu0
        %999 = vmatprep.mubr.bf16.mxu0 0
        %1000 = vmatmul.mubr.bf16.gmra.mxu0 %v957
        %v1001 = vpop.f32.mrf.mxu0
        %v1002 = vadd.f32 %v939, %v1001
        %v1003 = vpop.f32.mrf.mxu0
        %v1004 = vpop.f32.mrf.mxu0
        %v1005 = vadd.f32 %v939, %v1004
        %v1006 = vpop.f32.mrf.mxu0
        %1007 = vdwg.mxu0
        %v1008 = vld [vmem:[#allocation3] sm:$0xff]
        %v1009 = vld [vmem:[#allocation3 + $0x8] sm:$0xff]
        %v1010 = vpack.c.bf16 %v997, %v994
        %1012 = vrot.lane.b32.xlu0 %v1010, 96
        %v1013 = vpop.permute.xlu0 %1012
        %vm1014 = vcmask 130048
        %v1016 = vsel %vm1014, %v1010, 0
        %v1019 = vsel %vm1014, %v1013, 0
        %1021 = vmatprep.subr.bf16.mxu0 0
        %1022 = vmatpush1.bf16.xpose.msra.mxu0 0
        %1023 = vmatprep.subr.bf16.mxu0 0
        %1024 = vmatpush1.bf16.xpose.msra.mxu0 0
        %1025 = vmatprep.subr.bf16.mxu0 0
        %1026 = vmatpush1.bf16.xpose.msra.mxu0 0
        %1027 = vmatprep.subr.bf16.mxu0 0
        %1028 = vmatpush1.bf16.xpose.msra.mxu0 0
        %1029 = vmatprep.subr.bf16.mxu0 0
        %1030 = vmatpush1.bf16.xpose.msra.mxu0 0
        %1031 = vmatprep.subr.bf16.mxu0 0
        %1032 = vmatpush1.bf16.xpose.msra.mxu0 0
        %1033 = vmatprep.subr.bf16.mxu0 0
        %1034 = vmatpush1.bf16.xpose.msra.mxu0 0
        %1035 = vmatprep.subr.bf16.mxu0 0
        %1036 = vmatpush1.bf16.xpose.msra.mxu0 %v1019
        %1037 = vmatprep.subr.bf16.mxu0 0
        %1038 = vmatpush2.bf16.xpose.msra.mxu0 0
        %1039 = vmatprep.subr.bf16.mxu0 0
        %1040 = vmatpush2.bf16.xpose.msra.mxu0 0
        %1041 = vmatprep.subr.bf16.mxu0 0
        %1042 = vmatpush2.bf16.xpose.msra.mxu0 0
        %1043 = vmatprep.subr.bf16.mxu0 0
        %1044 = vmatpush2.bf16.xpose.msra.mxu0 0
        %1045 = vmatprep.subr.bf16.mxu0 0
        %1046 = vmatpush2.bf16.xpose.msra.mxu0 0
        %1047 = vmatprep.subr.bf16.mxu0 0
        %1048 = vmatpush2.bf16.xpose.msra.mxu0 0
        %1049 = vmatprep.subr.bf16.mxu0 0
        %1050 = vmatpush2.bf16.xpose.msra.mxu0 0
        %1051 = vmatprep.subr.bf16.mxu0 0
        %1052 = vmatpush2.bf16.xpose.msra.mxu0 0
        %1053 = vmatprep.mubr.bf16.mxu0 0
        %1054 = vmatmul.mubr.bf16.gmra.mxu0 %v1016
        %v1055 = vpop.f32.mrf.mxu0
        %v1056 = vadd.f32 0.0, %v1055
        %v1057 = vpop.f32.mrf.mxu0
        %v1058 = vpop.f32.mrf.mxu0
        %v1059 = vadd.f32 0.0, %v1058
        %v1060 = vpop.f32.mrf.mxu0
        %1061 = vdwg.mxu0
        %v1062 = vmul.f32 %v1056, 0.25
        %v1063 = vmul.f32 %v1059, 0.25
        %v1064 = vadd.f32 %v1062, %v1008
        %v1065 = vadd.f32 %v1063, %v1009
        %v1066 = vsel %vm1014, %v1064, -inf
        %1067 = vmax.xlane.f32.xlu0 %v1066
        %v1068 = vpop.xlane.xlu0 %1067
        %v1069 = vsel %vm1014, %v1065, -inf
        %1070 = vmax.xlane.f32.xlu0 %v1069
        %v1071 = vpop.xlane.xlu0 %1070
        %v1072 = vsub.f32 %v1064, %v1068
        %v1073 = vsub.f32 %v1065, %v1071
        %v1074 = vmul.f32 %v1072, 1.442695
        %v1075 = vpow.pop %v1074
        %v1076 = vmul.f32 %v1073, 1.442695
        %v1077 = vpow.pop %v1076
        %v1078 = vsel %vm1014, %v1075, 0.0
        %1079 = vadd.xlane.f32.xlu0 %v1078
        %v1080 = vpop.xlane.xlu0 %1079
        %v1081 = vsel %vm1014, %v1077, 0.0
        %1082 = vadd.xlane.f32.xlu0 %v1081
        %v1083 = vpop.xlane.xlu0 %1082
        %v1084 = vrcp.pop %v1080
        %v1085 = vrcp.pop %v1083
        %v1086 = vmul.f32 %v1075, %v1084
        %v1087 = vmul.f32 %v1077, %v1085
        %v1088 = vpack.c.bf16 %v1087, %v1086
        %1089 = vrot.lane.b32.xlu0 %v1010, 64
        %v1090 = vpop.permute.xlu0 %1089
        %v1093 = vsel %vm1014, %v1088, 0
        %1095 = vmatprep.subr.bf16.mxu0 0
        %1096 = vmatpush1.bf16.msra.mxu0 0
        %1097 = vmatprep.subr.bf16.mxu0 0
        %1098 = vmatpush1.bf16.msra.mxu0 0
        %1099 = vmatprep.subr.bf16.mxu0 0
        %1100 = vmatpush1.bf16.msra.mxu0 0
        %1101 = vmatprep.subr.bf16.mxu0 0
        %1102 = vmatpush1.bf16.msra.mxu0 0
        %1103 = vmatprep.subr.bf16.mxu0 0
        %1104 = vmatpush1.bf16.msra.mxu0 0
        %1105 = vmatprep.subr.bf16.mxu0 0
        %1106 = vmatpush1.bf16.msra.mxu0 0
        %1107 = vmatprep.subr.bf16.mxu0 0
        %1108 = vmatpush1.bf16.msra.mxu0 0
        %1109 = vmatprep.subr.bf16.mxu0 0
        %1110 = vmatpush1.bf16.msra.mxu0 %v1090
        %1111 = vmatprep.subr.bf16.mxu0 0
        %1112 = vmatpush2.bf16.msra.mxu0 0
        %1113 = vmatprep.subr.bf16.mxu0 0
        %1114 = vmatpush2.bf16.msra.mxu0 0
        %1115 = vmatprep.subr.bf16.mxu0 0
        %1116 = vmatpush2.bf16.msra.mxu0 0
        %1117 = vmatprep.subr.bf16.mxu0 0
        %1118 = vmatpush2.bf16.msra.mxu0 0
        %1119 = vmatprep.subr.bf16.mxu0 0
        %1120 = vmatpush2.bf16.msra.mxu0 0
        %1121 = vmatprep.subr.bf16.mxu0 0
        %1122 = vmatpush2.bf16.msra.mxu0 0
        %1123 = vmatprep.subr.bf16.mxu0 0
        %1124 = vmatpush2.bf16.msra.mxu0 0
        %1125 = vmatprep.subr.bf16.mxu0 0
        %1126 = vmatpush2.bf16.msra.mxu0 0
        %1127 = vmatprep.mubr.bf16.mxu0 0
        %1128 = vmatmul.mubr.bf16.gmra.mxu0 %v1093
        %v1129 = vpop.f32.mrf.mxu0
        %v1130 = vadd.f32 0.0, %v1129
        %v1131 = vpop.f32.mrf.mxu0
        %v1132 = vpop.f32.mrf.mxu0
        %v1133 = vadd.f32 0.0, %v1132
        %v1134 = vpop.f32.mrf.mxu0
        %1135 = vdwg.mxu0
        %v1136 = vpack.c.bf16 %v1133, %v1130
        %1137 = vrot.lane.b32.xlu0 %v1010, 112
        %v1138 = vpop.permute.xlu0 %1137
        %1139 = vrot.lane.b32.xlu0 %v1010, 80
        %v1140 = vpop.permute.xlu0 %1139
        %v1142 = vsel %vm1014, %v1138, 0
        %v1145 = vsel %vm1014, %v1140, 0
        %1147 = vmatprep.subr.bf16.mxu0 0
        %1148 = vmatpush1.bf16.xpose.msra.mxu0 0
        %1149 = vmatprep.subr.bf16.mxu0 0
        %1150 = vmatpush1.bf16.xpose.msra.mxu0 0
        %1151 = vmatprep.subr.bf16.mxu0 0
        %1152 = vmatpush1.bf16.xpose.msra.mxu0 0
        %1153 = vmatprep.subr.bf16.mxu0 0
        %1154 = vmatpush1.bf16.xpose.msra.mxu0 0
        %1155 = vmatprep.subr.bf16.mxu0 0
        %1156 = vmatpush1.bf16.xpose.msra.mxu0 0
        %1157 = vmatprep.subr.bf16.mxu0 0
        %1158 = vmatpush1.bf16.xpose.msra.mxu0 0
        %1159 = vmatprep.subr.bf16.mxu0 0
        %1160 = vmatpush1.bf16.xpose.msra.mxu0 0
        %1161 = vmatprep.subr.bf16.mxu0 0
        %1162 = vmatpush1.bf16.xpose.msra.mxu0 %v1145
        %1163 = vmatprep.subr.bf16.mxu0 0
        %1164 = vmatpush2.bf16.xpose.msra.mxu0 0
        %1165 = vmatprep.subr.bf16.mxu0 0
        %1166 = vmatpush2.bf16.xpose.msra.mxu0 0
        %1167 = vmatprep.subr.bf16.mxu0 0
        %1168 = vmatpush2.bf16.xpose.msra.mxu0 0
        %1169 = vmatprep.subr.bf16.mxu0 0
        %1170 = vmatpush2.bf16.xpose.msra.mxu0 0
        %1171 = vmatprep.subr.bf16.mxu0 0
        %1172 = vmatpush2.bf16.xpose.msra.mxu0 0
        %1173 = vmatprep.subr.bf16.mxu0 0
        %1174 = vmatpush2.bf16.xpose.msra.mxu0 0
        %1175 = vmatprep.subr.bf16.mxu0 0
        %1176 = vmatpush2.bf16.xpose.msra.mxu0 0
        %1177 = vmatprep.subr.bf16.mxu0 0
        %1178 = vmatpush2.bf16.xpose.msra.mxu0 0
        %1179 = vmatprep.mubr.bf16.mxu0 0
        %1180 = vmatmul.mubr.bf16.gmra.mxu0 %v1142
        %v1181 = vpop.f32.mrf.mxu0
        %v1182 = vadd.f32 0.0, %v1181
        %v1183 = vpop.f32.mrf.mxu0
        %v1184 = vpop.f32.mrf.mxu0
        %v1185 = vadd.f32 0.0, %v1184
        %v1186 = vpop.f32.mrf.mxu0
        %1187 = vdwg.mxu0
        %v1188 = vmul.f32 %v1182, 0.25
        %v1189 = vmul.f32 %v1185, 0.25
        %v1190 = vadd.f32 %v1188, %v1008
        %v1191 = vadd.f32 %v1189, %v1009
        %v1192 = vsel %vm1014, %v1190, -inf
        %1193 = vmax.xlane.f32.xlu0 %v1192
        %v1194 = vpop.xlane.xlu0 %1193
        %v1195 = vsel %vm1014, %v1191, -inf
        %1196 = vmax.xlane.f32.xlu0 %v1195
        %v1197 = vpop.xlane.xlu0 %1196
        %v1198 = vsub.f32 %v1190, %v1194
        %v1199 = vsub.f32 %v1191, %v1197
        %v1200 = vmul.f32 %v1198, 1.442695
        %v1201 = vpow.pop %v1200
        %v1202 = vmul.f32 %v1199, 1.442695
        %v1203 = vpow.pop %v1202
        %v1204 = vsel %vm1014, %v1201, 0.0
        %1205 = vadd.xlane.f32.xlu0 %v1204
        %v1206 = vpop.xlane.xlu0 %1205
        %v1207 = vsel %vm1014, %v1203, 0.0
        %1208 = vadd.xlane.f32.xlu0 %v1207
        %v1209 = vpop.xlane.xlu0 %1208
        %v1210 = vrcp.pop %v1206
        %v1211 = vrcp.pop %v1209
        %v1212 = vmul.f32 %v1201, %v1210
        %v1213 = vmul.f32 %v1203, %v1211
        %v1214 = vpack.c.bf16 %v1213, %v1212
        %1215 = vrot.lane.b32.xlu0 %v1010, 48
        %v1216 = vpop.permute.xlu0 %1215
        %v1219 = vsel %vm1014, %v1214, 0
        %1221 = vmatprep.subr.bf16.mxu0 0
        %1222 = vmatpush1.bf16.msra.mxu0 0
        %1223 = vmatprep.subr.bf16.mxu0 0
        %1224 = vmatpush1.bf16.msra.mxu0 0
        %1225 = vmatprep.subr.bf16.mxu0 0
        %1226 = vmatpush1.bf16.msra.mxu0 0
        %1227 = vmatprep.subr.bf16.mxu0 0
        %1228 = vmatpush1.bf16.msra.mxu0 0
        %1229 = vmatprep.subr.bf16.mxu0 0
        %1230 = vmatpush1.bf16.msra.mxu0 0
        %1231 = vmatprep.subr.bf16.mxu0 0
        %1232 = vmatpush1.bf16.msra.mxu0 0
        %1233 = vmatprep.subr.bf16.mxu0 0
        %1234 = vmatpush1.bf16.msra.mxu0 0
        %1235 = vmatprep.subr.bf16.mxu0 0
        %1236 = vmatpush1.bf16.msra.mxu0 %v1216
        %1237 = vmatprep.subr.bf16.mxu0 0
        %1238 = vmatpush2.bf16.msra.mxu0 0
        %1239 = vmatprep.subr.bf16.mxu0 0
        %1240 = vmatpush2.bf16.msra.mxu0 0
        %1241 = vmatprep.subr.bf16.mxu0 0
        %1242 = vmatpush2.bf16.msra.mxu0 0
        %1243 = vmatprep.subr.bf16.mxu0 0
        %1244 = vmatpush2.bf16.msra.mxu0 0
        %1245 = vmatprep.subr.bf16.mxu0 0
        %1246 = vmatpush2.bf16.msra.mxu0 0
        %1247 = vmatprep.subr.bf16.mxu0 0
        %1248 = vmatpush2.bf16.msra.mxu0 0
        %1249 = vmatprep.subr.bf16.mxu0 0
        %1250 = vmatpush2.bf16.msra.mxu0 0
        %1251 = vmatprep.subr.bf16.mxu0 0
        %1252 = vmatpush2.bf16.msra.mxu0 0
        %1253 = vmatprep.mubr.bf16.mxu0 0
        %1254 = vmatmul.mubr.bf16.gmra.mxu0 %v1219
        %v1255 = vpop.f32.mrf.mxu0
        %v1256 = vadd.f32 0.0, %v1255
        %v1257 = vpop.f32.mrf.mxu0
        %v1258 = vpop.f32.mrf.mxu0
        %v1259 = vadd.f32 0.0, %v1258
        %v1260 = vpop.f32.mrf.mxu0
        %1261 = vdwg.mxu0
        %v1262 = vpack.c.bf16 %v1259, %v1256
        %v1265 = vunpack.c.l.b16 %v850
        %v1266 = vunpack.c.l.b16 %v851
        %v1267 = vpack.c.b16 %v1266, %v1265
        %v1270 = vsel %vm1014, %v1262, 0
        %1272 = vmatprep.subr.bf16.mxu0 0
        %1273 = vmatpush1.bf16.msra.mxu0 0
        %1274 = vmatprep.subr.bf16.mxu0 0
        %1275 = vmatpush1.bf16.msra.mxu0 0
        %1276 = vmatprep.subr.bf16.mxu0 0
        %1277 = vmatpush1.bf16.msra.mxu0 0
        %1278 = vmatprep.subr.bf16.mxu0 0
        %1279 = vmatpush1.bf16.msra.mxu0 0
        %1280 = vmatprep.subr.bf16.mxu0 0
        %1281 = vmatpush1.bf16.msra.mxu0 0
        %1282 = vmatprep.subr.bf16.mxu0 0
        %1283 = vmatpush1.bf16.msra.mxu0 0
        %1284 = vmatprep.subr.bf16.mxu0 0
        %1285 = vmatpush1.bf16.msra.mxu0 0
        %1286 = vmatprep.subr.bf16.mxu0 0
        %1287 = vmatpush1.bf16.msra.mxu0 %v1267
        %1288 = vmatprep.subr.bf16.mxu0 0
        %1289 = vmatpush2.bf16.msra.mxu0 0
        %1290 = vmatprep.subr.bf16.mxu0 0
        %1291 = vmatpush2.bf16.msra.mxu0 0
        %1292 = vmatprep.subr.bf16.mxu0 0
        %1293 = vmatpush2.bf16.msra.mxu0 0
        %1294 = vmatprep.subr.bf16.mxu0 0
        %1295 = vmatpush2.bf16.msra.mxu0 0
        %1296 = vmatprep.subr.bf16.mxu0 0
        %1297 = vmatpush2.bf16.msra.mxu0 0
        %1298 = vmatprep.subr.bf16.mxu0 0
        %1299 = vmatpush2.bf16.msra.mxu0 0
        %1300 = vmatprep.subr.bf16.mxu0 0
        %1301 = vmatpush2.bf16.msra.mxu0 0
        %1302 = vmatprep.subr.bf16.mxu0 0
        %1303 = vmatpush2.bf16.msra.mxu0 0
        %1304 = vmatprep.mubr.bf16.mxu0 0
        %1305 = vmatmul.mubr.bf16.gmra.mxu0 %v1270
        %v1306 = vpop.f32.mrf.mxu0
        %v1307 = vadd.f32 0.0, %v1306
        %v1308 = vpop.f32.mrf.mxu0
        %v1309 = vpop.f32.mrf.mxu0
        %v1310 = vadd.f32 0.0, %v1309
        %v1311 = vpop.f32.mrf.mxu0
        %1312 = vdwg.mxu0
        %v1315 = vunpack.c.l.b16 %v848
        %v1316 = vunpack.c.l.b16 %v849
        %v1317 = vpack.c.b16 %v1316, %v1315
        %v1320 = vsel %vm1014, %v1136, 0
        %1322 = vmatprep.subr.bf16.mxu0 0
        %1323 = vmatpush1.bf16.msra.mxu0 0
        %1324 = vmatprep.subr.bf16.mxu0 0
        %1325 = vmatpush1.bf16.msra.mxu0 0
        %1326 = vmatprep.subr.bf16.mxu0 0
        %1327 = vmatpush1.bf16.msra.mxu0 0
        %1328 = vmatprep.subr.bf16.mxu0 0
        %1329 = vmatpush1.bf16.msra.mxu0 0
        %1330 = vmatprep.subr.bf16.mxu0 0
        %1331 = vmatpush1.bf16.msra.mxu0 0
        %1332 = vmatprep.subr.bf16.mxu0 0
        %1333 = vmatpush1.bf16.msra.mxu0 0
        %1334 = vmatprep.subr.bf16.mxu0 0
        %1335 = vmatpush1.bf16.msra.mxu0 0
        %1336 = vmatprep.subr.bf16.mxu0 0
        %1337 = vmatpush1.bf16.msra.mxu0 %v1317
        %1338 = vmatprep.subr.bf16.mxu0 0
        %1339 = vmatpush2.bf16.msra.mxu0 0
        %1340 = vmatprep.subr.bf16.mxu0 0
        %1341 = vmatpush2.bf16.msra.mxu0 0
        %1342 = vmatprep.subr.bf16.mxu0 0
        %1343 = vmatpush2.bf16.msra.mxu0 0
        %1344 = vmatprep.subr.bf16.mxu0 0
        %1345 = vmatpush2.bf16.msra.mxu0 0
        %1346 = vmatprep.subr.bf16.mxu0 0
        %1347 = vmatpush2.bf16.msra.mxu0 0
        %1348 = vmatprep.subr.bf16.mxu0 0
        %1349 = vmatpush2.bf16.msra.mxu0 0
        %1350 = vmatprep.subr.bf16.mxu0 0
        %1351 = vmatpush2.bf16.msra.mxu0 0
        %1352 = vmatprep.subr.bf16.mxu0 0
        %1353 = vmatpush2.bf16.msra.mxu0 0
        %1354 = vmatprep.mubr.bf16.mxu0 0
        %1355 = vmatmul.mubr.bf16.gmra.mxu0 %v1320
        %v1356 = vpop.f32.mrf.mxu0
        %v1357 = vadd.f32 %v1307, %v1356
        %v1358 = vpop.f32.mrf.mxu0
        %v1359 = vpop.f32.mrf.mxu0
        %v1360 = vadd.f32 %v1310, %v1359
        %v1361 = vpop.f32.mrf.mxu0
        %1362 = vdwg.mxu0
        %s1363 = scalar_lea.vmem [#allocation3], 16
        %v1364 = vld [vmem:[%s1363] sm:$0xff]
        %v1365 = vld [vmem:[%s1363 + $0x8] sm:$0xff]
        %v1366 = vpack.c.bf16 %v1005, %v1002
        %1368 = vrot.lane.b32.xlu0 %v1366, 96
        %v1369 = vpop.permute.xlu0 %1368
        %v1371 = vsel %vm1014, %v1366, 0
        %v1374 = vsel %vm1014, %v1369, 0
        %1376 = vmatprep.subr.bf16.mxu0 0
        %1377 = vmatpush1.bf16.xpose.msra.mxu0 0
        %1378 = vmatprep.subr.bf16.mxu0 0
        %1379 = vmatpush1.bf16.xpose.msra.mxu0 0
        %1380 = vmatprep.subr.bf16.mxu0 0
        %1381 = vmatpush1.bf16.xpose.msra.mxu0 0
        %1382 = vmatprep.subr.bf16.mxu0 0
        %1383 = vmatpush1.bf16.xpose.msra.mxu0 0
        %1384 = vmatprep.subr.bf16.mxu0 0
        %1385 = vmatpush1.bf16.xpose.msra.mxu0 0
        %1386 = vmatprep.subr.bf16.mxu0 0
        %1387 = vmatpush1.bf16.xpose.msra.mxu0 0
        %1388 = vmatprep.subr.bf16.mxu0 0
        %1389 = vmatpush1.bf16.xpose.msra.mxu0 0
        %1390 = vmatprep.subr.bf16.mxu0 0
        %1391 = vmatpush1.bf16.xpose.msra.mxu0 %v1374
        %1392 = vmatprep.subr.bf16.mxu0 0
        %1393 = vmatpush2.bf16.xpose.msra.mxu0 0
        %1394 = vmatprep.subr.bf16.mxu0 0
        %1395 = vmatpush2.bf16.xpose.msra.mxu0 0
        %1396 = vmatprep.subr.bf16.mxu0 0
        %1397 = vmatpush2.bf16.xpose.msra.mxu0 0
        %1398 = vmatprep.subr.bf16.mxu0 0
        %1399 = vmatpush2.bf16.xpose.msra.mxu0 0
        %1400 = vmatprep.subr.bf16.mxu0 0
        %1401 = vmatpush2.bf16.xpose.msra.mxu0 0
        %1402 = vmatprep.subr.bf16.mxu0 0
        %1403 = vmatpush2.bf16.xpose.msra.mxu0 0
        %1404 = vmatprep.subr.bf16.mxu0 0
        %1405 = vmatpush2.bf16.xpose.msra.mxu0 0
        %1406 = vmatprep.subr.bf16.mxu0 0
        %1407 = vmatpush2.bf16.xpose.msra.mxu0 0
        %1408 = vmatprep.mubr.bf16.mxu0 0
        %1409 = vmatmul.mubr.bf16.gmra.mxu0 %v1371
        %v1410 = vpop.f32.mrf.mxu0
        %v1411 = vadd.f32 0.0, %v1410
        %v1412 = vpop.f32.mrf.mxu0
        %v1413 = vpop.f32.mrf.mxu0
        %v1414 = vadd.f32 0.0, %v1413
        %v1415 = vpop.f32.mrf.mxu0
        %1416 = vdwg.mxu0
        %v1417 = vmul.f32 %v1411, 0.25
        %v1418 = vmul.f32 %v1414, 0.25
        %v1419 = vadd.f32 %v1417, %v1364
        %v1420 = vadd.f32 %v1418, %v1365
        %v1421 = vsel %vm1014, %v1419, -inf
        %1422 = vmax.xlane.f32.xlu0 %v1421
        %v1423 = vpop.xlane.xlu0 %1422
        %v1424 = vsel %vm1014, %v1420, -inf
        %1425 = vmax.xlane.f32.xlu0 %v1424
        %v1426 = vpop.xlane.xlu0 %1425
        %v1427 = vsub.f32 %v1419, %v1423
        %v1428 = vsub.f32 %v1420, %v1426
        %v1429 = vmul.f32 %v1427, 1.442695
        %v1430 = vpow.pop %v1429
        %v1431 = vmul.f32 %v1428, 1.442695
        %v1432 = vpow.pop %v1431
        %v1433 = vsel %vm1014, %v1430, 0.0
        %1434 = vadd.xlane.f32.xlu0 %v1433
        %v1435 = vpop.xlane.xlu0 %1434
        %v1436 = vsel %vm1014, %v1432, 0.0
        %1437 = vadd.xlane.f32.xlu0 %v1436
        %v1438 = vpop.xlane.xlu0 %1437
        %v1439 = vrcp.pop %v1435
        %v1440 = vrcp.pop %v1438
        %v1441 = vmul.f32 %v1430, %v1439
        %v1442 = vmul.f32 %v1432, %v1440
        %v1443 = vpack.c.bf16 %v1442, %v1441
        %1444 = vrot.lane.b32.xlu0 %v1366, 64
        %v1445 = vpop.permute.xlu0 %1444
        %v1448 = vsel %vm1014, %v1443, 0
        %1450 = vmatprep.subr.bf16.mxu0 0
        %1451 = vmatpush1.bf16.msra.mxu0 0
        %1452 = vmatprep.subr.bf16.mxu0 0
        %1453 = vmatpush1.bf16.msra.mxu0 0
        %1454 = vmatprep.subr.bf16.mxu0 0
        %1455 = vmatpush1.bf16.msra.mxu0 0
        %1456 = vmatprep.subr.bf16.mxu0 0
        %1457 = vmatpush1.bf16.msra.mxu0 0
        %1458 = vmatprep.subr.bf16.mxu0 0
        %1459 = vmatpush1.bf16.msra.mxu0 0
        %1460 = vmatprep.subr.bf16.mxu0 0
        %1461 = vmatpush1.bf16.msra.mxu0 0
        %1462 = vmatprep.subr.bf16.mxu0 0
        %1463 = vmatpush1.bf16.msra.mxu0 0
        %1464 = vmatprep.subr.bf16.mxu0 0
        %1465 = vmatpush1.bf16.msra.mxu0 %v1445
        %1466 = vmatprep.subr.bf16.mxu0 0
        %1467 = vmatpush2.bf16.msra.mxu0 0
        %1468 = vmatprep.subr.bf16.mxu0 0
        %1469 = vmatpush2.bf16.msra.mxu0 0
        %1470 = vmatprep.subr.bf16.mxu0 0
        %1471 = vmatpush2.bf16.msra.mxu0 0
        %1472 = vmatprep.subr.bf16.mxu0 0
        %1473 = vmatpush2.bf16.msra.mxu0 0
        %1474 = vmatprep.subr.bf16.mxu0 0
        %1475 = vmatpush2.bf16.msra.mxu0 0
        %1476 = vmatprep.subr.bf16.mxu0 0
        %1477 = vmatpush2.bf16.msra.mxu0 0
        %1478 = vmatprep.subr.bf16.mxu0 0
        %1479 = vmatpush2.bf16.msra.mxu0 0
        %1480 = vmatprep.subr.bf16.mxu0 0
        %1481 = vmatpush2.bf16.msra.mxu0 0
        %1482 = vmatprep.mubr.bf16.mxu0 0
        %1483 = vmatmul.mubr.bf16.gmra.mxu0 %v1448
        %v1484 = vpop.f32.mrf.mxu0
        %v1485 = vadd.f32 0.0, %v1484
        %v1486 = vpop.f32.mrf.mxu0
        %v1487 = vpop.f32.mrf.mxu0
        %v1488 = vadd.f32 0.0, %v1487
        %v1489 = vpop.f32.mrf.mxu0
        %1490 = vdwg.mxu0
        %v1491 = vpack.c.bf16 %v1488, %v1485
        %1492 = vrot.lane.b32.xlu0 %v1366, 112
        %v1493 = vpop.permute.xlu0 %1492
        %1494 = vrot.lane.b32.xlu0 %v1366, 80
        %v1495 = vpop.permute.xlu0 %1494
        %v1497 = vsel %vm1014, %v1493, 0
        %v1500 = vsel %vm1014, %v1495, 0
        %1502 = vmatprep.subr.bf16.mxu0 0
        %1503 = vmatpush1.bf16.xpose.msra.mxu0 0
        %1504 = vmatprep.subr.bf16.mxu0 0
        %1505 = vmatpush1.bf16.xpose.msra.mxu0 0
        %1506 = vmatprep.subr.bf16.mxu0 0
        %1507 = vmatpush1.bf16.xpose.msra.mxu0 0
        %1508 = vmatprep.subr.bf16.mxu0 0
        %1509 = vmatpush1.bf16.xpose.msra.mxu0 0
        %1510 = vmatprep.subr.bf16.mxu0 0
        %1511 = vmatpush1.bf16.xpose.msra.mxu0 0
        %1512 = vmatprep.subr.bf16.mxu0 0
        %1513 = vmatpush1.bf16.xpose.msra.mxu0 0
        %1514 = vmatprep.subr.bf16.mxu0 0
        %1515 = vmatpush1.bf16.xpose.msra.mxu0 0
        %1516 = vmatprep.subr.bf16.mxu0 0
        %1517 = vmatpush1.bf16.xpose.msra.mxu0 %v1500
        %1518 = vmatprep.subr.bf16.mxu0 0
        %1519 = vmatpush2.bf16.xpose.msra.mxu0 0
        %1520 = vmatprep.subr.bf16.mxu0 0
        %1521 = vmatpush2.bf16.xpose.msra.mxu0 0
        %1522 = vmatprep.subr.bf16.mxu0 0
        %1523 = vmatpush2.bf16.xpose.msra.mxu0 0
        %1524 = vmatprep.subr.bf16.mxu0 0
        %1525 = vmatpush2.bf16.xpose.msra.mxu0 0
        %1526 = vmatprep.subr.bf16.mxu0 0
        %1527 = vmatpush2.bf16.xpose.msra.mxu0 0
        %1528 = vmatprep.subr.bf16.mxu0 0
        %1529 = vmatpush2.bf16.xpose.msra.mxu0 0
        %1530 = vmatprep.subr.bf16.mxu0 0
        %1531 = vmatpush2.bf16.xpose.msra.mxu0 0
        %1532 = vmatprep.subr.bf16.mxu0 0
        %1533 = vmatpush2.bf16.xpose.msra.mxu0 0
        %1534 = vmatprep.mubr.bf16.mxu0 0
        %1535 = vmatmul.mubr.bf16.gmra.mxu0 %v1497
        %v1536 = vpop.f32.mrf.mxu0
        %v1537 = vadd.f32 0.0, %v1536
        %v1538 = vpop.f32.mrf.mxu0
        %v1539 = vpop.f32.mrf.mxu0
        %v1540 = vadd.f32 0.0, %v1539
        %v1541 = vpop.f32.mrf.mxu0
        %1542 = vdwg.mxu0
        %v1543 = vmul.f32 %v1537, 0.25
        %v1544 = vmul.f32 %v1540, 0.25
        %v1545 = vadd.f32 %v1543, %v1364
        %v1546 = vadd.f32 %v1544, %v1365
        %v1547 = vsel %vm1014, %v1545, -inf
        %1548 = vmax.xlane.f32.xlu0 %v1547
        %v1549 = vpop.xlane.xlu0 %1548
        %v1550 = vsel %vm1014, %v1546, -inf
        %1551 = vmax.xlane.f32.xlu0 %v1550
        %v1552 = vpop.xlane.xlu0 %1551
        %v1553 = vsub.f32 %v1545, %v1549
        %v1554 = vsub.f32 %v1546, %v1552
        %v1555 = vmul.f32 %v1553, 1.442695
        %v1556 = vpow.pop %v1555
        %v1557 = vmul.f32 %v1554, 1.442695
        %v1558 = vpow.pop %v1557
        %v1559 = vsel %vm1014, %v1556, 0.0
        %1560 = vadd.xlane.f32.xlu0 %v1559
        %v1561 = vpop.xlane.xlu0 %1560
        %v1562 = vsel %vm1014, %v1558, 0.0
        %1563 = vadd.xlane.f32.xlu0 %v1562
        %v1564 = vpop.xlane.xlu0 %1563
        %v1565 = vrcp.pop %v1561
        %v1566 = vrcp.pop %v1564
        %v1567 = vmul.f32 %v1556, %v1565
        %v1568 = vmul.f32 %v1558, %v1566
        %v1569 = vpack.c.bf16 %v1568, %v1567
        %1570 = vrot.lane.b32.xlu0 %v1366, 48
        %v1571 = vpop.permute.xlu0 %1570
        %v1574 = vsel %vm1014, %v1569, 0
        %1576 = vmatprep.subr.bf16.mxu0 0
        %1577 = vmatpush1.bf16.msra.mxu0 0
        %1578 = vmatprep.subr.bf16.mxu0 0
        %1579 = vmatpush1.bf16.msra.mxu0 0
        %1580 = vmatprep.subr.bf16.mxu0 0
        %1581 = vmatpush1.bf16.msra.mxu0 0
        %1582 = vmatprep.subr.bf16.mxu0 0
        %1583 = vmatpush1.bf16.msra.mxu0 0
        %1584 = vmatprep.subr.bf16.mxu0 0
        %1585 = vmatpush1.bf16.msra.mxu0 0
        %1586 = vmatprep.subr.bf16.mxu0 0
        %1587 = vmatpush1.bf16.msra.mxu0 0
        %1588 = vmatprep.subr.bf16.mxu0 0
        %1589 = vmatpush1.bf16.msra.mxu0 0
        %1590 = vmatprep.subr.bf16.mxu0 0
        %1591 = vmatpush1.bf16.msra.mxu0 %v1571
        %1592 = vmatprep.subr.bf16.mxu0 0
        %1593 = vmatpush2.bf16.msra.mxu0 0
        %1594 = vmatprep.subr.bf16.mxu0 0
        %1595 = vmatpush2.bf16.msra.mxu0 0
        %1596 = vmatprep.subr.bf16.mxu0 0
        %1597 = vmatpush2.bf16.msra.mxu0 0
        %1598 = vmatprep.subr.bf16.mxu0 0
        %1599 = vmatpush2.bf16.msra.mxu0 0
        %1600 = vmatprep.subr.bf16.mxu0 0
        %1601 = vmatpush2.bf16.msra.mxu0 0
        %1602 = vmatprep.subr.bf16.mxu0 0
        %1603 = vmatpush2.bf16.msra.mxu0 0
        %1604 = vmatprep.subr.bf16.mxu0 0
        %1605 = vmatpush2.bf16.msra.mxu0 0
        %1606 = vmatprep.subr.bf16.mxu0 0
        %1607 = vmatpush2.bf16.msra.mxu0 0
        %1608 = vmatprep.mubr.bf16.mxu0 0
        %1609 = vmatmul.mubr.bf16.gmra.mxu0 %v1574
        %v1610 = vpop.f32.mrf.mxu0
        %v1611 = vadd.f32 0.0, %v1610
        %v1612 = vpop.f32.mrf.mxu0
        %v1613 = vpop.f32.mrf.mxu0
        %v1614 = vadd.f32 0.0, %v1613
        %v1615 = vpop.f32.mrf.mxu0
        %1616 = vdwg.mxu0
        %v1617 = vpack.c.bf16 %v1614, %v1611
        %v1619 = vsel %vm1014, %v1617, 0
        %1621 = vmatprep.subr.bf16.mxu0 0
        %1622 = vmatpush1.bf16.msra.mxu0 0
        %1623 = vmatprep.subr.bf16.mxu0 0
        %1624 = vmatpush1.bf16.msra.mxu0 0
        %1625 = vmatprep.subr.bf16.mxu0 0
        %1626 = vmatpush1.bf16.msra.mxu0 0
        %1627 = vmatprep.subr.bf16.mxu0 0
        %1628 = vmatpush1.bf16.msra.mxu0 0
        %1629 = vmatprep.subr.bf16.mxu0 0
        %1630 = vmatpush1.bf16.msra.mxu0 0
        %1631 = vmatprep.subr.bf16.mxu0 0
        %1632 = vmatpush1.bf16.msra.mxu0 0
        %1633 = vmatprep.subr.bf16.mxu0 0
        %1634 = vmatpush1.bf16.msra.mxu0 0
        %1635 = vmatprep.subr.bf16.mxu0 0
        %1636 = vmatpush1.bf16.msra.mxu0 %v1267
        %1637 = vmatprep.subr.bf16.mxu0 0
        %1638 = vmatpush2.bf16.msra.mxu0 0
        %1639 = vmatprep.subr.bf16.mxu0 0
        %1640 = vmatpush2.bf16.msra.mxu0 0
        %1641 = vmatprep.subr.bf16.mxu0 0
        %1642 = vmatpush2.bf16.msra.mxu0 0
        %1643 = vmatprep.subr.bf16.mxu0 0
        %1644 = vmatpush2.bf16.msra.mxu0 0
        %1645 = vmatprep.subr.bf16.mxu0 0
        %1646 = vmatpush2.bf16.msra.mxu0 0
        %1647 = vmatprep.subr.bf16.mxu0 0
        %1648 = vmatpush2.bf16.msra.mxu0 0
        %1649 = vmatprep.subr.bf16.mxu0 0
        %1650 = vmatpush2.bf16.msra.mxu0 0
        %1651 = vmatprep.subr.bf16.mxu0 0
        %1652 = vmatpush2.bf16.msra.mxu0 0
        %1653 = vmatprep.mubr.bf16.mxu0 0
        %1654 = vmatmul.mubr.bf16.gmra.mxu0 %v1619
        %v1655 = vpop.f32.mrf.mxu0
        %v1656 = vadd.f32 0.0, %v1655
        %v1657 = vpop.f32.mrf.mxu0
        %v1658 = vpop.f32.mrf.mxu0
        %v1659 = vadd.f32 0.0, %v1658
        %v1660 = vpop.f32.mrf.mxu0
        %1661 = vdwg.mxu0
        %v1663 = vsel %vm1014, %v1491, 0
        %1665 = vmatprep.subr.bf16.mxu0 0
        %1666 = vmatpush1.bf16.msra.mxu0 0
        %1667 = vmatprep.subr.bf16.mxu0 0
        %1668 = vmatpush1.bf16.msra.mxu0 0
        %1669 = vmatprep.subr.bf16.mxu0 0
        %1670 = vmatpush1.bf16.msra.mxu0 0
        %1671 = vmatprep.subr.bf16.mxu0 0
        %1672 = vmatpush1.bf16.msra.mxu0 0
        %1673 = vmatprep.subr.bf16.mxu0 0
        %1674 = vmatpush1.bf16.msra.mxu0 0
        %1675 = vmatprep.subr.bf16.mxu0 0
        %1676 = vmatpush1.bf16.msra.mxu0 0
        %1677 = vmatprep.subr.bf16.mxu0 0
        %1678 = vmatpush1.bf16.msra.mxu0 0
        %1679 = vmatprep.subr.bf16.mxu0 0
        %1680 = vmatpush1.bf16.msra.mxu0 %v1317
        %1681 = vmatprep.subr.bf16.mxu0 0
        %1682 = vmatpush2.bf16.msra.mxu0 0
        %1683 = vmatprep.subr.bf16.mxu0 0
        %1684 = vmatpush2.bf16.msra.mxu0 0
        %1685 = vmatprep.subr.bf16.mxu0 0
        %1686 = vmatpush2.bf16.msra.mxu0 0
        %1687 = vmatprep.subr.bf16.mxu0 0
        %1688 = vmatpush2.bf16.msra.mxu0 0
        %1689 = vmatprep.subr.bf16.mxu0 0
        %1690 = vmatpush2.bf16.msra.mxu0 0
        %1691 = vmatprep.subr.bf16.mxu0 0
        %1692 = vmatpush2.bf16.msra.mxu0 0
        %1693 = vmatprep.subr.bf16.mxu0 0
        %1694 = vmatpush2.bf16.msra.mxu0 0
        %1695 = vmatprep.subr.bf16.mxu0 0
        %1696 = vmatpush2.bf16.msra.mxu0 0
        %1697 = vmatprep.mubr.bf16.mxu0 0
        %1698 = vmatmul.mubr.bf16.gmra.mxu0 %v1663
        %v1699 = vpop.f32.mrf.mxu0
        %v1700 = vadd.f32 %v1656, %v1699
        %v1701 = vpop.f32.mrf.mxu0
        %v1702 = vpop.f32.mrf.mxu0
        %v1703 = vadd.f32 %v1659, %v1702
        %v1704 = vpop.f32.mrf.mxu0
        %1705 = vdwg.mxu0
        %v1706 = vld [vmem:[%s763] sm:$0x1]
        %v1708 = vlaneseq
        %v1709 = vshrl.u32 %v1708, 7
        %v1710 = vsub.s32 0, %v1709
        %v1711 = vrot.slane %v1706, %v1710
        %v1713 = vadd.f32 %v1357, %v1711
        %v1714 = vadd.f32 %v1360, %v1711
        %v1715 = vadd.f32 %v1700, %v1711
        %v1716 = vadd.f32 %v1703, %v1711
        %v1717 = vadd.f32 %v844, %v1713
        %v1718 = vadd.f32 %v845, %v1714
        %v1719 = vadd.f32 %v846, %v1715
        %v1720 = vadd.f32 %v847, %v1716
        %v1721 = vld [vmem:[%s766] sm:$0x1]
        %v1722 = vld [vmem:[%s769] sm:$0x1]
        %v1723 = vsel %vm854, %v1717, 0.0
        %1724 = vadd.xlane.f32.xlu0 %v1723
        %v1725 = vpop.xlane.xlu0 %1724
        %v1726 = vsel %vm854, %v1718, 0.0
        %1727 = vadd.xlane.f32.xlu0 %v1726
        %v1728 = vpop.xlane.xlu0 %1727
        %v1729 = vsel %vm854, %v1719, 0.0
        %1730 = vadd.xlane.f32.xlu0 %v1729
        %v1731 = vpop.xlane.xlu0 %1730
        %v1732 = vsel %vm854, %v1720, 0.0
        %1733 = vadd.xlane.f32.xlu0 %v1732
        %v1734 = vpop.xlane.xlu0 %1733
        %v1735 = vmul.f32 %v1725, %v867
        %v1736 = vmul.f32 %v1728, %v867
        %v1737 = vmul.f32 %v1731, %v867
        %v1738 = vmul.f32 %v1734, %v867
        %v1739 = vsub.f32 %v1717, %v1735
        %v1740 = vsub.f32 %v1718, %v1736
        %v1741 = vsub.f32 %v1719, %v1737
        %v1742 = vsub.f32 %v1720, %v1738
        %v1743 = vmul.f32 %v1739, %v1739
        %v1744 = vmul.f32 %v1740, %v1740
        %v1745 = vmul.f32 %v1741, %v1741
        %v1746 = vmul.f32 %v1742, %v1742
        %v1747 = vsel %vm854, %v1743, 0.0
        %1748 = vadd.xlane.f32.xlu0 %v1747
        %v1749 = vpop.xlane.xlu0 %1748
        %v1750 = vsel %vm854, %v1744, 0.0
        %1751 = vadd.xlane.f32.xlu0 %v1750
        %v1752 = vpop.xlane.xlu0 %1751
        %v1753 = vsel %vm854, %v1745, 0.0
        %1754 = vadd.xlane.f32.xlu0 %v1753
        %v1755 = vpop.xlane.xlu0 %1754
        %v1756 = vsel %vm854, %v1746, 0.0
        %1757 = vadd.xlane.f32.xlu0 %v1756
        %v1758 = vpop.xlane.xlu0 %1757
        %v1759 = vmul.f32 %v1749, %v867
        %v1760 = vmul.f32 %v1752, %v867
        %v1761 = vmul.f32 %v1755, %v867
        %v1762 = vmul.f32 %v1758, %v867
        %v1763 = vadd.f32 %v1759, 1e-05
        %v1764 = vadd.f32 %v1760, 1e-05
        %v1765 = vadd.f32 %v1761, 1e-05
        %v1766 = vadd.f32 %v1762, 1e-05
        %v1767 = vrsqrt.pop %v1763
        %v1768 = vrsqrt.pop %v1764
        %v1769 = vrsqrt.pop %v1765
        %v1770 = vrsqrt.pop %v1766
        %v1771 = vmul.f32 %v1739, %v1767
        %v1772 = vmul.f32 %v1740, %v1768
        %v1773 = vmul.f32 %v1741, %v1769
        %v1774 = vmul.f32 %v1742, %v1770
        %v1776 = vlaneseq
        %v1777 = vshrl.u32 %v1776, 7
        %v1778 = vsub.s32 0, %v1777
        %v1779 = vrot.slane %v1721, %v1778
        %v1781 = vmul.f32 %v1771, %v1779
        %v1782 = vmul.f32 %v1772, %v1779
        %v1783 = vmul.f32 %v1773, %v1779
        %v1784 = vmul.f32 %v1774, %v1779
        %v1786 = vlaneseq
        %v1787 = vshrl.u32 %v1786, 7
        %v1788 = vsub.s32 0, %v1787
        %v1789 = vrot.slane %v1722, %v1788
        %v1791 = vadd.f32 %v1781, %v1789
        %v1792 = vadd.f32 %v1782, %v1789
        %v1793 = vadd.f32 %v1783, %v1789
        %v1794 = vadd.f32 %v1784, %v1789
        %v1795 = vpack.c.bf16 %v1792, %v1791
        %v1796 = vpack.c.bf16 %v1794, %v1793
        %v1797 = vld [vmem:[%s774] sm:$0xf]
        %v1798 = vld [vmem:[%s774 + $0x4] sm:$0xf]
        %v1799 = vld [vmem:[%s774 + $0x8] sm:$0xf]
        %v1800 = vld [vmem:[%s774 + $0xc] sm:$0xf]
        %v1801 = vld [vmem:[%s777] sm:$0x1]
        %v1803 = vlaneseq
        %v1804 = vshrl.u32 %v1803, 7
        %v1805 = vsub.s32 0, %v1804
        %v1806 = vrot.slane %v1801, %v1805
        %v1812 = vunpack.c.l.b16 %v1797
        %v1813 = vunpack.c.l.b16 %v1798
        %v1814 = vunpack.c.l.b16 %v1799
        %v1815 = vunpack.c.l.b16 %v1800
        %v1816 = vpack.c.b16 %v1813, %v1812
        %v1817 = vpack.c.b16 %v1815, %v1814
        %v1821 = vsel %vm854, %v1795, 0
        %v1824 = vsel %vm854, %v1796, 0
        %1826 = vmatprep.subr.bf16.mxu0 0
        %1827 = vmatpush1.bf16.msra.mxu0 0
        %1828 = vmatprep.subr.bf16.mxu0 0
        %1829 = vmatpush1.bf16.msra.mxu0 0
        %1830 = vmatprep.subr.bf16.mxu0 0
        %1831 = vmatpush1.bf16.msra.mxu0 0
        %1832 = vmatprep.subr.bf16.mxu0 0
        %1833 = vmatpush1.bf16.msra.mxu0 0
        %1834 = vmatprep.subr.bf16.mxu0 0
        %1835 = vmatpush1.bf16.msra.mxu0 0
        %1836 = vmatprep.subr.bf16.mxu0 0
        %1837 = vmatpush1.bf16.msra.mxu0 0
        %1838 = vmatprep.subr.bf16.mxu0 0
        %1839 = vmatpush1.bf16.msra.mxu0 %v1817
        %1840 = vmatprep.subr.bf16.mxu0 0
        %1841 = vmatpush1.bf16.msra.mxu0 %v1816
        %1842 = vmatprep.subr.bf16.mxu0 0
        %1843 = vmatpush2.bf16.msra.mxu0 0
        %1844 = vmatprep.subr.bf16.mxu0 0
        %1845 = vmatpush2.bf16.msra.mxu0 0
        %1846 = vmatprep.subr.bf16.mxu0 0
        %1847 = vmatpush2.bf16.msra.mxu0 0
        %1848 = vmatprep.subr.bf16.mxu0 0
        %1849 = vmatpush2.bf16.msra.mxu0 0
        %1850 = vmatprep.subr.bf16.mxu0 0
        %1851 = vmatpush2.bf16.msra.mxu0 0
        %1852 = vmatprep.subr.bf16.mxu0 0
        %1853 = vmatpush2.bf16.msra.mxu0 0
        %1854 = vmatprep.subr.bf16.mxu0 0
        %1855 = vmatpush2.bf16.msra.mxu0 0
        %1856 = vmatprep.subr.bf16.mxu0 0
        %1857 = vmatpush2.bf16.msra.mxu0 0
        %1858 = vmatprep.mubr.bf16.mxu0 0
        %1859 = vmatmul.mubr.bf16.gmra.mxu0 %v1821
        %v1860 = vpop.f32.mrf.mxu0
        %v1861 = vadd.f32 %v1806, %v1860
        %v1862 = vpop.f32.mrf.mxu0
        %v1863 = vpop.f32.mrf.mxu0
        %v1864 = vadd.f32 %v1806, %v1863
        %v1865 = vpop.f32.mrf.mxu0
        %1866 = vmatprep.mubr.bf16.mxu0 0
        %1867 = vmatmul.mubr.bf16.gmra.mxu0 %v1824
        %v1868 = vpop.f32.mrf.mxu0
        %v1869 = vadd.f32 %v1806, %v1868
        %v1870 = vpop.f32.mrf.mxu0
        %v1871 = vpop.f32.mrf.mxu0
        %v1872 = vadd.f32 %v1806, %v1871
        %v1873 = vpop.f32.mrf.mxu0
        %1874 = vdwg.mxu0
        %v1875 = vmul.f32 %v1861, 0.5
        %v1876 = vmul.f32 %v1864, 0.5
        %v1877 = vmul.f32 %v1869, 0.5
        %v1878 = vmul.f32 %v1872, 0.5
        %v1879 = vmul.f32 %v1861, 0.044715
        %v1880 = vmul.f32 %v1864, 0.044715
        %v1881 = vmul.f32 %v1869, 0.044715
        %v1882 = vmul.f32 %v1872, 0.044715
        %v1883 = vmul.f32 %v1879, %v1861
        %v1884 = vmul.f32 %v1880, %v1864
        %v1885 = vmul.f32 %v1881, %v1869
        %v1886 = vmul.f32 %v1882, %v1872
        %v1887 = vmul.f32 %v1883, %v1861
        %v1888 = vmul.f32 %v1884, %v1864
        %v1889 = vmul.f32 %v1885, %v1869
        %v1890 = vmul.f32 %v1886, %v1872
        %v1891 = vadd.f32 %v1861, %v1887
        %v1892 = vadd.f32 %v1864, %v1888
        %v1893 = vadd.f32 %v1869, %v1889
        %v1894 = vadd.f32 %v1872, %v1890
        %v1895 = vmul.f32 %v1891, 0.7978846
        %v1896 = vmul.f32 %v1892, 0.7978846
        %v1897 = vmul.f32 %v1893, 0.7978846
        %v1898 = vmul.f32 %v1894, 0.7978846
        %v1899 = vtanh.pop %v1895
        %v1900 = vtanh.pop %v1896
        %v1901 = vtanh.pop %v1897
        %v1902 = vtanh.pop %v1898
        %v1903 = vadd.f32 %v1899, 1.0
        %v1904 = vadd.f32 %v1900, 1.0
        %v1905 = vadd.f32 %v1901, 1.0
        %v1906 = vadd.f32 %v1902, 1.0
        %v1907 = vmul.f32 %v1875, %v1903
        %v1908 = vmul.f32 %v1876, %v1904
        %v1909 = vmul.f32 %v1877, %v1905
        %v1910 = vmul.f32 %v1878, %v1906
        %v1911 = vpack.c.bf16 %v1908, %v1907
        %v1912 = vpack.c.bf16 %v1910, %v1909
        %v1913 = vld [vmem:[%s782] sm:$0xf]
        %v1914 = vld [vmem:[%s782 + $0x4] sm:$0xf]
        %v1915 = vld [vmem:[%s782 + $0x8] sm:$0xf]
        %v1916 = vld [vmem:[%s782 + $0xc] sm:$0xf]
        %v1917 = vld [vmem:[%s782 + $0x10] sm:$0xf]
        %v1918 = vld [vmem:[%s782 + $0x14] sm:$0xf]
        %v1919 = vld [vmem:[%s782 + $0x18] sm:$0xf]
        %v1920 = vld [vmem:[%s782 + $0x1c] sm:$0xf]
        %v1921 = vld [vmem:[%s782 + $0x20] sm:$0xf]
        %v1922 = vld [vmem:[%s782 + $0x24] sm:$0xf]
        %v1923 = vld [vmem:[%s782 + $0x28] sm:$0xf]
        %v1924 = vld [vmem:[%s782 + $0x2c] sm:$0xf]
        %v1925 = vld [vmem:[%s782 + $0x30] sm:$0xf]
        %v1926 = vld [vmem:[%s782 + $0x34] sm:$0xf]
        %v1927 = vld [vmem:[%s782 + $0x38] sm:$0xf]
        %v1928 = vld [vmem:[%s782 + $0x3c] sm:$0xf]
        %v1929 = vld [vmem:[%s785] sm:$0x1]
        %v1931 = vlaneseq
        %v1932 = vshrl.u32 %v1931, 7
        %v1933 = vsub.s32 0, %v1932
        %v1934 = vrot.slane %v1929, %v1933
        %v1952 = vunpack.c.l.b16 %v1913
        %v1953 = vunpack.c.l.b16 %v1914
        %v1954 = vunpack.c.l.b16 %v1915
        %v1955 = vunpack.c.l.b16 %v1916
        %v1956 = vunpack.c.l.b16 %v1917
        %v1957 = vunpack.c.l.b16 %v1918
        %v1958 = vunpack.c.l.b16 %v1919
        %v1959 = vunpack.c.l.b16 %v1920
        %v1960 = vunpack.c.l.b16 %v1921
        %v1961 = vunpack.c.l.b16 %v1922
        %v1962 = vunpack.c.l.b16 %v1923
        %v1963 = vunpack.c.l.b16 %v1924
        %v1964 = vunpack.c.l.b16 %v1925
        %v1965 = vunpack.c.l.b16 %v1926
        %v1966 = vunpack.c.l.b16 %v1927
        %v1967 = vunpack.c.l.b16 %v1928
        %v1968 = vpack.c.b16 %v1953, %v1952
        %v1969 = vpack.c.b16 %v1955, %v1954
        %v1970 = vpack.c.b16 %v1957, %v1956
        %v1971 = vpack.c.b16 %v1959, %v1958
        %v1972 = vpack.c.b16 %v1961, %v1960
        %v1973 = vpack.c.b16 %v1963, %v1962
        %v1974 = vpack.c.b16 %v1965, %v1964
        %v1975 = vpack.c.b16 %v1967, %v1966
        %1984 = vmatprep.subr.bf16.mxu0 0
        %1985 = vmatpush1.bf16.msra.mxu0 %v1975
        %1986 = vmatprep.subr.bf16.mxu0 0
        %1987 = vmatpush1.bf16.msra.mxu0 %v1974
        %1988 = vmatprep.subr.bf16.mxu0 0
        %1989 = vmatpush1.bf16.msra.mxu0 %v1973
        %1990 = vmatprep.subr.bf16.mxu0 0
        %1991 = vmatpush1.bf16.msra.mxu0 %v1972
        %1992 = vmatprep.subr.bf16.mxu0 0
        %1993 = vmatpush1.bf16.msra.mxu0 %v1971
        %1994 = vmatprep.subr.bf16.mxu0 0
        %1995 = vmatpush1.bf16.msra.mxu0 %v1970
        %1996 = vmatprep.subr.bf16.mxu0 0
        %1997 = vmatpush1.bf16.msra.mxu0 %v1969
        %1998 = vmatprep.subr.bf16.mxu0 0
        %1999 = vmatpush1.bf16.msra.mxu0 %v1968
        %2000 = vmatprep.subr.bf16.mxu0 0
        %2001 = vmatpush2.bf16.msra.mxu0 0
        %2002 = vmatprep.subr.bf16.mxu0 0
        %2003 = vmatpush2.bf16.msra.mxu0 0
        %2004 = vmatprep.subr.bf16.mxu0 0
        %2005 = vmatpush2.bf16.msra.mxu0 0
        %2006 = vmatprep.subr.bf16.mxu0 0
        %2007 = vmatpush2.bf16.msra.mxu0 0
        %2008 = vmatprep.subr.bf16.mxu0 0
        %2009 = vmatpush2.bf16.msra.mxu0 0
        %2010 = vmatprep.subr.bf16.mxu0 0
        %2011 = vmatpush2.bf16.msra.mxu0 0
        %2012 = vmatprep.subr.bf16.mxu0 0
        %2013 = vmatpush2.bf16.msra.mxu0 0
        %2014 = vmatprep.subr.bf16.mxu0 0
        %2015 = vmatpush2.bf16.msra.mxu0 0
        %2016 = vmatprep.mubr.bf16.mxu0 0
        %2017 = vmatmul.mubr.bf16.gmra.mxu0 %v1911
        %v2018 = vpop.f32.mrf.mxu0
        %v2019 = vadd.f32 %v1934, %v2018
        %v2020 = vpop.f32.mrf.mxu0
        %v2021 = vpop.f32.mrf.mxu0
        %v2022 = vadd.f32 %v1934, %v2021
        %v2023 = vpop.f32.mrf.mxu0
        %2024 = vmatprep.mubr.bf16.mxu0 0
        %2025 = vmatmul.mubr.bf16.gmra.mxu0 %v1912
        %v2026 = vpop.f32.mrf.mxu0
        %v2027 = vadd.f32 %v1934, %v2026
        %v2028 = vpop.f32.mrf.mxu0
        %v2029 = vpop.f32.mrf.mxu0
        %v2030 = vadd.f32 %v1934, %v2029
        %v2031 = vpop.f32.mrf.mxu0
        %2032 = vdwg.mxu0
        %v2033 = vadd.f32 %v1717, %v2019
        %v2034 = vadd.f32 %v1718, %v2022
        %v2035 = vadd.f32 %v1719, %v2027
        %v2036 = vadd.f32 %v1720, %v2030
        %2037 = vst.msk [vmem:[#allocation2] sm:$0xff] %vm854, %v2033
        %2038 = vst.msk [vmem:[#allocation2 + $0x8] sm:$0xff] %vm854, %v2034
        %2039 = vst.msk [vmem:[#allocation2 + $0x10] sm:$0xff] %vm854, %v2035
        %2040 = vst.msk [vmem:[#allocation2 + $0x18] sm:$0xff] %vm854, %v2036
        %p2041 = scmp.eq.s32.totalorder %s33, 1
        // Predicated region
        $region101: #{encoder_decoder_forward.3} parent=95 // pred_check
          %p2042 = pneg %p2041
        $region102: #{encoder_decoder_forward.3} parent=95 // pred_check_branch
          %2044 = sbr.rel (%p2042) target = $region104
        $region103: #{encoder_decoder_forward.3} parent=95 // pred_region
          %v2045 = vld [vmem:[#allocation2] sm:$0xff]
          %v2046 = vld [vmem:[#allocation2 + $0x8] sm:$0xff]
          %v2047 = vld [vmem:[#allocation2 + $0x10] sm:$0xff]
          %v2048 = vld [vmem:[#allocation2 + $0x18] sm:$0xff]
          %v2049 = vld [vmem:[%s16] sm:$0x1]
          %v2050 = vld [vmem:[%s17] sm:$0x1]
          %v2051 = vsel %vm854, %v2045, 0.0
          %2052 = vadd.xlane.f32.xlu0 %v2051
          %v2053 = vpop.xlane.xlu0 %2052
          %v2054 = vsel %vm854, %v2046, 0.0
          %2055 = vadd.xlane.f32.xlu0 %v2054
          %v2056 = vpop.xlane.xlu0 %2055
          %v2057 = vsel %vm854, %v2047, 0.0
          %2058 = vadd.xlane.f32.xlu0 %v2057
          %v2059 = vpop.xlane.xlu0 %2058
          %v2060 = vsel %vm854, %v2048, 0.0
          %2061 = vadd.xlane.f32.xlu0 %v2060
          %v2062 = vpop.xlane.xlu0 %2061
          %v2063 = vmul.f32 %v2053, %v867
          %v2064 = vmul.f32 %v2056, %v867
          %v2065 = vmul.f32 %v2059, %v867
          %v2066 = vmul.f32 %v2062, %v867
          %v2067 = vsub.f32 %v2045, %v2063
          %v2068 = vsub.f32 %v2046, %v2064
          %v2069 = vsub.f32 %v2047, %v2065
          %v2070 = vsub.f32 %v2048, %v2066
          %v2071 = vmul.f32 %v2067, %v2067
          %v2072 = vmul.f32 %v2068, %v2068
          %v2073 = vmul.f32 %v2069, %v2069
          %v2074 = vmul.f32 %v2070, %v2070
          %v2075 = vsel %vm854, %v2071, 0.0
          %2076 = vadd.xlane.f32.xlu0 %v2075
          %v2077 = vpop.xlane.xlu0 %2076
          %v2078 = vsel %vm854, %v2072, 0.0
          %2079 = vadd.xlane.f32.xlu0 %v2078
          %v2080 = vpop.xlane.xlu0 %2079
          %v2081 = vsel %vm854, %v2073, 0.0
          %2082 = vadd.xlane.f32.xlu0 %v2081
          %v2083 = vpop.xlane.xlu0 %2082
          %v2084 = vsel %vm854, %v2074, 0.0
          %2085 = vadd.xlane.f32.xlu0 %v2084
          %v2086 = vpop.xlane.xlu0 %2085
          %v2087 = vmul.f32 %v2077, %v867
          %v2088 = vmul.f32 %v2080, %v867
          %v2089 = vmul.f32 %v2083, %v867
          %v2090 = vmul.f32 %v2086, %v867
          %v2091 = vadd.f32 %v2087, 1e-05
          %v2092 = vadd.f32 %v2088, 1e-05
          %v2093 = vadd.f32 %v2089, 1e-05
          %v2094 = vadd.f32 %v2090, 1e-05
          %v2095 = vrsqrt.pop %v2091
          %v2096 = vrsqrt.pop %v2092
          %v2097 = vrsqrt.pop %v2093
          %v2098 = vrsqrt.pop %v2094
          %v2099 = vmul.f32 %v2067, %v2095
          %v2100 = vmul.f32 %v2068, %v2096
          %v2101 = vmul.f32 %v2069, %v2097
          %v2102 = vmul.f32 %v2070, %v2098
          %v2104 = vlaneseq
          %v2105 = vshrl.u32 %v2104, 7
          %v2106 = vsub.s32 0, %v2105
          %v2107 = vrot.slane %v2049, %v2106
          %v2109 = vmul.f32 %v2099, %v2107
          %v2110 = vmul.f32 %v2100, %v2107
          %v2111 = vmul.f32 %v2101, %v2107
          %v2112 = vmul.f32 %v2102, %v2107
          %v2114 = vlaneseq
          %v2115 = vshrl.u32 %v2114, 7
          %v2116 = vsub.s32 0, %v2115
          %v2117 = vrot.slane %v2050, %v2116
          %v2119 = vadd.f32 %v2109, %v2117
          %v2120 = vadd.f32 %v2110, %v2117
          %v2121 = vadd.f32 %v2111, %v2117
          %v2122 = vadd.f32 %v2112, %v2117
          %v2123 = vpack.c.bf16 %v2120, %v2119
          %v2124 = vpack.c.bf16 %v2122, %v2121
          %v2125 = vld [vmem:[%s18] sm:$0xf]
          %v2126 = vld [vmem:[%s18 + $0x4] sm:$0xf]
          %v2127 = vld [vmem:[%s18 + $0x8] sm:$0xf]
          %v2128 = vld [vmem:[%s18 + $0xc] sm:$0xf]
          %v2129 = vld [vmem:[%s18 + $0x10] sm:$0xf]
          %v2130 = vld [vmem:[%s18 + $0x14] sm:$0xf]
          %v2131 = vld [vmem:[%s18 + $0x18] sm:$0xf]
          %v2132 = vld [vmem:[%s18 + $0x1c] sm:$0xf]
          %v2133 = vld [vmem:[%s18 + $0x20] sm:$0xf]
          %v2134 = vld [vmem:[%s18 + $0x24] sm:$0xf]
          %v2135 = vld [vmem:[%s18 + $0x28] sm:$0xf]
          %v2136 = vld [vmem:[%s18 + $0x2c] sm:$0xf]
          %v2137 = vld [vmem:[%s18 + $0x30] sm:$0xf]
          %v2138 = vld [vmem:[%s18 + $0x34] sm:$0xf]
          %v2139 = vld [vmem:[%s18 + $0x38] sm:$0xf]
          %v2140 = vld [vmem:[%s18 + $0x3c] sm:$0xf]
          %v2157 = vunpack.c.l.b16 %v2125
          %v2158 = vunpack.c.l.b16 %v2126
          %v2159 = vunpack.c.l.b16 %v2127
          %v2160 = vunpack.c.l.b16 %v2128
          %v2161 = vunpack.c.l.b16 %v2129
          %v2162 = vunpack.c.l.b16 %v2130
          %v2163 = vunpack.c.l.b16 %v2131
          %v2164 = vunpack.c.l.b16 %v2132
          %v2165 = vunpack.c.l.b16 %v2133
          %v2166 = vunpack.c.l.b16 %v2134
          %v2167 = vunpack.c.l.b16 %v2135
          %v2168 = vunpack.c.l.b16 %v2136
          %v2169 = vunpack.c.l.b16 %v2137
          %v2170 = vunpack.c.l.b16 %v2138
          %v2171 = vunpack.c.l.b16 %v2139
          %v2172 = vunpack.c.l.b16 %v2140
          %v2173 = vpack.c.b16 %v2158, %v2157
          %v2174 = vpack.c.b16 %v2160, %v2159
          %v2175 = vpack.c.b16 %v2162, %v2161
          %v2176 = vpack.c.b16 %v2164, %v2163
          %v2177 = vpack.c.b16 %v2166, %v2165
          %v2178 = vpack.c.b16 %v2168, %v2167
          %v2179 = vpack.c.b16 %v2170, %v2169
          %v2180 = vpack.c.b16 %v2172, %v2171
          %v2182 = vsel %vm854, %v2123, 0
          %v2185 = vsel %vm854, %v2124, 0
          %v2188 = vsel %vm854, %v2173, 0
          %v2191 = vsel %vm854, %v2174, 0
          %v2194 = vsel %vm854, %v2175, 0
          %v2197 = vsel %vm854, %v2176, 0
          %v2200 = vsel %vm854, %v2177, 0
          %v2203 = vsel %vm854, %v2178, 0
          %v2206 = vsel %vm854, %v2179, 0
          %v2209 = vsel %vm854, %v2180, 0
          %2211 = vmatprep.subr.bf16.mxu0 0
          %2212 = vmatpush1.bf16.xpose.msra.mxu0 %v2209
          %2213 = vmatprep.subr.bf16.mxu0 0
          %2214 = vmatpush1.bf16.xpose.msra.mxu0 %v2206
          %2215 = vmatprep.subr.bf16.mxu0 0
          %2216 = vmatpush1.bf16.xpose.msra.mxu0 %v2203
          %2217 = vmatprep.subr.bf16.mxu0 0
          %2218 = vmatpush1.bf16.xpose.msra.mxu0 %v2200
          %2219 = vmatprep.subr.bf16.mxu0 0
          %2220 = vmatpush1.bf16.xpose.msra.mxu0 %v2197
          %2221 = vmatprep.subr.bf16.mxu0 0
          %2222 = vmatpush1.bf16.xpose.msra.mxu0 %v2194
          %2223 = vmatprep.subr.bf16.mxu0 0
          %2224 = vmatpush1.bf16.xpose.msra.mxu0 %v2191
          %2225 = vmatprep.subr.bf16.mxu0 0
          %2226 = vmatpush1.bf16.xpose.msra.mxu0 %v2188
          %2227 = vmatprep.subr.bf16.mxu0 0
          %2228 = vmatpush2.bf16.xpose.msra.mxu0 0
          %2229 = vmatprep.subr.bf16.mxu0 0
          %2230 = vmatpush2.bf16.xpose.msra.mxu0 0
          %2231 = vmatprep.subr.bf16.mxu0 0
          %2232 = vmatpush2.bf16.xpose.msra.mxu0 0
          %2233 = vmatprep.subr.bf16.mxu0 0
          %2234 = vmatpush2.bf16.xpose.msra.mxu0 0
          %2235 = vmatprep.subr.bf16.mxu0 0
          %2236 = vmatpush2.bf16.xpose.msra.mxu0 0
          %2237 = vmatprep.subr.bf16.mxu0 0
          %2238 = vmatpush2.bf16.xpose.msra.mxu0 0
          %2239 = vmatprep.subr.bf16.mxu0 0
          %2240 = vmatpush2.bf16.xpose.msra.mxu0 0
          %2241 = vmatprep.subr.bf16.mxu0 0
          %2242 = vmatpush2.bf16.xpose.msra.mxu0 0
          %2243 = vmatprep.mubr.bf16.mxu0 0
          %2244 = vmatmul.mubr.bf16.gmra.mxu0 %v2182
          %v2245 = vpop.f32.mrf.mxu0
          %v2246 = vadd.f32 0.0, %v2245
          %v2247 = vpop.f32.mrf.mxu0
          %v2248 = vpop.f32.mrf.mxu0
          %v2249 = vadd.f32 0.0, %v2248
          %v2250 = vpop.f32.mrf.mxu0
          %2251 = vmatprep.mubr.bf16.mxu0 0
          %2252 = vmatmul.mubr.bf16.gmra.mxu0 %v2185
          %v2253 = vpop.f32.mrf.mxu0
          %v2254 = vadd.f32 0.0, %v2253
          %v2255 = vpop.f32.mrf.mxu0
          %v2256 = vpop.f32.mrf.mxu0
          %v2257 = vadd.f32 0.0, %v2256
          %v2258 = vpop.f32.mrf.mxu0
          %2259 = vdwg.mxu0
          %2260 = vst [vmem:[%s19] sm:$0xff] %v2246
          %2261 = vst [vmem:[%s19 + $0x8] sm:$0xff] %v2249
          %2262 = vst [vmem:[%s19 + $0x10] sm:$0xff] %v2254
          %2263 = vst [vmem:[%s19 + $0x18] sm:$0xff] %v2257
          %v2264 = vld [vmem:[%s3] sm:$0xff]
          %v2265 = vld [vmem:[%s3 + $0x8] sm:$0xff]
          %v2266 = vld [vmem:[%s3 + $0x10] sm:$0xff]
          %v2267 = vld [vmem:[%s3 + $0x18] sm:$0xff]
          %vm2268 = vcmp.ne.s32.totalorder %v2264, 4294967196
          %vm2269 = vcmp.ne.s32.totalorder %v2265, 4294967196
          %vm2270 = vcmp.ne.s32.totalorder %v2266, 4294967196
          %vm2271 = vcmp.ne.s32.totalorder %v2267, 4294967196
          %v2272 = vsel %vm2268, 1, 0
          %v2273 = vsel %vm2269, 1, 0
          %v2274 = vsel %vm2270, 1, 0
          %v2275 = vsel %vm2271, 1, 0
          %v2276 = vcvt.s32.f32 %v2272
          %v2277 = vcvt.s32.f32 %v2273
          %v2278 = vcvt.s32.f32 %v2274
          %v2279 = vcvt.s32.f32 %v2275
          %v2280 = vlaneseq
          %v2281 = vand.u32 %v2280, 127
          %2282 = vset.pattern.permute.xlu0 0
          %2283 = vperm.xlu0 %2282, %v2264
          %v2284 = vpop.permute.xlu0 %2283
          %2285 = vset.pattern.permute.xlu0 0
          %2286 = vperm.xlu0 %2285, %v2265
          %v2287 = vpop.permute.xlu0 %2286
          %2288 = vset.pattern.permute.xlu0 0
          %2289 = vperm.xlu0 %2288, %v2266
          %v2290 = vpop.permute.xlu0 %2289
          %2291 = vset.pattern.permute.xlu0 0
          %2292 = vperm.xlu0 %2291, %v2267
          %v2293 = vpop.permute.xlu0 %2292
          %vm2294 = vcmp.eq.s32.totalorder %v2281, %v2284
          %vm2295 = vcmp.eq.s32.totalorder %v2281, %v2287
          %vm2296 = vcmp.eq.s32.totalorder %v2281, %v2290
          %vm2297 = vcmp.eq.s32.totalorder %v2281, %v2293
          %v2298 = vsel %vm2294, %v2246, 0.0
          %v2299 = vsel %vm2295, %v2249, 0.0
          %v2300 = vsel %vm2296, %v2254, 0.0
          %v2301 = vsel %vm2297, %v2257, 0.0
          %2302 = vadd.xlane.f32.xlu0 %v2298
          %v2303 = vpop.xlane.xlu0 %2302
          %2304 = vadd.xlane.f32.xlu0 %v2299
          %v2305 = vpop.xlane.xlu0 %2304
          %2306 = vadd.xlane.f32.xlu0 %v2300
          %v2307 = vpop.xlane.xlu0 %2306
          %2308 = vadd.xlane.f32.xlu0 %v2301
          %v2309 = vpop.xlane.xlu0 %2308
          %2310 = vmax.xlane.f32.xlu0 %v2246
          %v2311 = vpop.xlane.xlu0 %2310
          %2312 = vmax.xlane.f32.xlu0 %v2249
          %v2313 = vpop.xlane.xlu0 %2312
          %2314 = vmax.xlane.f32.xlu0 %v2254
          %v2315 = vpop.xlane.xlu0 %2314
          %2316 = vmax.xlane.f32.xlu0 %v2257
          %v2317 = vpop.xlane.xlu0 %2316
          %v2318 = vsub.f32 %v2246, %v2311
          %v2319 = vsub.f32 %v2249, %v2313
          %v2320 = vsub.f32 %v2254, %v2315
          %v2321 = vsub.f32 %v2257, %v2317
          %v2322 = vmul.f32 %v2318, 1.442695
          %v2323 = vpow.pop %v2322
          %v2324 = vmul.f32 %v2319, 1.442695
          %v2325 = vpow.pop %v2324
          %v2326 = vmul.f32 %v2320, 1.442695
          %v2327 = vpow.pop %v2326
          %v2328 = vmul.f32 %v2321, 1.442695
          %v2329 = vpow.pop %v2328
          %2330 = vadd.xlane.f32.xlu0 %v2323
          %v2331 = vpop.xlane.xlu0 %2330
          %2332 = vadd.xlane.f32.xlu0 %v2325
          %v2333 = vpop.xlane.xlu0 %2332
          %2334 = vadd.xlane.f32.xlu0 %v2327
          %v2335 = vpop.xlane.xlu0 %2334
          %2336 = vadd.xlane.f32.xlu0 %v2329
          %v2337 = vpop.xlane.xlu0 %2336
          %v2338 = vlog2.pop %v2331
          %v2339 = vmul.f32 %v2338, 0.6931472
          %v2340 = vlog2.pop %v2333
          %v2341 = vmul.f32 %v2340, 0.6931472
          %v2342 = vlog2.pop %v2335
          %v2343 = vmul.f32 %v2342, 0.6931472
          %v2344 = vlog2.pop %v2337
          %v2345 = vmul.f32 %v2344, 0.6931472
          %v2346 = vadd.f32 %v2311, %v2339
          %v2347 = vadd.f32 %v2313, %v2341
          %v2348 = vadd.f32 %v2315, %v2343
          %v2349 = vadd.f32 %v2317, %v2345
          %v2350 = vsub.f32 %v2346, %v2303
          %v2351 = vsub.f32 %v2347, %v2305
          %v2352 = vsub.f32 %v2348, %v2307
          %v2353 = vsub.f32 %v2349, %v2309
          %v2354 = vmul.f32 %v2350, %v2276
          %v2355 = vmul.f32 %v2351, %v2277
          %v2356 = vmul.f32 %v2352, %v2278
          %v2357 = vmul.f32 %v2353, %v2279
          %vm2358 = vcmask 7168
          %v2359 = vsel %vm2358, %v2354, 0.0
          %v2360 = vsel %vm2358, %v2355, 0.0
          %v2361 = vadd.f32 %v2359, %v2360
          %v2362 = vsel %vm2358, %v2356, 0.0
          %v2363 = vadd.f32 %v2361, %v2362
          %v2364 = vsel %vm2358, %v2357, 0.0
          %v2365 = vadd.f32 %v2363, %v2364
          %v2366 = vrot.slane %v2365, 4
          %v2367 = vadd.f32 %v2365, %v2366
          %v2368 = vrot.slane %v2367, 2
          %v2369 = vadd.f32 %v2367, %v2368
          %v2370 = vrot.slane %v2369, 1
          %v2371 = vadd.f32 %v2369, %v2370
          %vm2372 = vcmask 0
          %2373 = vst.msk [vmem:[#allocation4] sm:$0x1] %vm2372, %v2371
        $region104: #{encoder_decoder_forward.3} parent=95 // pred_fallthru
          _
        // Predicated region
        $region105: #{encoder_decoder_forward.3} parent=95 // pred_check
          %p2374 = pneg %p505
        $region106: #{encoder_decoder_forward.3} parent=95 // pred_check_branch
          %2376 = sbr.rel (%p2374) target = $region108
        $region107: #{encoder_decoder_forward.3} parent=95 // pred_region
          _
        $region108: #{encoder_decoder_forward.3} parent=95 // pred_fallthru
          _
        // Predicated region
        $region109: #{encoder_decoder_forward.3} parent=95 // pred_check
          %p2377 = pneg %p526
        $region110: #{encoder_decoder_forward.3} parent=95 // pred_check_branch
          %2379 = sbr.rel (%p2377) target = $region112
        $region111: #{encoder_decoder_forward.3} parent=95 // pred_region
          %s2381 = ssub.s32 16, 16
          %2382 = vsyncadd [#allocation5], %s2381
          %s2384 = sshll.u32 [#allocation4], 4
          %s2385 = int_to_ptr.vmem [resolvable:$true] %s2384
          %2387 = dma.vmem_to_hbm [thread:$0]  %s2385, 16, %s20, [#allocation5]
        $region112: #{encoder_decoder_forward.3} parent=95 // pred_fallthru
          _
        // Predicated region
        $region113: #{encoder_decoder_forward.3} parent=95 // pred_check
          %p2388 = pneg %p505
        $region114: #{encoder_decoder_forward.3} parent=95 // pred_check_branch
          %2390 = sbr.rel (%p2388) target = $region116
        $region115: #{encoder_decoder_forward.3} parent=95 // pred_region
          _
        $region116: #{encoder_decoder_forward.3} parent=95 // pred_fallthru
          _
        // Predicated region
        $region117: #{encoder_decoder_forward.3} parent=95 // pred_check
          %p2391 = pneg %p526
        $region118: #{encoder_decoder_forward.3} parent=95 // pred_check_branch
          %2393 = sbr.rel (%p2391) target = $region120
        $region119: #{encoder_decoder_forward.3} parent=95 // pred_region
          %2394 = dma.done [#allocation5], 16
        $region120: #{encoder_decoder_forward.3} parent=95 // pred_fallthru
          _
      $region96: #{encoder_decoder_forward.3} parent=5 // pred_fallthru
        _
      %p2395 = scmp.le.s32.totalorder 2, %s28
      // Predicated region
      $region121: #{encoder_decoder_forward.3} parent=5 // pred_check
        %p2396 = pneg %p2395
      $region122: #{encoder_decoder_forward.3} parent=5 // pred_check_branch
        %2398 = sbr.rel (%p2396) target = $region124
      $region123: #{encoder_decoder_forward.3} parent=5 // pred_region
        %s2399 = ssub.s32 %s28, 2
      $region124: #{encoder_decoder_forward.3} parent=5 // pred_fallthru
        _
    $region6: #{encoder_decoder_forward.3} parent=1 // loop_footer
      %s32 = sadd.s32 1, %s28
    $region7: #{encoder_decoder_forward.3} parent=1 // loop_footer_branch
      %27 = sbr.rel target = $region3
    $region8: #{encoder_decoder_forward.3} parent=1 // loop_exit
      _
    %2400 = vsyncpa [#allocation5], 1
    %s2401 = scalar_lea.sflag [#allocation5], 1
    %2402 = vsyncpa %s2401, 1

</llo_original>
